<compile_context>
chip_gen: v7x
topology: tpu7x:2x2x1
jax: 0.10.0
libtpu: 0.0.40
codegen_flags: <defaults>
</compile_context>

<pallas_src>
import functools

import jax
import jax.numpy as jnp
from jax.experimental import pallas as pl
from jax.experimental.pallas import tpu as pltpu

EMBEDDING_DIM = 64
NUM_CLASSES = 10
IN_CH = 4
CONV_CH = 16
N_WAY = 3
N_SUPPORT = 2
PROTO_WEIGHT = 0.6
RELATION_WEIGHT = 0.4

TB = 8      # images per grid step
LANE = 128  # lane-dense output width


# ----------------------------- Pallas kernels -----------------------------

def _encode_block(xcol_ref, cw_ref, cb_ref, ew_ref, eb_ref, *, tb, hw):
    """Shared per-block encoder: conv-as-matmul + ReLU + GAP + embedding Linear+ReLU."""
    # Conv folded into one K=9*C MXU matmul (im2col built in wrapper, bf16).
    acc = jnp.dot(xcol_ref[...], cw_ref[...], preferred_element_type=jnp.float32)
    acc = jnp.maximum(acc + cb_ref[...], 0.0)                     # (tb*hw, CONV_CH) f32
    # Global average pool: per-image reduction (layout-preserving split of the
    # sublane dim; lane dim stays CONV_CH).
    feat = jnp.sum(acc.reshape(tb, hw, CONV_CH), axis=1) * (1.0 / hw)   # (tb, CONV_CH)
    emb = jnp.dot(feat, ew_ref[...], preferred_element_type=jnp.float32) + eb_ref[...]
    return jnp.maximum(emb, 0.0)                                   # (tb, EMBEDDING_DIM)


def _forward_encoder_kernel(xcol_ref, cw_ref, cb_ref, ew_ref, eb_ref,
                            kw_ref, kb_ref, probs_ref, *, tb, hw):
    """EnsembleModel.forward encoder: embedding + classifier Linear + Softmax.

    Classifier weight/bias are padded to 128 lanes in the wrapper (zeros / -1e30)
    so the softmax and the store are 128-lane dense with no in-kernel masking.
    """
    emb = _encode_block(xcol_ref, cw_ref, cb_ref, ew_ref, eb_ref, tb=tb, hw=hw)
    logits = jnp.dot(emb, kw_ref[...], preferred_element_type=jnp.float32) + kb_ref[...]
    m = jnp.max(logits, axis=-1, keepdims=True)
    e = jnp.exp(logits - m)
    probs_ref[...] = e / jnp.sum(e, axis=-1, keepdims=True)        # (tb, 128)


def _fewshot_fused_kernel(xcol_ref, cw_ref, cb_ref, ew_ref, eb_ref,
                          pmat_ref, qsel_ref,
                          w1_ref, b1_ref, w2_ref, b2_ref, w3_ref, b3_ref,
                          w4_ref, b4_ref, pred_ref, emb_sc,
                          *, tb, hw, n_way, n_query, emb_dim, proto_w, rel_w):
    """Single fused few-shot kernel: encoder over the merged support+query batch
    (accumulated into VMEM scratch) + full few-shot tail on the last grid step."""
    b = pl.program_id(0)

    emb = _encode_block(xcol_ref, cw_ref, cb_ref, ew_ref, eb_ref, tb=tb, hw=hw)
    start = pl.multiple_of(b * tb, tb)
    emb_sc[pl.ds(start, tb), :] = emb                              # stage into scratch

    @pl.when(b == pl.num_programs(0) - 1)
    def _tail():
        all_emb = emb_sc[...]                                      # (B_pad, D)
        # Prototypes (class-mean of support rows) and query rows via selection
        # matmuls built in the wrapper; padded rows have zero columns.
        protos = jnp.dot(pmat_ref[...], all_emb, preferred_element_type=jnp.float32)  # (K, D)
        q = jnp.dot(qsel_ref[...], all_emb, preferred_element_type=jnp.float32)       # (Q, D)

        k = n_way
        nq = n_query
        d = emb_dim
        qk = nq * k

        # Pair-expansion selection matrices (iota-built; no repeat/tile/reshape).
        rq = (jax.lax.broadcasted_iota(jnp.int32, (qk, nq), 0) // k
              == jax.lax.broadcasted_iota(jnp.int32, (qk, nq), 1)).astype(jnp.float32)   # (QK, Q)
        rp = (jax.lax.broadcasted_iota(jnp.int32, (qk, k), 0) % k
              == jax.lax.broadcasted_iota(jnp.int32, (qk, k), 1)).astype(jnp.float32)    # (QK, K)
        rqt = (jax.lax.broadcasted_iota(jnp.int32, (nq, qk), 1) // k
               == jax.lax.broadcasted_iota(jnp.int32, (nq, qk), 0)).astype(jnp.float32)  # (Q, QK)
        q_rep = jnp.dot(rq, q, preferred_element_type=jnp.float32)       # (QK, D)
        p_rep = jnp.dot(rp, protos, preferred_element_type=jnp.float32)  # (QK, D)

        # ---- Prototypical branch: softmax(-cdist) over prototypes ----
        diff = q_rep - p_rep
        dist_flat = jnp.sqrt(jnp.sum(diff * diff, axis=1, keepdims=True))    # (QK, 1)
        dists = jnp.dot(rqt, dist_flat * rp, preferred_element_type=jnp.float32)  # (Q, K)
        logits = -dists
        m = jnp.max(logits, axis=1, keepdims=True)
        e = jnp.exp(logits - m)
        proto_probs = e * pl.reciprocal(jnp.sum(e, axis=1, keepdims=True), approx=True)

        # ---- Relation branch: all (query, prototype) pairs in one batch ----
        # Linear(2D, 256): split W1 so the [query, proto] concat never materializes.
        h = (jnp.dot(q_rep, w1_ref[:d, :], preferred_element_type=jnp.float32)
             + jnp.dot(p_rep, w1_ref[d:, :], preferred_element_type=jnp.float32)
             + b1_ref[...])
        h = jnp.maximum(h, 0.0)
        # TODO(synk): nn.Dropout layers are identity at inference; training-mode dropout not implemented.
        h = jnp.maximum(jnp.dot(h, w2_ref[...],
                                preferred_element_type=jnp.float32) + b2_ref[...], 0.0)
        h = jnp.maximum(jnp.dot(h, w3_ref[...],
                                preferred_element_type=jnp.float32) + b3_ref[...], 0.0)
        s = jnp.dot(h, w4_ref[...], preferred_element_type=jnp.float32) + b4_ref[...]
        score = pl.reciprocal(1.0 + jnp.exp(-s), approx=True)             # sigmoid, (QK, 1)

        # Scatter pair scores back to (Q, K) with one matmul, then row-normalize
        # (matches reference: relation_scores / relation_scores.sum(dim=1)).
        rel_scores = jnp.dot(rqt, score * rp, preferred_element_type=jnp.float32)
        rel_probs = rel_scores * pl.reciprocal(
            jnp.sum(rel_scores, axis=1, keepdims=True) + 1e-12, approx=True)

        # ---- Ensemble combine + argmax (first max index, torch.max semantics) ----
        ens = proto_w * proto_probs + rel_w * rel_probs
        maxv = jnp.max(ens, axis=1, keepdims=True)
        col = jax.lax.broadcasted_iota(jnp.int32, (nq, k), 1)
        cand = jnp.where(ens >= maxv, col, k)
        pred = jnp.min(cand, axis=1, keepdims=True)                       # (Q, 1) int32
        pred_ref[...] = jnp.broadcast_to(pred, (nq, LANE))                # lane-dense store


# ----------------------------- wrappers -----------------------------

def _im2col_bf16(x_nchw, b_pad):
    """NCHW -> padded-batch im2col (b_pad*H*W, 9*C) in bf16. One XLA producer chain."""
    x = jnp.transpose(x_nchw, (0, 2, 3, 1)).astype(jnp.float32)    # NHWC
    B, H, W, C = x.shape
    if b_pad > B:
        x = jnp.pad(x, ((0, b_pad - B), (0, 0), (0, 0), (0, 0)))
    xp = jnp.pad(x, ((0, 0), (1, 1), (1, 1), (0, 0)))
    taps = [xp[:, kh:kh + H, kw:kw + W, :] for kh in range(3) for kw in range(3)]
    xcol = jnp.concatenate(taps, axis=-1).reshape(b_pad * H * W, 9 * C)
    return xcol.astype(jnp.bfloat16), H * W


def _encoder_common_specs(tb, hw, c):
    return [
        pl.BlockSpec((tb * hw, 9 * c), lambda b: (b, 0)),          # xcol (tiled over batch)
        pl.BlockSpec((9 * c, CONV_CH), lambda b: (0, 0)),          # conv_w
        pl.BlockSpec((1, CONV_CH), lambda b: (0, 0)),              # conv_b
        pl.BlockSpec((CONV_CH, EMBEDDING_DIM), lambda b: (0, 0)),  # emb_w
        pl.BlockSpec((1, EMBEDDING_DIM), lambda b: (0, 0)),        # emb_b
    ]


def ensemble_forward(params, x_nchw):
    """EnsembleModel.forward(x): class probabilities from the encoder."""
    B = x_nchw.shape[0]
    C = x_nchw.shape[1]
    b_pad = pl.cdiv(B, TB) * TB
    xcol, hw = _im2col_bf16(x_nchw, b_pad)

    cw = params["conv_w"].reshape(9 * C, CONV_CH).astype(jnp.bfloat16)
    cb = params["conv_b"].reshape(1, CONV_CH)
    ew = params["emb_w"]
    eb = params["emb_b"].reshape(1, EMBEDDING_DIM)
    # Classifier padded to 128 lanes (zeros / -1e30) -> lane-dense softmax & store.
    kw_pad = jnp.zeros((EMBEDDING_DIM, LANE), jnp.float32).at[:, :NUM_CLASSES].set(params["cls_w"])
    kb_pad = jnp.full((1, LANE), -1e30, jnp.float32).at[0, :NUM_CLASSES].set(params["cls_b"])

    kernel = functools.partial(_forward_encoder_kernel, tb=TB, hw=hw)
    probs_pad = pl.pallas_call(
        kernel,
        out_shape=jax.ShapeDtypeStruct((b_pad, LANE), jnp.float32),
        grid=(b_pad // TB,),
        in_specs=_encoder_common_specs(TB, hw, C) + [
            pl.BlockSpec((EMBEDDING_DIM, LANE), lambda b: (0, 0)),
            pl.BlockSpec((1, LANE), lambda b: (0, 0)),
        ],
        out_specs=pl.BlockSpec((TB, LANE), lambda b: (b, 0)),
        compiler_params=pltpu.CompilerParams(dimension_semantics=("parallel",)),
    )(xcol, cw, cb, ew, eb, kw_pad, kb_pad)
    return probs_pad[:B, :NUM_CLASSES]


def few_shot_classify(params, support_images, support_labels, query_images,
                      n_way=N_WAY, n_support=N_SUPPORT,
                      proto_weight=PROTO_WEIGHT, relation_weight=RELATION_WEIGHT):
    """EnsembleModel.few_shot_classify: ONE fused pallas_call (merged encoder + tail)."""
    C = support_images.shape[1]
    n_sup = support_images.shape[0]
    n_query = query_images.shape[0]
    B = n_sup + n_query
    b_pad = pl.cdiv(B, TB) * TB

    # Merged support+query batch -> single im2col (bf16).
    x_all = jnp.concatenate([support_images, query_images], axis=0)
    xcol, hw = _im2col_bf16(x_all, b_pad)

    cw = params["conv_w"].reshape(9 * C, CONV_CH).astype(jnp.bfloat16)
    cb = params["conv_b"].reshape(1, CONV_CH)
    ew = params["emb_w"]
    eb = params["emb_b"].reshape(1, EMBEDDING_DIM)

    # Prototype-averaging matrix over the merged padded batch (zero columns for
    # query/pad rows). Labels assumed in 0..n_way-1 (torch.unique returns them
    # sorted); zero-count guard avoids NaN prototypes.
    # TODO(synk): arbitrary (non-contiguous) class ids would need a torch.unique-style remap.
    one_hot = (support_labels[:, None] == jnp.arange(n_way)[None, :]).astype(jnp.float32)
    counts = jnp.maximum(jnp.sum(one_hot, axis=0, keepdims=True), 1.0)
    proto_mat = jnp.zeros((n_way, b_pad), jnp.float32).at[:, :n_sup].set((one_hot / counts).T)
    # Query-row selection matrix.
    qsel = jnp.zeros((n_query, b_pad), jnp.float32).at[:, n_sup:n_sup + n_query].set(
        jnp.eye(n_query, dtype=jnp.float32))

    kernel = functools.partial(
        _fewshot_fused_kernel, tb=TB, hw=hw, n_way=n_way, n_query=n_query,
        emb_dim=EMBEDDING_DIM, proto_w=float(proto_weight), rel_w=float(relation_weight))

    pred = pl.pallas_call(
        kernel,
        out_shape=jax.ShapeDtypeStruct((n_query, LANE), jnp.int32),
        grid=(b_pad // TB,),
        in_specs=_encoder_common_specs(TB, hw, C) + [
            pl.BlockSpec((n_way, b_pad), lambda b: (0, 0)),
            pl.BlockSpec((n_query, b_pad), lambda b: (0, 0)),
            pl.BlockSpec((EMBEDDING_DIM * 2, 256), lambda b: (0, 0)),
            pl.BlockSpec((1, 256), lambda b: (0, 0)),
            pl.BlockSpec((256, 128), lambda b: (0, 0)),
            pl.BlockSpec((1, 128), lambda b: (0, 0)),
            pl.BlockSpec((128, 64), lambda b: (0, 0)),
            pl.BlockSpec((1, 64), lambda b: (0, 0)),
            pl.BlockSpec((64, 1), lambda b: (0, 0)),
            pl.BlockSpec((1, 1), lambda b: (0, 0)),
        ],
        out_specs=pl.BlockSpec((n_query, LANE), lambda b: (0, 0)),
        scratch_shapes=[pltpu.VMEM((b_pad, EMBEDDING_DIM), jnp.float32)],
        compiler_params=pltpu.CompilerParams(dimension_semantics=("arbitrary",)),
    )(xcol, cw, cb, ew, eb, proto_mat, qsel,
      params["rel_w1"], params["rel_b1"].reshape(1, 256),
      params["rel_w2"], params["rel_b2"].reshape(1, 128),
      params["rel_w3"], params["rel_b3"].reshape(1, 64),
      params["rel_w4"], params["rel_b4"].reshape(1, 1))
    return pred[:, 0]


# ----------------------------- params -----------------------------

def init_params(key):
    ks = jax.random.split(key, 8)

    def w(k, shape, scale=0.1):
        return (scale * jax.random.normal(k, shape)).astype(jnp.float32)

    return {
        # encoder (synthesized; (kh, kw, C_in, C_out) layout, consistent with im2col tap order)
        "conv_w": w(ks[0], (3, 3, IN_CH, CONV_CH)),
        "conv_b": jnp.zeros((CONV_CH,), jnp.float32),
        "emb_w": w(ks[1], (CONV_CH, EMBEDDING_DIM)),
        "emb_b": jnp.zeros((EMBEDDING_DIM,), jnp.float32),
        "cls_w": w(ks[2], (EMBEDDING_DIM, NUM_CLASSES)),
        "cls_b": jnp.zeros((NUM_CLASSES,), jnp.float32),
        # RelationNetwork: Linear(2D,256)->ReLU->Drop->Linear(256,128)->ReLU->Drop
        #                  ->Linear(128,64)->ReLU->Linear(64,1)->Sigmoid
        "rel_w1": w(ks[3], (EMBEDDING_DIM * 2, 256)),
        "rel_b1": jnp.zeros((256,), jnp.float32),
        "rel_w2": w(ks[4], (256, 128)),
        "rel_b2": jnp.zeros((128,), jnp.float32),
        "rel_w3": w(ks[5], (128, 64)),
        "rel_b3": jnp.zeros((64,), jnp.float32),
        "rel_w4": w(ks[6], (64, 1)),
        "rel_b4": jnp.zeros((1,), jnp.float32),
    }


# ----------------------------- main -----------------------------

if __name__ == "__main__":
    key = jax.random.PRNGKey(0)
    k_params, k_x, k_sup, k_qry = jax.random.split(key, 4)
    params = init_params(k_params)

    forward_fn = jax.jit(ensemble_forward)
    fewshot_fn = jax.jit(
        few_shot_classify,
        static_argnames=("n_way", "n_support", "proto_weight", "relation_weight"))

    # EnsembleModel.forward: x [batch, channels, height, width]
    x = jax.random.normal(k_x, (2, IN_CH, 16, 16), dtype=jnp.float32)
    probs = jax.block_until_ready(forward_fn(params, x))
    assert probs.shape == (2, NUM_CLASSES)
    assert jnp.allclose(jnp.sum(probs, axis=1), 1.0, atol=1e-4)

    # few_shot_classify: support [n_way*n_support, C, H, W], query [n_query, C, H, W]
    support = jax.random.normal(k_sup, (N_WAY * N_SUPPORT, IN_CH, 16, 16), dtype=jnp.float32)
    labels = jnp.repeat(jnp.arange(N_WAY), N_SUPPORT)
    query = jax.random.normal(k_qry, (5, IN_CH, 16, 16), dtype=jnp.float32)
    preds = jax.block_until_ready(fewshot_fn(params, support, labels, query))
    assert preds.shape == (5,)
    assert bool(jnp.all((preds >= 0) & (preds < N_WAY)))

    print("KERNEL_OK")
</pallas_src>

<mosaic_0001>
module attributes {stable_mosaic.version = 11 : i64} {
  func.func @_forward_encoder_kernel(%arg0: i32, %arg1: memref<2048x36xbf16, #tpu.memory_space<vmem>>, %arg2: memref<36x16xbf16, #tpu.memory_space<vmem>>, %arg3: memref<1x16xf32, #tpu.memory_space<vmem>>, %arg4: memref<16x64xf32, #tpu.memory_space<vmem>>, %arg5: memref<1x64xf32, #tpu.memory_space<vmem>>, %arg6: memref<64x128xf32, #tpu.memory_space<vmem>>, %arg7: memref<1x128xf32, #tpu.memory_space<vmem>>, %arg8: memref<8x128xf32, #tpu.memory_space<vmem>>) attributes {dimension_semantics = [#tpu.dimension_semantics<parallel>], iteration_bounds = array<i64: 1>, scalar_prefetch = 0 : i64, scratch_operands = 0 : i64, tpu.core_type = #tpu.core_type<tc>, window_params = [{transform_indices = @transform_0, window_bounds = array<i64: 2048, 36>}, {pipeline_mode = #tpu.pipeline_mode<synchronous>, transform_indices = @transform_1, window_bounds = array<i64: 36, 16>}, {pipeline_mode = #tpu.pipeline_mode<synchronous>, transform_indices = @transform_2, window_bounds = array<i64: 1, 16>}, {pipeline_mode = #tpu.pipeline_mode<synchronous>, transform_indices = @transform_3, window_bounds = array<i64: 16, 64>}, {pipeline_mode = #tpu.pipeline_mode<synchronous>, transform_indices = @transform_4, window_bounds = array<i64: 1, 64>}, {pipeline_mode = #tpu.pipeline_mode<synchronous>, transform_indices = @transform_5, window_bounds = array<i64: 64, 128>}, {pipeline_mode = #tpu.pipeline_mode<synchronous>, transform_indices = @transform_6, window_bounds = array<i64: 1, 128>}, {transform_indices = @transform_7, window_bounds = array<i64: 8, 128>}]} {
    %c0 = arith.constant 0 : index
    %c0_0 = arith.constant 0 : index
    %0 = vector.load %arg1[%c0, %c0_0] : memref<2048x36xbf16, #tpu.memory_space<vmem>>, vector<2048x36xbf16>
    %c0_1 = arith.constant 0 : index
    %c0_2 = arith.constant 0 : index
    %1 = vector.load %arg2[%c0_1, %c0_2] : memref<36x16xbf16, #tpu.memory_space<vmem>>, vector<36x16xbf16>
    %cst = arith.constant dense<0.000000e+00> : vector<2048x16xf32>
    %2 = tpu.matmul %0, %1, %cst {dimension_numbers = #tpu.dot_dimension_numbers<[1], [0], [0], [1], [0, 0, 1, 1], [], []>} : vector<2048x36xbf16>, vector<36x16xbf16>, vector<2048x16xf32> -> vector<2048x16xf32>
    %c0_3 = arith.constant 0 : index
    %c0_4 = arith.constant 0 : index
    %3 = vector.load %arg3[%c0_3, %c0_4] : memref<1x16xf32, #tpu.memory_space<vmem>>, vector<1x16xf32>
    %4 = vector.broadcast %3 : vector<1x16xf32> to vector<2048x16xf32>
    %5 = arith.addf %2, %4 : vector<2048x16xf32>
    %cst_5 = arith.constant 0.000000e+00 : f32
    %6 = vector.broadcast %cst_5 : f32 to vector<2048x16xf32>
    %7 = arith.maximumf %5, %6 : vector<2048x16xf32>
    %8 = vector.shape_cast %7 : vector<2048x16xf32> to vector<8x256x16xf32>
    %cst_6 = arith.constant dense<0.000000e+00> : vector<8x16xf32>
    %9 = vector.multi_reduction <add>, %8, %cst_6 [1] : vector<8x256x16xf32> to vector<8x16xf32>
    %cst_7 = arith.constant 3.906250e-03 : f32
    %10 = vector.broadcast %cst_7 : f32 to vector<8x16xf32>
    %11 = arith.mulf %9, %10 : vector<8x16xf32>
    %c0_8 = arith.constant 0 : index
    %c0_9 = arith.constant 0 : index
    %12 = vector.load %arg4[%c0_8, %c0_9] : memref<16x64xf32, #tpu.memory_space<vmem>>, vector<16x64xf32>
    %cst_10 = arith.constant dense<0.000000e+00> : vector<8x64xf32>
    %13 = tpu.matmul %11, %12, %cst_10 {dimension_numbers = #tpu.dot_dimension_numbers<[1], [0], [0], [1], [0, 0, 1, 1], [], []>} : vector<8x16xf32>, vector<16x64xf32>, vector<8x64xf32> -> vector<8x64xf32>
    %c0_11 = arith.constant 0 : index
    %c0_12 = arith.constant 0 : index
    %14 = vector.load %arg5[%c0_11, %c0_12] : memref<1x64xf32, #tpu.memory_space<vmem>>, vector<1x64xf32>
    %15 = vector.broadcast %14 : vector<1x64xf32> to vector<8x64xf32>
    %16 = arith.addf %13, %15 : vector<8x64xf32>
    %cst_13 = arith.constant 0.000000e+00 : f32
    %17 = vector.broadcast %cst_13 : f32 to vector<8x64xf32>
    %18 = arith.maximumf %16, %17 : vector<8x64xf32>
    %c0_14 = arith.constant 0 : index
    %c0_15 = arith.constant 0 : index
    %19 = vector.load %arg6[%c0_14, %c0_15] : memref<64x128xf32, #tpu.memory_space<vmem>>, vector<64x128xf32>
    %cst_16 = arith.constant dense<0.000000e+00> : vector<8x128xf32>
    %20 = tpu.matmul %18, %19, %cst_16 {dimension_numbers = #tpu.dot_dimension_numbers<[1], [0], [0], [1], [0, 0, 1, 1], [], []>} : vector<8x64xf32>, vector<64x128xf32>, vector<8x128xf32> -> vector<8x128xf32>
    %c0_17 = arith.constant 0 : index
    %c0_18 = arith.constant 0 : index
    %21 = vector.load %arg7[%c0_17, %c0_18] : memref<1x128xf32, #tpu.memory_space<vmem>>, vector<1x128xf32>
    %22 = vector.broadcast %21 : vector<1x128xf32> to vector<8x128xf32>
    %23 = arith.addf %20, %22 : vector<8x128xf32>
    %cst_19 = arith.constant dense<0xFF800000> : vector<8xf32>
    %24 = vector.multi_reduction <maximumf>, %23, %cst_19 [1] : vector<8x128xf32> to vector<8xf32>
    %25 = vector.shape_cast %24 : vector<8xf32> to vector<8x1xf32>
    %26 = vector.broadcast %25 : vector<8x1xf32> to vector<8x128xf32>
    %27 = arith.subf %23, %26 : vector<8x128xf32>
    %28 = math.exp %27 : vector<8x128xf32>
    %cst_20 = arith.constant dense<0.000000e+00> : vector<8xf32>
    %29 = vector.multi_reduction <add>, %28, %cst_20 [1] : vector<8x128xf32> to vector<8xf32>
    %30 = vector.shape_cast %29 : vector<8xf32> to vector<8x1xf32>
    %31 = vector.broadcast %30 : vector<8x1xf32> to vector<8x128xf32>
    %32 = arith.divf %28, %31 : vector<8x128xf32>
    %c0_21 = arith.constant 0 : index
    %c0_22 = arith.constant 0 : index
    %33 = vector.load %arg8[%c0_21, %c0_22] : memref<8x128xf32, #tpu.memory_space<vmem>>, vector<8x128xf32>
    tpu.vector_store %arg8[%c0_21, %c0_22], %32 {strides = array<i32>} : memref<8x128xf32, #tpu.memory_space<vmem>>, vector<8x128xf32>,
    return
  }
  func.func @transform_0(%arg0: i32) -> (i32, i32) {
    %c0_i32 = arith.constant 0 : i32
    %c0_i32_0 = arith.constant 0 : i32
    return %arg0, %c0_i32 : i32, i32
  }
  func.func @transform_1(%arg0: i32) -> (i32, i32) {
    %c0_i32 = arith.constant 0 : i32
    %c0_i32_0 = arith.constant 0 : i32
    %c0_i32_1 = arith.constant 0 : i32
    return %c0_i32, %c0_i32_0 : i32, i32
  }
  func.func @transform_2(%arg0: i32) -> (i32, i32) {
    %c0_i32 = arith.constant 0 : i32
    %c0_i32_0 = arith.constant 0 : i32
    %c0_i32_1 = arith.constant 0 : i32
    return %c0_i32, %c0_i32_0 : i32, i32
  }
  func.func @transform_3(%arg0: i32) -> (i32, i32) {
    %c0_i32 = arith.constant 0 : i32
    %c0_i32_0 = arith.constant 0 : i32
    %c0_i32_1 = arith.constant 0 : i32
    return %c0_i32, %c0_i32_0 : i32, i32
  }
  func.func @transform_4(%arg0: i32) -> (i32, i32) {
    %c0_i32 = arith.constant 0 : i32
    %c0_i32_0 = arith.constant 0 : i32
    %c0_i32_1 = arith.constant 0 : i32
    return %c0_i32, %c0_i32_0 : i32, i32
  }
  func.func @transform_5(%arg0: i32) -> (i32, i32) {
    %c0_i32 = arith.constant 0 : i32
    %c0_i32_0 = arith.constant 0 : i32
    %c0_i32_1 = arith.constant 0 : i32
    return %c0_i32, %c0_i32_0 : i32, i32
  }
  func.func @transform_6(%arg0: i32) -> (i32, i32) {
    %c0_i32 = arith.constant 0 : i32
    %c0_i32_0 = arith.constant 0 : i32
    %c0_i32_1 = arith.constant 0 : i32
    return %c0_i32, %c0_i32_0 : i32, i32
  }
  func.func @transform_7(%arg0: i32) -> (i32, i32) {
    %c0_i32 = arith.constant 0 : i32
    %c0_i32_0 = arith.constant 0 : i32
    return %arg0, %c0_i32 : i32, i32
  }
}

</mosaic_0001>

<llo_original>
// kernel: ensemble_forward.1
$region0: #{ensemble_forward.1}
  #allocation0 [shape = 'u32[]', space=smem, size = 0x4, offset = 0x4, fixed_abs, tag = 'smem constant byte address 0x4 - core index']
  #allocation1 [shape = 'u32[144,128]{1,0:T(1,128)}', space=vmem, size = 0x12000, scoped, tag = 'internal scratch']
  %s0 = inlined_call_operand.vmem [shape: bf16[2048,36], index: 0, kind: input, shape index: {}]
  %s1 = inlined_call_operand.vmem [shape: bf16[36,16], index: 1, kind: input, shape index: {}]
  %s2 = inlined_call_operand.vmem [shape: f32[1,16], index: 2, kind: input, shape index: {}]
  %s3 = inlined_call_operand.vmem [shape: f32[16,64], index: 3, kind: input, shape index: {}]
  %s4 = inlined_call_operand.vmem [shape: f32[1,64], index: 4, kind: input, shape index: {}]
  %s5 = inlined_call_operand.vmem [shape: f32[64,128], index: 5, kind: input, shape index: {}]
  %s6 = inlined_call_operand.vmem [shape: f32[1,128], index: 6, kind: input, shape index: {}]
  %s7 = inlined_call_operand.vmem [shape: f32[8,128], index: 7, kind: output, shape index: {}]
  %s8 = sld [smem:[#allocation0]]
  $region38: #{ensemble_forward.1} parent=0
    _
  %s10 = ssub.s32 1, %s8
  %s11 = scalar_select 0, %s10, %s8
  // Predicated region
  $region2: #{ensemble_forward.1} parent=0 // pred_check
    _
  $region3: #{ensemble_forward.1} parent=0 // pred_check_branch
    %13 = sbr.rel (0) target = $region5
  $region4: #{ensemble_forward.1} parent=0 // pred_region
    _
  $region5: #{ensemble_forward.1} parent=0 // pred_fallthru
    _
  // Predicated region
  $region6: #{ensemble_forward.1} parent=0 // pred_check
    _
  $region7: #{ensemble_forward.1} parent=0 // pred_check_branch
    %15 = sbr.rel (0) target = $region9
  $region8: #{ensemble_forward.1} parent=0 // pred_region
    _
  $region9: #{ensemble_forward.1} parent=0 // pred_fallthru
    _
  // Predicated region
  $region10: #{ensemble_forward.1} parent=0 // pred_check
    _
  $region11: #{ensemble_forward.1} parent=0 // pred_check_branch
    %17 = sbr.rel (0) target = $region13
  $region12: #{ensemble_forward.1} parent=0 // pred_region
    _
  $region13: #{ensemble_forward.1} parent=0 // pred_fallthru
    _
  // Predicated region
  $region14: #{ensemble_forward.1} parent=0 // pred_check
    _
  $region15: #{ensemble_forward.1} parent=0 // pred_check_branch
    %19 = sbr.rel (0) target = $region17
  $region16: #{ensemble_forward.1} parent=0 // pred_region
    _
  $region17: #{ensemble_forward.1} parent=0 // pred_fallthru
    _
  // Predicated region
  $region18: #{ensemble_forward.1} parent=0 // pred_check
    _
  $region19: #{ensemble_forward.1} parent=0 // pred_check_branch
    %21 = sbr.rel (0) target = $region21
  $region20: #{ensemble_forward.1} parent=0 // pred_region
    _
  $region21: #{ensemble_forward.1} parent=0 // pred_fallthru
    _
  // Predicated region
  $region22: #{ensemble_forward.1} parent=0 // pred_check
    _
  $region23: #{ensemble_forward.1} parent=0 // pred_check_branch
    %23 = sbr.rel (0) target = $region25
  $region24: #{ensemble_forward.1} parent=0 // pred_region
    _
  $region25: #{ensemble_forward.1} parent=0 // pred_fallthru
    _
  // Predicated region
  $region26: #{ensemble_forward.1} parent=0 // pred_check
    _
  $region27: #{ensemble_forward.1} parent=0 // pred_check_branch
    %25 = sbr.rel (0) target = $region29
  $region28: #{ensemble_forward.1} parent=0 // pred_region
    _
  $region29: #{ensemble_forward.1} parent=0 // pred_fallthru
    _
  %v27 = vld [vmem:[%s0] sm:$0xf]
  %v28 = vld [vmem:[%s0 + $0x4] sm:$0xf]
  %v29 = vld [vmem:[%s0 + $0x8] sm:$0xf]
  %v30 = vld [vmem:[%s0 + $0xc] sm:$0xf]
  %v31 = vld [vmem:[%s0 + $0x10] sm:$0xf]
  %v32 = vld [vmem:[%s0 + $0x14] sm:$0xf]
  %v33 = vld [vmem:[%s0 + $0x18] sm:$0xf]
  %v34 = vld [vmem:[%s0 + $0x1c] sm:$0xf]
  %v35 = vld [vmem:[%s0 + $0x20] sm:$0xf]
  %v36 = vld [vmem:[%s0 + $0x24] sm:$0xf]
  %v37 = vld [vmem:[%s0 + $0x28] sm:$0xf]
  %v38 = vld [vmem:[%s0 + $0x2c] sm:$0xf]
  %v39 = vld [vmem:[%s0 + $0x30] sm:$0xf]
  %v40 = vld [vmem:[%s0 + $0x34] sm:$0xf]
  %v41 = vld [vmem:[%s0 + $0x38] sm:$0xf]
  %v42 = vld [vmem:[%s0 + $0x3c] sm:$0xf]
  %v43 = vld [vmem:[%s0 + $0x40] sm:$0xf]
  %v44 = vld [vmem:[%s0 + $0x44] sm:$0xf]
  %v45 = vld [vmem:[%s0 + $0x48] sm:$0xf]
  %v46 = vld [vmem:[%s0 + $0x4c] sm:$0xf]
  %v47 = vld [vmem:[%s0 + $0x50] sm:$0xf]
  %v48 = vld [vmem:[%s0 + $0x54] sm:$0xf]
  %v49 = vld [vmem:[%s0 + $0x58] sm:$0xf]
  %v50 = vld [vmem:[%s0 + $0x5c] sm:$0xf]
  %v51 = vld [vmem:[%s0 + $0x60] sm:$0xf]
  %v52 = vld [vmem:[%s0 + $0x64] sm:$0xf]
  %v53 = vld [vmem:[%s0 + $0x68] sm:$0xf]
  %v54 = vld [vmem:[%s0 + $0x6c] sm:$0xf]
  %v55 = vld [vmem:[%s0 + $0x70] sm:$0xf]
  %v56 = vld [vmem:[%s0 + $0x74] sm:$0xf]
  %v57 = vld [vmem:[%s0 + $0x78] sm:$0xf]
  %v58 = vld [vmem:[%s0 + $0x7c] sm:$0xf]
  %v59 = vld [vmem:[%s0 + $0x80] sm:$0xf]
  %v60 = vld [vmem:[%s0 + $0x84] sm:$0xf]
  %v61 = vld [vmem:[%s0 + $0x88] sm:$0xf]
  %v62 = vld [vmem:[%s0 + $0x8c] sm:$0xf]
  %v63 = vld [vmem:[%s0 + $0x90] sm:$0xf]
  %v64 = vld [vmem:[%s0 + $0x94] sm:$0xf]
  %v65 = vld [vmem:[%s0 + $0x98] sm:$0xf]
  %v66 = vld [vmem:[%s0 + $0x9c] sm:$0xf]
  %v67 = vld [vmem:[%s0 + $0xa0] sm:$0xf]
  %v68 = vld [vmem:[%s0 + $0xa4] sm:$0xf]
  %v69 = vld [vmem:[%s0 + $0xa8] sm:$0xf]
  %v70 = vld [vmem:[%s0 + $0xac] sm:$0xf]
  %v71 = vld [vmem:[%s0 + $0xb0] sm:$0xf]
  %v72 = vld [vmem:[%s0 + $0xb4] sm:$0xf]
  %v73 = vld [vmem:[%s0 + $0xb8] sm:$0xf]
  %v74 = vld [vmem:[%s0 + $0xbc] sm:$0xf]
  %v75 = vld [vmem:[%s0 + $0xc0] sm:$0xf]
  %v76 = vld [vmem:[%s0 + $0xc4] sm:$0xf]
  %v77 = vld [vmem:[%s0 + $0xc8] sm:$0xf]
  %v78 = vld [vmem:[%s0 + $0xcc] sm:$0xf]
  %v79 = vld [vmem:[%s0 + $0xd0] sm:$0xf]
  %v80 = vld [vmem:[%s0 + $0xd4] sm:$0xf]
  %v81 = vld [vmem:[%s0 + $0xd8] sm:$0xf]
  %v82 = vld [vmem:[%s0 + $0xdc] sm:$0xf]
  %v83 = vld [vmem:[%s0 + $0xe0] sm:$0xf]
  %v84 = vld [vmem:[%s0 + $0xe4] sm:$0xf]
  %v85 = vld [vmem:[%s0 + $0xe8] sm:$0xf]
  %v86 = vld [vmem:[%s0 + $0xec] sm:$0xf]
  %v87 = vld [vmem:[%s0 + $0xf0] sm:$0xf]
  %v88 = vld [vmem:[%s0 + $0xf4] sm:$0xf]
  %v89 = vld [vmem:[%s0 + $0xf8] sm:$0xf]
  %v90 = vld [vmem:[%s0 + $0xfc] sm:$0xf]
  %v91 = vld [vmem:[%s0 + $0x100] sm:$0xf]
  %v92 = vld [vmem:[%s0 + $0x104] sm:$0xf]
  %v93 = vld [vmem:[%s0 + $0x108] sm:$0xf]
  %v94 = vld [vmem:[%s0 + $0x10c] sm:$0xf]
  %v95 = vld [vmem:[%s0 + $0x110] sm:$0xf]
  %v96 = vld [vmem:[%s0 + $0x114] sm:$0xf]
  %v97 = vld [vmem:[%s0 + $0x118] sm:$0xf]
  %v98 = vld [vmem:[%s0 + $0x11c] sm:$0xf]
  %v99 = vld [vmem:[%s0 + $0x120] sm:$0xf]
  %v100 = vld [vmem:[%s0 + $0x124] sm:$0xf]
  %v101 = vld [vmem:[%s0 + $0x128] sm:$0xf]
  %v102 = vld [vmem:[%s0 + $0x12c] sm:$0xf]
  %v103 = vld [vmem:[%s0 + $0x130] sm:$0xf]
  %v104 = vld [vmem:[%s0 + $0x134] sm:$0xf]
  %v105 = vld [vmem:[%s0 + $0x138] sm:$0xf]
  %v106 = vld [vmem:[%s0 + $0x13c] sm:$0xf]
  %v107 = vld [vmem:[%s0 + $0x140] sm:$0xf]
  %v108 = vld [vmem:[%s0 + $0x144] sm:$0xf]
  %v109 = vld [vmem:[%s0 + $0x148] sm:$0xf]
  %v110 = vld [vmem:[%s0 + $0x14c] sm:$0xf]
  %v111 = vld [vmem:[%s0 + $0x150] sm:$0xf]
  %v112 = vld [vmem:[%s0 + $0x154] sm:$0xf]
  %v113 = vld [vmem:[%s0 + $0x158] sm:$0xf]
  %v114 = vld [vmem:[%s0 + $0x15c] sm:$0xf]
  %v115 = vld [vmem:[%s0 + $0x160] sm:$0xf]
  %v116 = vld [vmem:[%s0 + $0x164] sm:$0xf]
  %v117 = vld [vmem:[%s0 + $0x168] sm:$0xf]
  %v118 = vld [vmem:[%s0 + $0x16c] sm:$0xf]
  %v119 = vld [vmem:[%s0 + $0x170] sm:$0xf]
  %v120 = vld [vmem:[%s0 + $0x174] sm:$0xf]
  %v121 = vld [vmem:[%s0 + $0x178] sm:$0xf]
  %v122 = vld [vmem:[%s0 + $0x17c] sm:$0xf]
  %v123 = vld [vmem:[%s0 + $0x180] sm:$0xf]
  %v124 = vld [vmem:[%s0 + $0x184] sm:$0xf]
  %v125 = vld [vmem:[%s0 + $0x188] sm:$0xf]
  %v126 = vld [vmem:[%s0 + $0x18c] sm:$0xf]
  %v127 = vld [vmem:[%s0 + $0x190] sm:$0xf]
  %v128 = vld [vmem:[%s0 + $0x194] sm:$0xf]
  %v129 = vld [vmem:[%s0 + $0x198] sm:$0xf]
  %v130 = vld [vmem:[%s0 + $0x19c] sm:$0xf]
  %v131 = vld [vmem:[%s0 + $0x1a0] sm:$0xf]
  %v132 = vld [vmem:[%s0 + $0x1a4] sm:$0xf]
  %v133 = vld [vmem:[%s0 + $0x1a8] sm:$0xf]
  %v134 = vld [vmem:[%s0 + $0x1ac] sm:$0xf]
  %v135 = vld [vmem:[%s0 + $0x1b0] sm:$0xf]
  %v136 = vld [vmem:[%s0 + $0x1b4] sm:$0xf]
  %v137 = vld [vmem:[%s0 + $0x1b8] sm:$0xf]
  %v138 = vld [vmem:[%s0 + $0x1bc] sm:$0xf]
  %v139 = vld [vmem:[%s0 + $0x1c0] sm:$0xf]
  %v140 = vld [vmem:[%s0 + $0x1c4] sm:$0xf]
  %v141 = vld [vmem:[%s0 + $0x1c8] sm:$0xf]
  %v142 = vld [vmem:[%s0 + $0x1cc] sm:$0xf]
  %v143 = vld [vmem:[%s0 + $0x1d0] sm:$0xf]
  %v144 = vld [vmem:[%s0 + $0x1d4] sm:$0xf]
  %v145 = vld [vmem:[%s0 + $0x1d8] sm:$0xf]
  %v146 = vld [vmem:[%s0 + $0x1dc] sm:$0xf]
  %v147 = vld [vmem:[%s0 + $0x1e0] sm:$0xf]
  %v148 = vld [vmem:[%s0 + $0x1e4] sm:$0xf]
  %v149 = vld [vmem:[%s0 + $0x1e8] sm:$0xf]
  %v150 = vld [vmem:[%s0 + $0x1ec] sm:$0xf]
  %v151 = vld [vmem:[%s0 + $0x1f0] sm:$0xf]
  %v152 = vld [vmem:[%s0 + $0x1f4] sm:$0xf]
  %v153 = vld [vmem:[%s0 + $0x1f8] sm:$0xf]
  %v154 = vld [vmem:[%s0 + $0x1fc] sm:$0xf]
  %v155 = vld [vmem:[%s0 + $0x200] sm:$0xf]
  %v156 = vld [vmem:[%s0 + $0x204] sm:$0xf]
  %v157 = vld [vmem:[%s0 + $0x208] sm:$0xf]
  %v158 = vld [vmem:[%s0 + $0x20c] sm:$0xf]
  %v159 = vld [vmem:[%s0 + $0x210] sm:$0xf]
  %v160 = vld [vmem:[%s0 + $0x214] sm:$0xf]
  %v161 = vld [vmem:[%s0 + $0x218] sm:$0xf]
  %v162 = vld [vmem:[%s0 + $0x21c] sm:$0xf]
  %v163 = vld [vmem:[%s0 + $0x220] sm:$0xf]
  %v164 = vld [vmem:[%s0 + $0x224] sm:$0xf]
  %v165 = vld [vmem:[%s0 + $0x228] sm:$0xf]
  %v166 = vld [vmem:[%s0 + $0x22c] sm:$0xf]
  %v167 = vld [vmem:[%s0 + $0x230] sm:$0xf]
  %v168 = vld [vmem:[%s0 + $0x234] sm:$0xf]
  %v169 = vld [vmem:[%s0 + $0x238] sm:$0xf]
  %v170 = vld [vmem:[%s0 + $0x23c] sm:$0xf]
  %v171 = vld [vmem:[%s0 + $0x240] sm:$0xf]
  %v172 = vld [vmem:[%s0 + $0x244] sm:$0xf]
  %v173 = vld [vmem:[%s0 + $0x248] sm:$0xf]
  %v174 = vld [vmem:[%s0 + $0x24c] sm:$0xf]
  %v175 = vld [vmem:[%s0 + $0x250] sm:$0xf]
  %v176 = vld [vmem:[%s0 + $0x254] sm:$0xf]
  %v177 = vld [vmem:[%s0 + $0x258] sm:$0xf]
  %v178 = vld [vmem:[%s0 + $0x25c] sm:$0xf]
  %v179 = vld [vmem:[%s0 + $0x260] sm:$0xf]
  %v180 = vld [vmem:[%s0 + $0x264] sm:$0xf]
  %v181 = vld [vmem:[%s0 + $0x268] sm:$0xf]
  %v182 = vld [vmem:[%s0 + $0x26c] sm:$0xf]
  %v183 = vld [vmem:[%s0 + $0x270] sm:$0xf]
  %v184 = vld [vmem:[%s0 + $0x274] sm:$0xf]
  %v185 = vld [vmem:[%s0 + $0x278] sm:$0xf]
  %v186 = vld [vmem:[%s0 + $0x27c] sm:$0xf]
  %v187 = vld [vmem:[%s0 + $0x280] sm:$0xf]
  %v188 = vld [vmem:[%s0 + $0x284] sm:$0xf]
  %v189 = vld [vmem:[%s0 + $0x288] sm:$0xf]
  %v190 = vld [vmem:[%s0 + $0x28c] sm:$0xf]
  %v191 = vld [vmem:[%s0 + $0x290] sm:$0xf]
  %v192 = vld [vmem:[%s0 + $0x294] sm:$0xf]
  %v193 = vld [vmem:[%s0 + $0x298] sm:$0xf]
  %v194 = vld [vmem:[%s0 + $0x29c] sm:$0xf]
  %v195 = vld [vmem:[%s0 + $0x2a0] sm:$0xf]
  %v196 = vld [vmem:[%s0 + $0x2a4] sm:$0xf]
  %v197 = vld [vmem:[%s0 + $0x2a8] sm:$0xf]
  %v198 = vld [vmem:[%s0 + $0x2ac] sm:$0xf]
  %v199 = vld [vmem:[%s0 + $0x2b0] sm:$0xf]
  %v200 = vld [vmem:[%s0 + $0x2b4] sm:$0xf]
  %v201 = vld [vmem:[%s0 + $0x2b8] sm:$0xf]
  %v202 = vld [vmem:[%s0 + $0x2bc] sm:$0xf]
  %v203 = vld [vmem:[%s0 + $0x2c0] sm:$0xf]
  %v204 = vld [vmem:[%s0 + $0x2c4] sm:$0xf]
  %v205 = vld [vmem:[%s0 + $0x2c8] sm:$0xf]
  %v206 = vld [vmem:[%s0 + $0x2cc] sm:$0xf]
  %v207 = vld [vmem:[%s0 + $0x2d0] sm:$0xf]
  %v208 = vld [vmem:[%s0 + $0x2d4] sm:$0xf]
  %v209 = vld [vmem:[%s0 + $0x2d8] sm:$0xf]
  %v210 = vld [vmem:[%s0 + $0x2dc] sm:$0xf]
  %v211 = vld [vmem:[%s0 + $0x2e0] sm:$0xf]
  %v212 = vld [vmem:[%s0 + $0x2e4] sm:$0xf]
  %v213 = vld [vmem:[%s0 + $0x2e8] sm:$0xf]
  %v214 = vld [vmem:[%s0 + $0x2ec] sm:$0xf]
  %v215 = vld [vmem:[%s0 + $0x2f0] sm:$0xf]
  %v216 = vld [vmem:[%s0 + $0x2f4] sm:$0xf]
  %v217 = vld [vmem:[%s0 + $0x2f8] sm:$0xf]
  %v218 = vld [vmem:[%s0 + $0x2fc] sm:$0xf]
  %v219 = vld [vmem:[%s0 + $0x300] sm:$0xf]
  %v220 = vld [vmem:[%s0 + $0x304] sm:$0xf]
  %v221 = vld [vmem:[%s0 + $0x308] sm:$0xf]
  %v222 = vld [vmem:[%s0 + $0x30c] sm:$0xf]
  %v223 = vld [vmem:[%s0 + $0x310] sm:$0xf]
  %v224 = vld [vmem:[%s0 + $0x314] sm:$0xf]
  %v225 = vld [vmem:[%s0 + $0x318] sm:$0xf]
  %v226 = vld [vmem:[%s0 + $0x31c] sm:$0xf]
  %v227 = vld [vmem:[%s0 + $0x320] sm:$0xf]
  %v228 = vld [vmem:[%s0 + $0x324] sm:$0xf]
  %v229 = vld [vmem:[%s0 + $0x328] sm:$0xf]
  %v230 = vld [vmem:[%s0 + $0x32c] sm:$0xf]
  %v231 = vld [vmem:[%s0 + $0x330] sm:$0xf]
  %v232 = vld [vmem:[%s0 + $0x334] sm:$0xf]
  %v233 = vld [vmem:[%s0 + $0x338] sm:$0xf]
  %v234 = vld [vmem:[%s0 + $0x33c] sm:$0xf]
  %v235 = vld [vmem:[%s0 + $0x340] sm:$0xf]
  %v236 = vld [vmem:[%s0 + $0x344] sm:$0xf]
  %v237 = vld [vmem:[%s0 + $0x348] sm:$0xf]
  %v238 = vld [vmem:[%s0 + $0x34c] sm:$0xf]
  %v239 = vld [vmem:[%s0 + $0x350] sm:$0xf]
  %v240 = vld [vmem:[%s0 + $0x354] sm:$0xf]
  %v241 = vld [vmem:[%s0 + $0x358] sm:$0xf]
  %v242 = vld [vmem:[%s0 + $0x35c] sm:$0xf]
  %v243 = vld [vmem:[%s0 + $0x360] sm:$0xf]
  %v244 = vld [vmem:[%s0 + $0x364] sm:$0xf]
  %v245 = vld [vmem:[%s0 + $0x368] sm:$0xf]
  %v246 = vld [vmem:[%s0 + $0x36c] sm:$0xf]
  %v247 = vld [vmem:[%s0 + $0x370] sm:$0xf]
  %v248 = vld [vmem:[%s0 + $0x374] sm:$0xf]
  %v249 = vld [vmem:[%s0 + $0x378] sm:$0xf]
  %v250 = vld [vmem:[%s0 + $0x37c] sm:$0xf]
  %v251 = vld [vmem:[%s0 + $0x380] sm:$0xf]
  %v252 = vld [vmem:[%s0 + $0x384] sm:$0xf]
  %v253 = vld [vmem:[%s0 + $0x388] sm:$0xf]
  %v254 = vld [vmem:[%s0 + $0x38c] sm:$0xf]
  %v255 = vld [vmem:[%s0 + $0x390] sm:$0xf]
  %v256 = vld [vmem:[%s0 + $0x394] sm:$0xf]
  %v257 = vld [vmem:[%s0 + $0x398] sm:$0xf]
  %v258 = vld [vmem:[%s0 + $0x39c] sm:$0xf]
  %v259 = vld [vmem:[%s0 + $0x3a0] sm:$0xf]
  %v260 = vld [vmem:[%s0 + $0x3a4] sm:$0xf]
  %v261 = vld [vmem:[%s0 + $0x3a8] sm:$0xf]
  %v262 = vld [vmem:[%s0 + $0x3ac] sm:$0xf]
  %v263 = vld [vmem:[%s0 + $0x3b0] sm:$0xf]
  %v264 = vld [vmem:[%s0 + $0x3b4] sm:$0xf]
  %v265 = vld [vmem:[%s0 + $0x3b8] sm:$0xf]
  %v266 = vld [vmem:[%s0 + $0x3bc] sm:$0xf]
  %v267 = vld [vmem:[%s0 + $0x3c0] sm:$0xf]
  %v268 = vld [vmem:[%s0 + $0x3c4] sm:$0xf]
  %v269 = vld [vmem:[%s0 + $0x3c8] sm:$0xf]
  %v270 = vld [vmem:[%s0 + $0x3cc] sm:$0xf]
  %v271 = vld [vmem:[%s0 + $0x3d0] sm:$0xf]
  %v272 = vld [vmem:[%s0 + $0x3d4] sm:$0xf]
  %v273 = vld [vmem:[%s0 + $0x3d8] sm:$0xf]
  %v274 = vld [vmem:[%s0 + $0x3dc] sm:$0xf]
  %v275 = vld [vmem:[%s0 + $0x3e0] sm:$0xf]
  %v276 = vld [vmem:[%s0 + $0x3e4] sm:$0xf]
  %v277 = vld [vmem:[%s0 + $0x3e8] sm:$0xf]
  %v278 = vld [vmem:[%s0 + $0x3ec] sm:$0xf]
  %v279 = vld [vmem:[%s0 + $0x3f0] sm:$0xf]
  %v280 = vld [vmem:[%s0 + $0x3f4] sm:$0xf]
  %v281 = vld [vmem:[%s0 + $0x3f8] sm:$0xf]
  %v282 = vld [vmem:[%s0 + $0x3fc] sm:$0xf]
  %v283 = vld [vmem:[%s1] sm:$0xf]
  %v284 = vld [vmem:[%s1 + $0x4] sm:$0xf]
  %v285 = vld [vmem:[%s1 + $0x8] sm:$0xf]
  %v286 = vld [vmem:[%s1 + $0xc] sm:$0xf]
  %v287 = vld [vmem:[%s1 + $0x10] sm:$0x3]
  %v288 = vld [vmem:[%s2] sm:$0x1]
  %v290 = vlaneseq
  %v291 = vshrl.u32 %v290, 7
  %v292 = vsub.s32 0, %v291
  %v293 = vrot.slane %v288, %v292
  %v551 = vunpack.c.l.b16 %v27
  %v552 = vunpack.c.l.b16 %v28
  %v553 = vunpack.c.l.b16 %v29
  %v554 = vunpack.c.l.b16 %v30
  %v555 = vunpack.c.l.b16 %v31
  %v556 = vunpack.c.l.b16 %v32
  %v557 = vunpack.c.l.b16 %v33
  %v558 = vunpack.c.l.b16 %v34
  %v559 = vunpack.c.l.b16 %v35
  %v560 = vunpack.c.l.b16 %v36
  %v561 = vunpack.c.l.b16 %v37
  %v562 = vunpack.c.l.b16 %v38
  %v563 = vunpack.c.l.b16 %v39
  %v564 = vunpack.c.l.b16 %v40
  %v565 = vunpack.c.l.b16 %v41
  %v566 = vunpack.c.l.b16 %v42
  %v567 = vunpack.c.l.b16 %v43
  %v568 = vunpack.c.l.b16 %v44
  %v569 = vunpack.c.l.b16 %v45
  %v570 = vunpack.c.l.b16 %v46
  %v571 = vunpack.c.l.b16 %v47
  %v572 = vunpack.c.l.b16 %v48
  %v573 = vunpack.c.l.b16 %v49
  %v574 = vunpack.c.l.b16 %v50
  %v575 = vunpack.c.l.b16 %v51
  %v576 = vunpack.c.l.b16 %v52
  %v577 = vunpack.c.l.b16 %v53
  %v578 = vunpack.c.l.b16 %v54
  %v579 = vunpack.c.l.b16 %v55
  %v580 = vunpack.c.l.b16 %v56
  %v581 = vunpack.c.l.b16 %v57
  %v582 = vunpack.c.l.b16 %v58
  %v583 = vunpack.c.l.b16 %v59
  %v584 = vunpack.c.l.b16 %v60
  %v585 = vunpack.c.l.b16 %v61
  %v586 = vunpack.c.l.b16 %v62
  %v587 = vunpack.c.l.b16 %v63
  %v588 = vunpack.c.l.b16 %v64
  %v589 = vunpack.c.l.b16 %v65
  %v590 = vunpack.c.l.b16 %v66
  %v591 = vunpack.c.l.b16 %v67
  %v592 = vunpack.c.l.b16 %v68
  %v593 = vunpack.c.l.b16 %v69
  %v594 = vunpack.c.l.b16 %v70
  %v595 = vunpack.c.l.b16 %v71
  %v596 = vunpack.c.l.b16 %v72
  %v597 = vunpack.c.l.b16 %v73
  %v598 = vunpack.c.l.b16 %v74
  %v599 = vunpack.c.l.b16 %v75
  %v600 = vunpack.c.l.b16 %v76
  %v601 = vunpack.c.l.b16 %v77
  %v602 = vunpack.c.l.b16 %v78
  %v603 = vunpack.c.l.b16 %v79
  %v604 = vunpack.c.l.b16 %v80
  %v605 = vunpack.c.l.b16 %v81
  %v606 = vunpack.c.l.b16 %v82
  %v607 = vunpack.c.l.b16 %v83
  %v608 = vunpack.c.l.b16 %v84
  %v609 = vunpack.c.l.b16 %v85
  %v610 = vunpack.c.l.b16 %v86
  %v611 = vunpack.c.l.b16 %v87
  %v612 = vunpack.c.l.b16 %v88
  %v613 = vunpack.c.l.b16 %v89
  %v614 = vunpack.c.l.b16 %v90
  %v615 = vunpack.c.l.b16 %v91
  %v616 = vunpack.c.l.b16 %v92
  %v617 = vunpack.c.l.b16 %v93
  %v618 = vunpack.c.l.b16 %v94
  %v619 = vunpack.c.l.b16 %v95
  %v620 = vunpack.c.l.b16 %v96
  %v621 = vunpack.c.l.b16 %v97
  %v622 = vunpack.c.l.b16 %v98
  %v623 = vunpack.c.l.b16 %v99
  %v624 = vunpack.c.l.b16 %v100
  %v625 = vunpack.c.l.b16 %v101
  %v626 = vunpack.c.l.b16 %v102
  %v627 = vunpack.c.l.b16 %v103
  %v628 = vunpack.c.l.b16 %v104
  %v629 = vunpack.c.l.b16 %v105
  %v630 = vunpack.c.l.b16 %v106
  %v631 = vunpack.c.l.b16 %v107
  %v632 = vunpack.c.l.b16 %v108
  %v633 = vunpack.c.l.b16 %v109
  %v634 = vunpack.c.l.b16 %v110
  %v635 = vunpack.c.l.b16 %v111
  %v636 = vunpack.c.l.b16 %v112
  %v637 = vunpack.c.l.b16 %v113
  %v638 = vunpack.c.l.b16 %v114
  %v639 = vunpack.c.l.b16 %v115
  %v640 = vunpack.c.l.b16 %v116
  %v641 = vunpack.c.l.b16 %v117
  %v642 = vunpack.c.l.b16 %v118
  %v643 = vunpack.c.l.b16 %v119
  %v644 = vunpack.c.l.b16 %v120
  %v645 = vunpack.c.l.b16 %v121
  %v646 = vunpack.c.l.b16 %v122
  %v647 = vunpack.c.l.b16 %v123
  %v648 = vunpack.c.l.b16 %v124
  %v649 = vunpack.c.l.b16 %v125
  %v650 = vunpack.c.l.b16 %v126
  %v651 = vunpack.c.l.b16 %v127
  %v652 = vunpack.c.l.b16 %v128
  %v653 = vunpack.c.l.b16 %v129
  %v654 = vunpack.c.l.b16 %v130
  %v655 = vunpack.c.l.b16 %v131
  %v656 = vunpack.c.l.b16 %v132
  %v657 = vunpack.c.l.b16 %v133
  %v658 = vunpack.c.l.b16 %v134
  %v659 = vunpack.c.l.b16 %v135
  %v660 = vunpack.c.l.b16 %v136
  %v661 = vunpack.c.l.b16 %v137
  %v662 = vunpack.c.l.b16 %v138
  %v663 = vunpack.c.l.b16 %v139
  %v664 = vunpack.c.l.b16 %v140
  %v665 = vunpack.c.l.b16 %v141
  %v666 = vunpack.c.l.b16 %v142
  %v667 = vunpack.c.l.b16 %v143
  %v668 = vunpack.c.l.b16 %v144
  %v669 = vunpack.c.l.b16 %v145
  %v670 = vunpack.c.l.b16 %v146
  %v671 = vunpack.c.l.b16 %v147
  %v672 = vunpack.c.l.b16 %v148
  %v673 = vunpack.c.l.b16 %v149
  %v674 = vunpack.c.l.b16 %v150
  %v675 = vunpack.c.l.b16 %v151
  %v676 = vunpack.c.l.b16 %v152
  %v677 = vunpack.c.l.b16 %v153
  %v678 = vunpack.c.l.b16 %v154
  %v679 = vunpack.c.l.b16 %v155
  %v680 = vunpack.c.l.b16 %v156
  %v681 = vunpack.c.l.b16 %v157
  %v682 = vunpack.c.l.b16 %v158
  %v683 = vunpack.c.l.b16 %v159
  %v684 = vunpack.c.l.b16 %v160
  %v685 = vunpack.c.l.b16 %v161
  %v686 = vunpack.c.l.b16 %v162
  %v687 = vunpack.c.l.b16 %v163
  %v688 = vunpack.c.l.b16 %v164
  %v689 = vunpack.c.l.b16 %v165
  %v690 = vunpack.c.l.b16 %v166
  %v691 = vunpack.c.l.b16 %v167
  %v692 = vunpack.c.l.b16 %v168
  %v693 = vunpack.c.l.b16 %v169
  %v694 = vunpack.c.l.b16 %v170
  %v695 = vunpack.c.l.b16 %v171
  %v696 = vunpack.c.l.b16 %v172
  %v697 = vunpack.c.l.b16 %v173
  %v698 = vunpack.c.l.b16 %v174
  %v699 = vunpack.c.l.b16 %v175
  %v700 = vunpack.c.l.b16 %v176
  %v701 = vunpack.c.l.b16 %v177
  %v702 = vunpack.c.l.b16 %v178
  %v703 = vunpack.c.l.b16 %v179
  %v704 = vunpack.c.l.b16 %v180
  %v705 = vunpack.c.l.b16 %v181
  %v706 = vunpack.c.l.b16 %v182
  %v707 = vunpack.c.l.b16 %v183
  %v708 = vunpack.c.l.b16 %v184
  %v709 = vunpack.c.l.b16 %v185
  %v710 = vunpack.c.l.b16 %v186
  %v711 = vunpack.c.l.b16 %v187
  %v712 = vunpack.c.l.b16 %v188
  %v713 = vunpack.c.l.b16 %v189
  %v714 = vunpack.c.l.b16 %v190
  %v715 = vunpack.c.l.b16 %v191
  %v716 = vunpack.c.l.b16 %v192
  %v717 = vunpack.c.l.b16 %v193
  %v718 = vunpack.c.l.b16 %v194
  %v719 = vunpack.c.l.b16 %v195
  %v720 = vunpack.c.l.b16 %v196
  %v721 = vunpack.c.l.b16 %v197
  %v722 = vunpack.c.l.b16 %v198
  %v723 = vunpack.c.l.b16 %v199
  %v724 = vunpack.c.l.b16 %v200
  %v725 = vunpack.c.l.b16 %v201
  %v726 = vunpack.c.l.b16 %v202
  %v727 = vunpack.c.l.b16 %v203
  %v728 = vunpack.c.l.b16 %v204
  %v729 = vunpack.c.l.b16 %v205
  %v730 = vunpack.c.l.b16 %v206
  %v731 = vunpack.c.l.b16 %v207
  %v732 = vunpack.c.l.b16 %v208
  %v733 = vunpack.c.l.b16 %v209
  %v734 = vunpack.c.l.b16 %v210
  %v735 = vunpack.c.l.b16 %v211
  %v736 = vunpack.c.l.b16 %v212
  %v737 = vunpack.c.l.b16 %v213
  %v738 = vunpack.c.l.b16 %v214
  %v739 = vunpack.c.l.b16 %v215
  %v740 = vunpack.c.l.b16 %v216
  %v741 = vunpack.c.l.b16 %v217
  %v742 = vunpack.c.l.b16 %v218
  %v743 = vunpack.c.l.b16 %v219
  %v744 = vunpack.c.l.b16 %v220
  %v745 = vunpack.c.l.b16 %v221
  %v746 = vunpack.c.l.b16 %v222
  %v747 = vunpack.c.l.b16 %v223
  %v748 = vunpack.c.l.b16 %v224
  %v749 = vunpack.c.l.b16 %v225
  %v750 = vunpack.c.l.b16 %v226
  %v751 = vunpack.c.l.b16 %v227
  %v752 = vunpack.c.l.b16 %v228
  %v753 = vunpack.c.l.b16 %v229
  %v754 = vunpack.c.l.b16 %v230
  %v755 = vunpack.c.l.b16 %v231
  %v756 = vunpack.c.l.b16 %v232
  %v757 = vunpack.c.l.b16 %v233
  %v758 = vunpack.c.l.b16 %v234
  %v759 = vunpack.c.l.b16 %v235
  %v760 = vunpack.c.l.b16 %v236
  %v761 = vunpack.c.l.b16 %v237
  %v762 = vunpack.c.l.b16 %v238
  %v763 = vunpack.c.l.b16 %v239
  %v764 = vunpack.c.l.b16 %v240
  %v765 = vunpack.c.l.b16 %v241
  %v766 = vunpack.c.l.b16 %v242
  %v767 = vunpack.c.l.b16 %v243
  %v768 = vunpack.c.l.b16 %v244
  %v769 = vunpack.c.l.b16 %v245
  %v770 = vunpack.c.l.b16 %v246
  %v771 = vunpack.c.l.b16 %v247
  %v772 = vunpack.c.l.b16 %v248
  %v773 = vunpack.c.l.b16 %v249
  %v774 = vunpack.c.l.b16 %v250
  %v775 = vunpack.c.l.b16 %v251
  %v776 = vunpack.c.l.b16 %v252
  %v777 = vunpack.c.l.b16 %v253
  %v778 = vunpack.c.l.b16 %v254
  %v779 = vunpack.c.l.b16 %v255
  %v780 = vunpack.c.l.b16 %v256
  %v781 = vunpack.c.l.b16 %v257
  %v782 = vunpack.c.l.b16 %v258
  %v783 = vunpack.c.l.b16 %v259
  %v784 = vunpack.c.l.b16 %v260
  %v785 = vunpack.c.l.b16 %v261
  %v786 = vunpack.c.l.b16 %v262
  %v787 = vunpack.c.l.b16 %v263
  %v788 = vunpack.c.l.b16 %v264
  %v789 = vunpack.c.l.b16 %v265
  %v790 = vunpack.c.l.b16 %v266
  %v791 = vunpack.c.l.b16 %v267
  %v792 = vunpack.c.l.b16 %v268
  %v793 = vunpack.c.l.b16 %v269
  %v794 = vunpack.c.l.b16 %v270
  %v795 = vunpack.c.l.b16 %v271
  %v796 = vunpack.c.l.b16 %v272
  %v797 = vunpack.c.l.b16 %v273
  %v798 = vunpack.c.l.b16 %v274
  %v799 = vunpack.c.l.b16 %v275
  %v800 = vunpack.c.l.b16 %v276
  %v801 = vunpack.c.l.b16 %v277
  %v802 = vunpack.c.l.b16 %v278
  %v803 = vunpack.c.l.b16 %v279
  %v804 = vunpack.c.l.b16 %v280
  %v805 = vunpack.c.l.b16 %v281
  %v806 = vunpack.c.l.b16 %v282
  %v807 = vpack.c.b16 %v552, %v551
  %v808 = vpack.c.b16 %v554, %v553
  %v809 = vpack.c.b16 %v556, %v555
  %v810 = vpack.c.b16 %v558, %v557
  %v811 = vpack.c.b16 %v560, %v559
  %v812 = vpack.c.b16 %v562, %v561
  %v813 = vpack.c.b16 %v564, %v563
  %v814 = vpack.c.b16 %v566, %v565
  %v815 = vpack.c.b16 %v568, %v567
  %v816 = vpack.c.b16 %v570, %v569
  %v817 = vpack.c.b16 %v572, %v571
  %v818 = vpack.c.b16 %v574, %v573
  %v819 = vpack.c.b16 %v576, %v575
  %v820 = vpack.c.b16 %v578, %v577
  %v821 = vpack.c.b16 %v580, %v579
  %v822 = vpack.c.b16 %v582, %v581
  %v823 = vpack.c.b16 %v584, %v583
  %v824 = vpack.c.b16 %v586, %v585
  %v825 = vpack.c.b16 %v588, %v587
  %v826 = vpack.c.b16 %v590, %v589
  %v827 = vpack.c.b16 %v592, %v591
  %v828 = vpack.c.b16 %v594, %v593
  %v829 = vpack.c.b16 %v596, %v595
  %v830 = vpack.c.b16 %v598, %v597
  %v831 = vpack.c.b16 %v600, %v599
  %v832 = vpack.c.b16 %v602, %v601
  %v833 = vpack.c.b16 %v604, %v603
  %v834 = vpack.c.b16 %v606, %v605
  %v835 = vpack.c.b16 %v608, %v607
  %v836 = vpack.c.b16 %v610, %v609
  %v837 = vpack.c.b16 %v612, %v611
  %v838 = vpack.c.b16 %v614, %v613
  %v839 = vpack.c.b16 %v616, %v615
  %v840 = vpack.c.b16 %v618, %v617
  %v841 = vpack.c.b16 %v620, %v619
  %v842 = vpack.c.b16 %v622, %v621
  %v843 = vpack.c.b16 %v624, %v623
  %v844 = vpack.c.b16 %v626, %v625
  %v845 = vpack.c.b16 %v628, %v627
  %v846 = vpack.c.b16 %v630, %v629
  %v847 = vpack.c.b16 %v632, %v631
  %v848 = vpack.c.b16 %v634, %v633
  %v849 = vpack.c.b16 %v636, %v635
  %v850 = vpack.c.b16 %v638, %v637
  %v851 = vpack.c.b16 %v640, %v639
  %v852 = vpack.c.b16 %v642, %v641
  %v853 = vpack.c.b16 %v644, %v643
  %v854 = vpack.c.b16 %v646, %v645
  %v855 = vpack.c.b16 %v648, %v647
  %v856 = vpack.c.b16 %v650, %v649
  %v857 = vpack.c.b16 %v652, %v651
  %v858 = vpack.c.b16 %v654, %v653
  %v859 = vpack.c.b16 %v656, %v655
  %v860 = vpack.c.b16 %v658, %v657
  %v861 = vpack.c.b16 %v660, %v659
  %v862 = vpack.c.b16 %v662, %v661
  %v863 = vpack.c.b16 %v664, %v663
  %v864 = vpack.c.b16 %v666, %v665
  %v865 = vpack.c.b16 %v668, %v667
  %v866 = vpack.c.b16 %v670, %v669
  %v867 = vpack.c.b16 %v672, %v671
  %v868 = vpack.c.b16 %v674, %v673
  %v869 = vpack.c.b16 %v676, %v675
  %v870 = vpack.c.b16 %v678, %v677
  %v871 = vpack.c.b16 %v680, %v679
  %v872 = vpack.c.b16 %v682, %v681
  %v873 = vpack.c.b16 %v684, %v683
  %v874 = vpack.c.b16 %v686, %v685
  %v875 = vpack.c.b16 %v688, %v687
  %v876 = vpack.c.b16 %v690, %v689
  %v877 = vpack.c.b16 %v692, %v691
  %v878 = vpack.c.b16 %v694, %v693
  %v879 = vpack.c.b16 %v696, %v695
  %v880 = vpack.c.b16 %v698, %v697
  %v881 = vpack.c.b16 %v700, %v699
  %v882 = vpack.c.b16 %v702, %v701
  %v883 = vpack.c.b16 %v704, %v703
  %v884 = vpack.c.b16 %v706, %v705
  %v885 = vpack.c.b16 %v708, %v707
  %v886 = vpack.c.b16 %v710, %v709
  %v887 = vpack.c.b16 %v712, %v711
  %v888 = vpack.c.b16 %v714, %v713
  %v889 = vpack.c.b16 %v716, %v715
  %v890 = vpack.c.b16 %v718, %v717
  %v891 = vpack.c.b16 %v720, %v719
  %v892 = vpack.c.b16 %v722, %v721
  %v893 = vpack.c.b16 %v724, %v723
  %v894 = vpack.c.b16 %v726, %v725
  %v895 = vpack.c.b16 %v728, %v727
  %v896 = vpack.c.b16 %v730, %v729
  %v897 = vpack.c.b16 %v732, %v731
  %v898 = vpack.c.b16 %v734, %v733
  %v899 = vpack.c.b16 %v736, %v735
  %v900 = vpack.c.b16 %v738, %v737
  %v901 = vpack.c.b16 %v740, %v739
  %v902 = vpack.c.b16 %v742, %v741
  %v903 = vpack.c.b16 %v744, %v743
  %v904 = vpack.c.b16 %v746, %v745
  %v905 = vpack.c.b16 %v748, %v747
  %v906 = vpack.c.b16 %v750, %v749
  %v907 = vpack.c.b16 %v752, %v751
  %v908 = vpack.c.b16 %v754, %v753
  %v909 = vpack.c.b16 %v756, %v755
  %v910 = vpack.c.b16 %v758, %v757
  %v911 = vpack.c.b16 %v760, %v759
  %v912 = vpack.c.b16 %v762, %v761
  %v913 = vpack.c.b16 %v764, %v763
  %v914 = vpack.c.b16 %v766, %v765
  %v915 = vpack.c.b16 %v768, %v767
  %v916 = vpack.c.b16 %v770, %v769
  %v917 = vpack.c.b16 %v772, %v771
  %v918 = vpack.c.b16 %v774, %v773
  %v919 = vpack.c.b16 %v776, %v775
  %v920 = vpack.c.b16 %v778, %v777
  %v921 = vpack.c.b16 %v780, %v779
  %v922 = vpack.c.b16 %v782, %v781
  %v923 = vpack.c.b16 %v784, %v783
  %v924 = vpack.c.b16 %v786, %v785
  %v925 = vpack.c.b16 %v788, %v787
  %v926 = vpack.c.b16 %v790, %v789
  %v927 = vpack.c.b16 %v792, %v791
  %v928 = vpack.c.b16 %v794, %v793
  %v929 = vpack.c.b16 %v796, %v795
  %v930 = vpack.c.b16 %v798, %v797
  %v931 = vpack.c.b16 %v800, %v799
  %v932 = vpack.c.b16 %v802, %v801
  %v933 = vpack.c.b16 %v804, %v803
  %v934 = vpack.c.b16 %v806, %v805
  %v940 = vunpack.c.l.b16 %v283
  %v941 = vunpack.c.l.b16 %v284
  %v942 = vunpack.c.l.b16 %v285
  %v943 = vunpack.c.l.b16 %v286
  %v944 = vunpack.c.l.b16 %v287
  %v945 = vpack.c.b16 %v941, %v940
  %v946 = vpack.c.b16 %v943, %v942
  %v947 = vpack.c.b16 %v944, %v944
  %vm950 = vcmask 293888
  %v952 = vsel %vm950, %v807, 0
  %v955 = vsel %vm950, %v808, 0
  %v958 = vsel %vm950, %v809, 0
  %v961 = vsel %vm950, %v810, 0
  %v964 = vsel %vm950, %v811, 0
  %v967 = vsel %vm950, %v812, 0
  %v970 = vsel %vm950, %v813, 0
  %v973 = vsel %vm950, %v814, 0
  %v976 = vsel %vm950, %v815, 0
  %v979 = vsel %vm950, %v816, 0
  %v982 = vsel %vm950, %v817, 0
  %v985 = vsel %vm950, %v818, 0
  %v988 = vsel %vm950, %v819, 0
  %v991 = vsel %vm950, %v820, 0
  %v994 = vsel %vm950, %v821, 0
  %v997 = vsel %vm950, %v822, 0
  %v1000 = vsel %vm950, %v823, 0
  %v1003 = vsel %vm950, %v824, 0
  %v1006 = vsel %vm950, %v825, 0
  %v1009 = vsel %vm950, %v826, 0
  %v1012 = vsel %vm950, %v827, 0
  %v1015 = vsel %vm950, %v828, 0
  %v1018 = vsel %vm950, %v829, 0
  %v1021 = vsel %vm950, %v830, 0
  %v1024 = vsel %vm950, %v831, 0
  %v1027 = vsel %vm950, %v832, 0
  %v1030 = vsel %vm950, %v833, 0
  %v1033 = vsel %vm950, %v834, 0
  %v1036 = vsel %vm950, %v835, 0
  %v1039 = vsel %vm950, %v836, 0
  %v1042 = vsel %vm950, %v837, 0
  %v1045 = vsel %vm950, %v838, 0
  %v1048 = vsel %vm950, %v839, 0
  %v1051 = vsel %vm950, %v840, 0
  %v1054 = vsel %vm950, %v841, 0
  %v1057 = vsel %vm950, %v842, 0
  %v1060 = vsel %vm950, %v843, 0
  %v1063 = vsel %vm950, %v844, 0
  %v1066 = vsel %vm950, %v845, 0
  %v1069 = vsel %vm950, %v846, 0
  %v1072 = vsel %vm950, %v847, 0
  %v1075 = vsel %vm950, %v848, 0
  %v1078 = vsel %vm950, %v849, 0
  %v1081 = vsel %vm950, %v850, 0
  %v1084 = vsel %vm950, %v851, 0
  %v1087 = vsel %vm950, %v852, 0
  %v1090 = vsel %vm950, %v853, 0
  %v1093 = vsel %vm950, %v854, 0
  %v1096 = vsel %vm950, %v855, 0
  %v1099 = vsel %vm950, %v856, 0
  %v1102 = vsel %vm950, %v857, 0
  %v1105 = vsel %vm950, %v858, 0
  %v1108 = vsel %vm950, %v859, 0
  %v1111 = vsel %vm950, %v860, 0
  %v1114 = vsel %vm950, %v861, 0
  %v1117 = vsel %vm950, %v862, 0
  %v1120 = vsel %vm950, %v863, 0
  %v1123 = vsel %vm950, %v864, 0
  %v1126 = vsel %vm950, %v865, 0
  %v1129 = vsel %vm950, %v866, 0
  %v1132 = vsel %vm950, %v867, 0
  %v1135 = vsel %vm950, %v868, 0
  %v1138 = vsel %vm950, %v869, 0
  %v1141 = vsel %vm950, %v870, 0
  %v1144 = vsel %vm950, %v871, 0
  %v1147 = vsel %vm950, %v872, 0
  %v1150 = vsel %vm950, %v873, 0
  %v1153 = vsel %vm950, %v874, 0
  %v1156 = vsel %vm950, %v875, 0
  %v1159 = vsel %vm950, %v876, 0
  %v1162 = vsel %vm950, %v877, 0
  %v1165 = vsel %vm950, %v878, 0
  %v1168 = vsel %vm950, %v879, 0
  %v1171 = vsel %vm950, %v880, 0
  %v1174 = vsel %vm950, %v881, 0
  %v1177 = vsel %vm950, %v882, 0
  %v1180 = vsel %vm950, %v883, 0
  %v1183 = vsel %vm950, %v884, 0
  %v1186 = vsel %vm950, %v885, 0
  %v1189 = vsel %vm950, %v886, 0
  %v1192 = vsel %vm950, %v887, 0
  %v1195 = vsel %vm950, %v888, 0
  %v1198 = vsel %vm950, %v889, 0
  %v1201 = vsel %vm950, %v890, 0
  %v1204 = vsel %vm950, %v891, 0
  %v1207 = vsel %vm950, %v892, 0
  %v1210 = vsel %vm950, %v893, 0
  %v1213 = vsel %vm950, %v894, 0
  %v1216 = vsel %vm950, %v895, 0
  %v1219 = vsel %vm950, %v896, 0
  %v1222 = vsel %vm950, %v897, 0
  %v1225 = vsel %vm950, %v898, 0
  %v1228 = vsel %vm950, %v899, 0
  %v1231 = vsel %vm950, %v900, 0
  %v1234 = vsel %vm950, %v901, 0
  %v1237 = vsel %vm950, %v902, 0
  %v1240 = vsel %vm950, %v903, 0
  %v1243 = vsel %vm950, %v904, 0
  %v1246 = vsel %vm950, %v905, 0
  %v1249 = vsel %vm950, %v906, 0
  %v1252 = vsel %vm950, %v907, 0
  %v1255 = vsel %vm950, %v908, 0
  %v1258 = vsel %vm950, %v909, 0
  %v1261 = vsel %vm950, %v910, 0
  %v1264 = vsel %vm950, %v911, 0
  %v1267 = vsel %vm950, %v912, 0
  %v1270 = vsel %vm950, %v913, 0
  %v1273 = vsel %vm950, %v914, 0
  %v1276 = vsel %vm950, %v915, 0
  %v1279 = vsel %vm950, %v916, 0
  %v1282 = vsel %vm950, %v917, 0
  %v1285 = vsel %vm950, %v918, 0
  %v1288 = vsel %vm950, %v919, 0
  %v1291 = vsel %vm950, %v920, 0
  %v1294 = vsel %vm950, %v921, 0
  %v1297 = vsel %vm950, %v922, 0
  %v1300 = vsel %vm950, %v923, 0
  %v1303 = vsel %vm950, %v924, 0
  %v1306 = vsel %vm950, %v925, 0
  %v1309 = vsel %vm950, %v926, 0
  %v1312 = vsel %vm950, %v927, 0
  %v1315 = vsel %vm950, %v928, 0
  %v1318 = vsel %vm950, %v929, 0
  %v1321 = vsel %vm950, %v930, 0
  %v1324 = vsel %vm950, %v931, 0
  %v1327 = vsel %vm950, %v932, 0
  %v1330 = vsel %vm950, %v933, 0
  %v1333 = vsel %vm950, %v934, 0
  %vm1335 = vcmask 1041408
  %v1337 = vsel %vm1335, %v947, 0
  %1339 = vmatprep.subr.bf16.mxu0 0
  %1340 = vmatpush1.bf16.msra.mxu0 %v945
  %1341 = vmatprep.subr.bf16.mxu0 0
  %1342 = vmatpush1.bf16.msra.mxu0 %v946
  %1343 = vmatprep.subr.bf16.mxu0 0
  %1344 = vmatpush1.bf16.msra.mxu0 %v1337
  %1345 = vmatprep.subr.bf16.mxu0 0
  %1346 = vmatpush1.bf16.msra.mxu0 0
  %1347 = vmatprep.subr.bf16.mxu0 0
  %1348 = vmatpush1.bf16.msra.mxu0 0
  %1349 = vmatprep.subr.bf16.mxu0 0
  %1350 = vmatpush1.bf16.msra.mxu0 0
  %1351 = vmatprep.subr.bf16.mxu0 0
  %1352 = vmatpush1.bf16.msra.mxu0 0
  %1353 = vmatprep.subr.bf16.mxu0 0
  %1354 = vmatpush1.bf16.msra.mxu0 0
  %1355 = vmatprep.subr.bf16.mxu0 0
  %1356 = vmatpush1.bf16.msra.mxu0 0
  %1357 = vmatprep.subr.bf16.mxu0 0
  %1358 = vmatpush1.bf16.msra.mxu0 0
  %1359 = vmatprep.subr.bf16.mxu0 0
  %1360 = vmatpush1.bf16.msra.mxu0 0
  %1361 = vmatprep.subr.bf16.mxu0 0
  %1362 = vmatpush1.bf16.msra.mxu0 0
  %1363 = vmatprep.subr.bf16.mxu0 0
  %1364 = vmatpush1.bf16.msra.mxu0 0
  %1365 = vmatprep.subr.bf16.mxu0 0
  %1366 = vmatpush1.bf16.msra.mxu0 0
  %1367 = vmatprep.subr.bf16.mxu0 0
  %1368 = vmatpush1.bf16.msra.mxu0 0
  %1369 = vmatprep.subr.bf16.mxu0 0
  %1370 = vmatpush1.bf16.msra.mxu0 0
  %1371 = vmatprep.mubr.bf16.mxu0 0
  %1372 = vmatmul.mubr.bf16.gmra.mrb[0].mxu0 %v952
  %v1373 = vpop.f32.mrb[0].mxu0
  %v1374 = vadd.f32 %v293, %v1373
  %v1375 = vpop.f32.mrb[0].mxu0
  %v1376 = vpop.f32.mrb[0].mxu0
  %v1377 = vadd.f32 %v293, %v1376
  %v1378 = vpop.f32.mrb[0].mxu0
  %1379 = vmatprep.mubr.bf16.mxu0 0
  %1380 = vmatmul.mubr.bf16.gmra.mrb[0].mxu0 %v955
  %v1381 = vpop.f32.mrb[0].mxu0
  %v1382 = vadd.f32 %v293, %v1381
  %v1383 = vpop.f32.mrb[0].mxu0
  %v1384 = vpop.f32.mrb[0].mxu0
  %v1385 = vadd.f32 %v293, %v1384
  %v1386 = vpop.f32.mrb[0].mxu0
  %1387 = vmatprep.mubr.bf16.mxu0 0
  %1388 = vmatmul.mubr.bf16.gmra.mrb[0].mxu0 %v958
  %v1389 = vpop.f32.mrb[0].mxu0
  %v1390 = vadd.f32 %v293, %v1389
  %v1391 = vpop.f32.mrb[0].mxu0
  %v1392 = vpop.f32.mrb[0].mxu0
  %v1393 = vadd.f32 %v293, %v1392
  %v1394 = vpop.f32.mrb[0].mxu0
  %1395 = vmatprep.mubr.bf16.mxu0 0
  %1396 = vmatmul.mubr.bf16.gmra.mrb[0].mxu0 %v961
  %v1397 = vpop.f32.mrb[0].mxu0
  %v1398 = vadd.f32 %v293, %v1397
  %v1399 = vpop.f32.mrb[0].mxu0
  %v1400 = vpop.f32.mrb[0].mxu0
  %v1401 = vadd.f32 %v293, %v1400
  %v1402 = vpop.f32.mrb[0].mxu0
  %1403 = vmatprep.mubr.bf16.mxu0 0
  %1404 = vmatmul.mubr.bf16.gmra.mrb[0].mxu0 %v964
  %v1405 = vpop.f32.mrb[0].mxu0
  %v1406 = vadd.f32 %v293, %v1405
  %v1407 = vpop.f32.mrb[0].mxu0
  %v1408 = vpop.f32.mrb[0].mxu0
  %v1409 = vadd.f32 %v293, %v1408
  %v1410 = vpop.f32.mrb[0].mxu0
  %1411 = vmatprep.mubr.bf16.mxu0 0
  %1412 = vmatmul.mubr.bf16.gmra.mrb[0].mxu0 %v967
  %v1413 = vpop.f32.mrb[0].mxu0
  %v1414 = vadd.f32 %v293, %v1413
  %v1415 = vpop.f32.mrb[0].mxu0
  %v1416 = vpop.f32.mrb[0].mxu0
  %v1417 = vadd.f32 %v293, %v1416
  %v1418 = vpop.f32.mrb[0].mxu0
  %1419 = vmatprep.mubr.bf16.mxu0 0
  %1420 = vmatmul.mubr.bf16.gmra.mrb[0].mxu0 %v970
  %v1421 = vpop.f32.mrb[0].mxu0
  %v1422 = vadd.f32 %v293, %v1421
  %v1423 = vpop.f32.mrb[0].mxu0
  %v1424 = vpop.f32.mrb[0].mxu0
  %v1425 = vadd.f32 %v293, %v1424
  %v1426 = vpop.f32.mrb[0].mxu0
  %1427 = vmatprep.mubr.bf16.mxu0 0
  %1428 = vmatmul.mubr.bf16.gmra.mrb[0].mxu0 %v973
  %v1429 = vpop.f32.mrb[0].mxu0
  %v1430 = vadd.f32 %v293, %v1429
  %v1431 = vpop.f32.mrb[0].mxu0
  %v1432 = vpop.f32.mrb[0].mxu0
  %v1433 = vadd.f32 %v293, %v1432
  %v1434 = vpop.f32.mrb[0].mxu0
  %1435 = vmatprep.mubr.bf16.mxu0 0
  %1436 = vmatmul.mubr.bf16.gmra.mrb[0].mxu0 %v976
  %v1437 = vpop.f32.mrb[0].mxu0
  %v1438 = vadd.f32 %v293, %v1437
  %v1439 = vpop.f32.mrb[0].mxu0
  %v1440 = vpop.f32.mrb[0].mxu0
  %v1441 = vadd.f32 %v293, %v1440
  %v1442 = vpop.f32.mrb[0].mxu0
  %1443 = vmatprep.mubr.bf16.mxu0 0
  %1444 = vmatmul.mubr.bf16.gmra.mrb[0].mxu0 %v979
  %v1445 = vpop.f32.mrb[0].mxu0
  %v1446 = vadd.f32 %v293, %v1445
  %v1447 = vpop.f32.mrb[0].mxu0
  %v1448 = vpop.f32.mrb[0].mxu0
  %v1449 = vadd.f32 %v293, %v1448
  %v1450 = vpop.f32.mrb[0].mxu0
  %1451 = vmatprep.mubr.bf16.mxu0 0
  %1452 = vmatmul.mubr.bf16.gmra.mrb[0].mxu0 %v982
  %v1453 = vpop.f32.mrb[0].mxu0
  %v1454 = vadd.f32 %v293, %v1453
  %v1455 = vpop.f32.mrb[0].mxu0
  %v1456 = vpop.f32.mrb[0].mxu0
  %v1457 = vadd.f32 %v293, %v1456
  %v1458 = vpop.f32.mrb[0].mxu0
  %1459 = vmatprep.mubr.bf16.mxu0 0
  %1460 = vmatmul.mubr.bf16.gmra.mrb[0].mxu0 %v985
  %v1461 = vpop.f32.mrb[0].mxu0
  %v1462 = vadd.f32 %v293, %v1461
  %v1463 = vpop.f32.mrb[0].mxu0
  %v1464 = vpop.f32.mrb[0].mxu0
  %v1465 = vadd.f32 %v293, %v1464
  %v1466 = vpop.f32.mrb[0].mxu0
  %1467 = vmatprep.mubr.bf16.mxu0 0
  %1468 = vmatmul.mubr.bf16.gmra.mrb[0].mxu0 %v988
  %v1469 = vpop.f32.mrb[0].mxu0
  %v1470 = vadd.f32 %v293, %v1469
  %v1471 = vpop.f32.mrb[0].mxu0
  %v1472 = vpop.f32.mrb[0].mxu0
  %v1473 = vadd.f32 %v293, %v1472
  %v1474 = vpop.f32.mrb[0].mxu0
  %1475 = vmatprep.mubr.bf16.mxu0 0
  %1476 = vmatmul.mubr.bf16.gmra.mrb[0].mxu0 %v991
  %v1477 = vpop.f32.mrb[0].mxu0
  %v1478 = vadd.f32 %v293, %v1477
  %v1479 = vpop.f32.mrb[0].mxu0
  %v1480 = vpop.f32.mrb[0].mxu0
  %v1481 = vadd.f32 %v293, %v1480
  %v1482 = vpop.f32.mrb[0].mxu0
  %1483 = vmatprep.mubr.bf16.mxu0 0
  %1484 = vmatmul.mubr.bf16.gmra.mrb[0].mxu0 %v994
  %v1485 = vpop.f32.mrb[0].mxu0
  %v1486 = vadd.f32 %v293, %v1485
  %v1487 = vpop.f32.mrb[0].mxu0
  %v1488 = vpop.f32.mrb[0].mxu0
  %v1489 = vadd.f32 %v293, %v1488
  %v1490 = vpop.f32.mrb[0].mxu0
  %1491 = vmatprep.mubr.bf16.mxu0 0
  %1492 = vmatmul.mubr.bf16.gmra.mrb[0].mxu0 %v997
  %v1493 = vpop.f32.mrb[0].mxu0
  %v1494 = vadd.f32 %v293, %v1493
  %v1495 = vpop.f32.mrb[0].mxu0
  %v1496 = vpop.f32.mrb[0].mxu0
  %v1497 = vadd.f32 %v293, %v1496
  %v1498 = vpop.f32.mrb[0].mxu0
  %1499 = vmatprep.mubr.bf16.mxu0 0
  %1500 = vmatmul.mubr.bf16.gmra.mrb[0].mxu0 %v1000
  %v1501 = vpop.f32.mrb[0].mxu0
  %v1502 = vadd.f32 %v293, %v1501
  %v1503 = vpop.f32.mrb[0].mxu0
  %v1504 = vpop.f32.mrb[0].mxu0
  %v1505 = vadd.f32 %v293, %v1504
  %v1506 = vpop.f32.mrb[0].mxu0
  %1507 = vmatprep.mubr.bf16.mxu0 0
  %1508 = vmatmul.mubr.bf16.gmra.mrb[0].mxu0 %v1003
  %v1509 = vpop.f32.mrb[0].mxu0
  %v1510 = vadd.f32 %v293, %v1509
  %v1511 = vpop.f32.mrb[0].mxu0
  %v1512 = vpop.f32.mrb[0].mxu0
  %v1513 = vadd.f32 %v293, %v1512
  %v1514 = vpop.f32.mrb[0].mxu0
  %1515 = vmatprep.mubr.bf16.mxu0 0
  %1516 = vmatmul.mubr.bf16.gmra.mrb[0].mxu0 %v1006
  %v1517 = vpop.f32.mrb[0].mxu0
  %v1518 = vadd.f32 %v293, %v1517
  %v1519 = vpop.f32.mrb[0].mxu0
  %v1520 = vpop.f32.mrb[0].mxu0
  %v1521 = vadd.f32 %v293, %v1520
  %v1522 = vpop.f32.mrb[0].mxu0
  %1523 = vmatprep.mubr.bf16.mxu0 0
  %1524 = vmatmul.mubr.bf16.gmra.mrb[0].mxu0 %v1009
  %v1525 = vpop.f32.mrb[0].mxu0
  %v1526 = vadd.f32 %v293, %v1525
  %v1527 = vpop.f32.mrb[0].mxu0
  %v1528 = vpop.f32.mrb[0].mxu0
  %v1529 = vadd.f32 %v293, %v1528
  %v1530 = vpop.f32.mrb[0].mxu0
  %1531 = vmatprep.mubr.bf16.mxu0 0
  %1532 = vmatmul.mubr.bf16.gmra.mrb[0].mxu0 %v1012
  %v1533 = vpop.f32.mrb[0].mxu0
  %v1534 = vadd.f32 %v293, %v1533
  %v1535 = vpop.f32.mrb[0].mxu0
  %v1536 = vpop.f32.mrb[0].mxu0
  %v1537 = vadd.f32 %v293, %v1536
  %v1538 = vpop.f32.mrb[0].mxu0
  %1539 = vmatprep.mubr.bf16.mxu0 0
  %1540 = vmatmul.mubr.bf16.gmra.mrb[0].mxu0 %v1015
  %v1541 = vpop.f32.mrb[0].mxu0
  %v1542 = vadd.f32 %v293, %v1541
  %v1543 = vpop.f32.mrb[0].mxu0
  %v1544 = vpop.f32.mrb[0].mxu0
  %v1545 = vadd.f32 %v293, %v1544
  %v1546 = vpop.f32.mrb[0].mxu0
  %1547 = vmatprep.mubr.bf16.mxu0 0
  %1548 = vmatmul.mubr.bf16.gmra.mrb[0].mxu0 %v1018
  %v1549 = vpop.f32.mrb[0].mxu0
  %v1550 = vadd.f32 %v293, %v1549
  %v1551 = vpop.f32.mrb[0].mxu0
  %v1552 = vpop.f32.mrb[0].mxu0
  %v1553 = vadd.f32 %v293, %v1552
  %v1554 = vpop.f32.mrb[0].mxu0
  %1555 = vmatprep.mubr.bf16.mxu0 0
  %1556 = vmatmul.mubr.bf16.gmra.mrb[0].mxu0 %v1021
  %v1557 = vpop.f32.mrb[0].mxu0
  %v1558 = vadd.f32 %v293, %v1557
  %v1559 = vpop.f32.mrb[0].mxu0
  %v1560 = vpop.f32.mrb[0].mxu0
  %v1561 = vadd.f32 %v293, %v1560
  %v1562 = vpop.f32.mrb[0].mxu0
  %1563 = vmatprep.mubr.bf16.mxu0 0
  %1564 = vmatmul.mubr.bf16.gmra.mrb[0].mxu0 %v1024
  %v1565 = vpop.f32.mrb[0].mxu0
  %v1566 = vadd.f32 %v293, %v1565
  %v1567 = vpop.f32.mrb[0].mxu0
  %v1568 = vpop.f32.mrb[0].mxu0
  %v1569 = vadd.f32 %v293, %v1568
  %v1570 = vpop.f32.mrb[0].mxu0
  %1571 = vmatprep.mubr.bf16.mxu0 0
  %1572 = vmatmul.mubr.bf16.gmra.mrb[0].mxu0 %v1027
  %v1573 = vpop.f32.mrb[0].mxu0
  %v1574 = vadd.f32 %v293, %v1573
  %v1575 = vpop.f32.mrb[0].mxu0
  %v1576 = vpop.f32.mrb[0].mxu0
  %v1577 = vadd.f32 %v293, %v1576
  %v1578 = vpop.f32.mrb[0].mxu0
  %1579 = vmatprep.mubr.bf16.mxu0 0
  %1580 = vmatmul.mubr.bf16.gmra.mrb[0].mxu0 %v1030
  %v1581 = vpop.f32.mrb[0].mxu0
  %v1582 = vadd.f32 %v293, %v1581
  %v1583 = vpop.f32.mrb[0].mxu0
  %v1584 = vpop.f32.mrb[0].mxu0
  %v1585 = vadd.f32 %v293, %v1584
  %v1586 = vpop.f32.mrb[0].mxu0
  %1587 = vmatprep.mubr.bf16.mxu0 0
  %1588 = vmatmul.mubr.bf16.gmra.mrb[0].mxu0 %v1033
  %v1589 = vpop.f32.mrb[0].mxu0
  %v1590 = vadd.f32 %v293, %v1589
  %v1591 = vpop.f32.mrb[0].mxu0
  %v1592 = vpop.f32.mrb[0].mxu0
  %v1593 = vadd.f32 %v293, %v1592
  %v1594 = vpop.f32.mrb[0].mxu0
  %1595 = vmatprep.mubr.bf16.mxu0 0
  %1596 = vmatmul.mubr.bf16.gmra.mrb[0].mxu0 %v1036
  %v1597 = vpop.f32.mrb[0].mxu0
  %v1598 = vadd.f32 %v293, %v1597
  %v1599 = vpop.f32.mrb[0].mxu0
  %v1600 = vpop.f32.mrb[0].mxu0
  %v1601 = vadd.f32 %v293, %v1600
  %v1602 = vpop.f32.mrb[0].mxu0
  %1603 = vmatprep.mubr.bf16.mxu0 0
  %1604 = vmatmul.mubr.bf16.gmra.mrb[0].mxu0 %v1039
  %v1605 = vpop.f32.mrb[0].mxu0
  %v1606 = vadd.f32 %v293, %v1605
  %v1607 = vpop.f32.mrb[0].mxu0
  %v1608 = vpop.f32.mrb[0].mxu0
  %v1609 = vadd.f32 %v293, %v1608
  %v1610 = vpop.f32.mrb[0].mxu0
  %1611 = vmatprep.mubr.bf16.mxu0 0
  %1612 = vmatmul.mubr.bf16.gmra.mrb[0].mxu0 %v1042
  %v1613 = vpop.f32.mrb[0].mxu0
  %v1614 = vadd.f32 %v293, %v1613
  %v1615 = vpop.f32.mrb[0].mxu0
  %v1616 = vpop.f32.mrb[0].mxu0
  %v1617 = vadd.f32 %v293, %v1616
  %v1618 = vpop.f32.mrb[0].mxu0
  %1619 = vmatprep.mubr.bf16.mxu0 0
  %1620 = vmatmul.mubr.bf16.gmra.mrb[0].mxu0 %v1045
  %v1621 = vpop.f32.mrb[0].mxu0
  %v1622 = vadd.f32 %v293, %v1621
  %v1623 = vpop.f32.mrb[0].mxu0
  %v1624 = vpop.f32.mrb[0].mxu0
  %v1625 = vadd.f32 %v293, %v1624
  %v1626 = vpop.f32.mrb[0].mxu0
  %1627 = vmatprep.mubr.bf16.mxu0 0
  %1628 = vmatmul.mubr.bf16.gmra.mrb[0].mxu0 %v1048
  %v1629 = vpop.f32.mrb[0].mxu0
  %v1630 = vadd.f32 %v293, %v1629
  %v1631 = vpop.f32.mrb[0].mxu0
  %v1632 = vpop.f32.mrb[0].mxu0
  %v1633 = vadd.f32 %v293, %v1632
  %v1634 = vpop.f32.mrb[0].mxu0
  %1635 = vmatprep.mubr.bf16.mxu0 0
  %1636 = vmatmul.mubr.bf16.gmra.mrb[0].mxu0 %v1051
  %v1637 = vpop.f32.mrb[0].mxu0
  %v1638 = vadd.f32 %v293, %v1637
  %v1639 = vpop.f32.mrb[0].mxu0
  %v1640 = vpop.f32.mrb[0].mxu0
  %v1641 = vadd.f32 %v293, %v1640
  %v1642 = vpop.f32.mrb[0].mxu0
  %1643 = vmatprep.mubr.bf16.mxu0 0
  %1644 = vmatmul.mubr.bf16.gmra.mrb[0].mxu0 %v1054
  %v1645 = vpop.f32.mrb[0].mxu0
  %v1646 = vadd.f32 %v293, %v1645
  %v1647 = vpop.f32.mrb[0].mxu0
  %v1648 = vpop.f32.mrb[0].mxu0
  %v1649 = vadd.f32 %v293, %v1648
  %v1650 = vpop.f32.mrb[0].mxu0
  %1651 = vmatprep.mubr.bf16.mxu0 0
  %1652 = vmatmul.mubr.bf16.gmra.mrb[0].mxu0 %v1057
  %v1653 = vpop.f32.mrb[0].mxu0
  %v1654 = vadd.f32 %v293, %v1653
  %v1655 = vpop.f32.mrb[0].mxu0
  %v1656 = vpop.f32.mrb[0].mxu0
  %v1657 = vadd.f32 %v293, %v1656
  %v1658 = vpop.f32.mrb[0].mxu0
  %1659 = vmatprep.mubr.bf16.mxu0 0
  %1660 = vmatmul.mubr.bf16.gmra.mrb[0].mxu0 %v1060
  %v1661 = vpop.f32.mrb[0].mxu0
  %v1662 = vadd.f32 %v293, %v1661
  %v1663 = vpop.f32.mrb[0].mxu0
  %v1664 = vpop.f32.mrb[0].mxu0
  %v1665 = vadd.f32 %v293, %v1664
  %v1666 = vpop.f32.mrb[0].mxu0
  %1667 = vmatprep.mubr.bf16.mxu0 0
  %1668 = vmatmul.mubr.bf16.gmra.mrb[0].mxu0 %v1063
  %v1669 = vpop.f32.mrb[0].mxu0
  %v1670 = vadd.f32 %v293, %v1669
  %v1671 = vpop.f32.mrb[0].mxu0
  %v1672 = vpop.f32.mrb[0].mxu0
  %v1673 = vadd.f32 %v293, %v1672
  %v1674 = vpop.f32.mrb[0].mxu0
  %1675 = vmatprep.mubr.bf16.mxu0 0
  %1676 = vmatmul.mubr.bf16.gmra.mrb[0].mxu0 %v1066
  %v1677 = vpop.f32.mrb[0].mxu0
  %v1678 = vadd.f32 %v293, %v1677
  %v1679 = vpop.f32.mrb[0].mxu0
  %v1680 = vpop.f32.mrb[0].mxu0
  %v1681 = vadd.f32 %v293, %v1680
  %v1682 = vpop.f32.mrb[0].mxu0
  %1683 = vmatprep.mubr.bf16.mxu0 0
  %1684 = vmatmul.mubr.bf16.gmra.mrb[0].mxu0 %v1069
  %v1685 = vpop.f32.mrb[0].mxu0
  %v1686 = vadd.f32 %v293, %v1685
  %v1687 = vpop.f32.mrb[0].mxu0
  %v1688 = vpop.f32.mrb[0].mxu0
  %v1689 = vadd.f32 %v293, %v1688
  %v1690 = vpop.f32.mrb[0].mxu0
  %1691 = vmatprep.mubr.bf16.mxu0 0
  %1692 = vmatmul.mubr.bf16.gmra.mrb[0].mxu0 %v1072
  %v1693 = vpop.f32.mrb[0].mxu0
  %v1694 = vadd.f32 %v293, %v1693
  %v1695 = vpop.f32.mrb[0].mxu0
  %v1696 = vpop.f32.mrb[0].mxu0
  %v1697 = vadd.f32 %v293, %v1696
  %v1698 = vpop.f32.mrb[0].mxu0
  %1699 = vmatprep.mubr.bf16.mxu0 0
  %1700 = vmatmul.mubr.bf16.gmra.mrb[0].mxu0 %v1075
  %v1701 = vpop.f32.mrb[0].mxu0
  %v1702 = vadd.f32 %v293, %v1701
  %v1703 = vpop.f32.mrb[0].mxu0
  %v1704 = vpop.f32.mrb[0].mxu0
  %v1705 = vadd.f32 %v293, %v1704
  %v1706 = vpop.f32.mrb[0].mxu0
  %1707 = vmatprep.mubr.bf16.mxu0 0
  %1708 = vmatmul.mubr.bf16.gmra.mrb[0].mxu0 %v1078
  %v1709 = vpop.f32.mrb[0].mxu0
  %v1710 = vadd.f32 %v293, %v1709
  %v1711 = vpop.f32.mrb[0].mxu0
  %v1712 = vpop.f32.mrb[0].mxu0
  %v1713 = vadd.f32 %v293, %v1712
  %v1714 = vpop.f32.mrb[0].mxu0
  %1715 = vmatprep.mubr.bf16.mxu0 0
  %1716 = vmatmul.mubr.bf16.gmra.mrb[0].mxu0 %v1081
  %v1717 = vpop.f32.mrb[0].mxu0
  %v1718 = vadd.f32 %v293, %v1717
  %v1719 = vpop.f32.mrb[0].mxu0
  %v1720 = vpop.f32.mrb[0].mxu0
  %v1721 = vadd.f32 %v293, %v1720
  %v1722 = vpop.f32.mrb[0].mxu0
  %1723 = vmatprep.mubr.bf16.mxu0 0
  %1724 = vmatmul.mubr.bf16.gmra.mrb[0].mxu0 %v1084
  %v1725 = vpop.f32.mrb[0].mxu0
  %v1726 = vadd.f32 %v293, %v1725
  %v1727 = vpop.f32.mrb[0].mxu0
  %v1728 = vpop.f32.mrb[0].mxu0
  %v1729 = vadd.f32 %v293, %v1728
  %v1730 = vpop.f32.mrb[0].mxu0
  %1731 = vmatprep.mubr.bf16.mxu0 0
  %1732 = vmatmul.mubr.bf16.gmra.mrb[0].mxu0 %v1087
  %v1733 = vpop.f32.mrb[0].mxu0
  %v1734 = vadd.f32 %v293, %v1733
  %v1735 = vpop.f32.mrb[0].mxu0
  %v1736 = vpop.f32.mrb[0].mxu0
  %v1737 = vadd.f32 %v293, %v1736
  %v1738 = vpop.f32.mrb[0].mxu0
  %1739 = vmatprep.mubr.bf16.mxu0 0
  %1740 = vmatmul.mubr.bf16.gmra.mrb[0].mxu0 %v1090
  %v1741 = vpop.f32.mrb[0].mxu0
  %v1742 = vadd.f32 %v293, %v1741
  %v1743 = vpop.f32.mrb[0].mxu0
  %v1744 = vpop.f32.mrb[0].mxu0
  %v1745 = vadd.f32 %v293, %v1744
  %v1746 = vpop.f32.mrb[0].mxu0
  %1747 = vmatprep.mubr.bf16.mxu0 0
  %1748 = vmatmul.mubr.bf16.gmra.mrb[0].mxu0 %v1093
  %v1749 = vpop.f32.mrb[0].mxu0
  %v1750 = vadd.f32 %v293, %v1749
  %v1751 = vpop.f32.mrb[0].mxu0
  %v1752 = vpop.f32.mrb[0].mxu0
  %v1753 = vadd.f32 %v293, %v1752
  %v1754 = vpop.f32.mrb[0].mxu0
  %1755 = vmatprep.mubr.bf16.mxu0 0
  %1756 = vmatmul.mubr.bf16.gmra.mrb[0].mxu0 %v1096
  %v1757 = vpop.f32.mrb[0].mxu0
  %v1758 = vadd.f32 %v293, %v1757
  %v1759 = vpop.f32.mrb[0].mxu0
  %v1760 = vpop.f32.mrb[0].mxu0
  %v1761 = vadd.f32 %v293, %v1760
  %v1762 = vpop.f32.mrb[0].mxu0
  %1763 = vmatprep.mubr.bf16.mxu0 0
  %1764 = vmatmul.mubr.bf16.gmra.mrb[0].mxu0 %v1099
  %v1765 = vpop.f32.mrb[0].mxu0
  %v1766 = vadd.f32 %v293, %v1765
  %v1767 = vpop.f32.mrb[0].mxu0
  %v1768 = vpop.f32.mrb[0].mxu0
  %v1769 = vadd.f32 %v293, %v1768
  %v1770 = vpop.f32.mrb[0].mxu0
  %1771 = vmatprep.mubr.bf16.mxu0 0
  %1772 = vmatmul.mubr.bf16.gmra.mrb[0].mxu0 %v1102
  %v1773 = vpop.f32.mrb[0].mxu0
  %v1774 = vadd.f32 %v293, %v1773
  %v1775 = vpop.f32.mrb[0].mxu0
  %v1776 = vpop.f32.mrb[0].mxu0
  %v1777 = vadd.f32 %v293, %v1776
  %v1778 = vpop.f32.mrb[0].mxu0
  %1779 = vmatprep.mubr.bf16.mxu0 0
  %1780 = vmatmul.mubr.bf16.gmra.mrb[0].mxu0 %v1105
  %v1781 = vpop.f32.mrb[0].mxu0
  %v1782 = vadd.f32 %v293, %v1781
  %v1783 = vpop.f32.mrb[0].mxu0
  %v1784 = vpop.f32.mrb[0].mxu0
  %v1785 = vadd.f32 %v293, %v1784
  %v1786 = vpop.f32.mrb[0].mxu0
  %1787 = vmatprep.mubr.bf16.mxu0 0
  %1788 = vmatmul.mubr.bf16.gmra.mrb[0].mxu0 %v1108
  %v1789 = vpop.f32.mrb[0].mxu0
  %v1790 = vadd.f32 %v293, %v1789
  %v1791 = vpop.f32.mrb[0].mxu0
  %v1792 = vpop.f32.mrb[0].mxu0
  %v1793 = vadd.f32 %v293, %v1792
  %v1794 = vpop.f32.mrb[0].mxu0
  %1795 = vmatprep.mubr.bf16.mxu0 0
  %1796 = vmatmul.mubr.bf16.gmra.mrb[0].mxu0 %v1111
  %v1797 = vpop.f32.mrb[0].mxu0
  %v1798 = vadd.f32 %v293, %v1797
  %v1799 = vpop.f32.mrb[0].mxu0
  %v1800 = vpop.f32.mrb[0].mxu0
  %v1801 = vadd.f32 %v293, %v1800
  %v1802 = vpop.f32.mrb[0].mxu0
  %1803 = vmatprep.mubr.bf16.mxu0 0
  %1804 = vmatmul.mubr.bf16.gmra.mrb[0].mxu0 %v1114
  %v1805 = vpop.f32.mrb[0].mxu0
  %v1806 = vadd.f32 %v293, %v1805
  %v1807 = vpop.f32.mrb[0].mxu0
  %v1808 = vpop.f32.mrb[0].mxu0
  %v1809 = vadd.f32 %v293, %v1808
  %v1810 = vpop.f32.mrb[0].mxu0
  %1811 = vmatprep.mubr.bf16.mxu0 0
  %1812 = vmatmul.mubr.bf16.gmra.mrb[0].mxu0 %v1117
  %v1813 = vpop.f32.mrb[0].mxu0
  %v1814 = vadd.f32 %v293, %v1813
  %v1815 = vpop.f32.mrb[0].mxu0
  %v1816 = vpop.f32.mrb[0].mxu0
  %v1817 = vadd.f32 %v293, %v1816
  %v1818 = vpop.f32.mrb[0].mxu0
  %1819 = vmatprep.mubr.bf16.mxu0 0
  %1820 = vmatmul.mubr.bf16.gmra.mrb[0].mxu0 %v1120
  %v1821 = vpop.f32.mrb[0].mxu0
  %v1822 = vadd.f32 %v293, %v1821
  %v1823 = vpop.f32.mrb[0].mxu0
  %v1824 = vpop.f32.mrb[0].mxu0
  %v1825 = vadd.f32 %v293, %v1824
  %v1826 = vpop.f32.mrb[0].mxu0
  %1827 = vmatprep.mubr.bf16.mxu0 0
  %1828 = vmatmul.mubr.bf16.gmra.mrb[0].mxu0 %v1123
  %v1829 = vpop.f32.mrb[0].mxu0
  %v1830 = vadd.f32 %v293, %v1829
  %v1831 = vpop.f32.mrb[0].mxu0
  %v1832 = vpop.f32.mrb[0].mxu0
  %v1833 = vadd.f32 %v293, %v1832
  %v1834 = vpop.f32.mrb[0].mxu0
  %1835 = vmatprep.mubr.bf16.mxu0 0
  %1836 = vmatmul.mubr.bf16.gmra.mrb[0].mxu0 %v1126
  %v1837 = vpop.f32.mrb[0].mxu0
  %v1838 = vadd.f32 %v293, %v1837
  %v1839 = vpop.f32.mrb[0].mxu0
  %v1840 = vpop.f32.mrb[0].mxu0
  %v1841 = vadd.f32 %v293, %v1840
  %v1842 = vpop.f32.mrb[0].mxu0
  %1843 = vmatprep.mubr.bf16.mxu0 0
  %1844 = vmatmul.mubr.bf16.gmra.mrb[0].mxu0 %v1129
  %v1845 = vpop.f32.mrb[0].mxu0
  %v1846 = vadd.f32 %v293, %v1845
  %v1847 = vpop.f32.mrb[0].mxu0
  %v1848 = vpop.f32.mrb[0].mxu0
  %v1849 = vadd.f32 %v293, %v1848
  %v1850 = vpop.f32.mrb[0].mxu0
  %1851 = vmatprep.mubr.bf16.mxu0 0
  %1852 = vmatmul.mubr.bf16.gmra.mrb[0].mxu0 %v1132
  %v1853 = vpop.f32.mrb[0].mxu0
  %v1854 = vadd.f32 %v293, %v1853
  %v1855 = vpop.f32.mrb[0].mxu0
  %v1856 = vpop.f32.mrb[0].mxu0
  %v1857 = vadd.f32 %v293, %v1856
  %v1858 = vpop.f32.mrb[0].mxu0
  %1859 = vmatprep.mubr.bf16.mxu0 0
  %1860 = vmatmul.mubr.bf16.gmra.mrb[0].mxu0 %v1135
  %v1861 = vpop.f32.mrb[0].mxu0
  %v1862 = vadd.f32 %v293, %v1861
  %v1863 = vpop.f32.mrb[0].mxu0
  %v1864 = vpop.f32.mrb[0].mxu0
  %v1865 = vadd.f32 %v293, %v1864
  %v1866 = vpop.f32.mrb[0].mxu0
  %1867 = vmatprep.mubr.bf16.mxu0 0
  %1868 = vmatmul.mubr.bf16.gmra.mrb[0].mxu0 %v1138
  %v1869 = vpop.f32.mrb[0].mxu0
  %v1870 = vadd.f32 %v293, %v1869
  %v1871 = vpop.f32.mrb[0].mxu0
  %v1872 = vpop.f32.mrb[0].mxu0
  %v1873 = vadd.f32 %v293, %v1872
  %v1874 = vpop.f32.mrb[0].mxu0
  %1875 = vmatprep.mubr.bf16.mxu0 0
  %1876 = vmatmul.mubr.bf16.gmra.mrb[0].mxu0 %v1141
  %v1877 = vpop.f32.mrb[0].mxu0
  %v1878 = vadd.f32 %v293, %v1877
  %v1879 = vpop.f32.mrb[0].mxu0
  %v1880 = vpop.f32.mrb[0].mxu0
  %v1881 = vadd.f32 %v293, %v1880
  %v1882 = vpop.f32.mrb[0].mxu0
  %1883 = vmatprep.mubr.bf16.mxu0 0
  %1884 = vmatmul.mubr.bf16.gmra.mrb[0].mxu0 %v1144
  %v1885 = vpop.f32.mrb[0].mxu0
  %v1886 = vadd.f32 %v293, %v1885
  %v1887 = vpop.f32.mrb[0].mxu0
  %v1888 = vpop.f32.mrb[0].mxu0
  %v1889 = vadd.f32 %v293, %v1888
  %v1890 = vpop.f32.mrb[0].mxu0
  %1891 = vmatprep.mubr.bf16.mxu0 0
  %1892 = vmatmul.mubr.bf16.gmra.mrb[0].mxu0 %v1147
  %v1893 = vpop.f32.mrb[0].mxu0
  %v1894 = vadd.f32 %v293, %v1893
  %v1895 = vpop.f32.mrb[0].mxu0
  %v1896 = vpop.f32.mrb[0].mxu0
  %v1897 = vadd.f32 %v293, %v1896
  %v1898 = vpop.f32.mrb[0].mxu0
  %1899 = vmatprep.mubr.bf16.mxu0 0
  %1900 = vmatmul.mubr.bf16.gmra.mrb[0].mxu0 %v1150
  %v1901 = vpop.f32.mrb[0].mxu0
  %v1902 = vadd.f32 %v293, %v1901
  %v1903 = vpop.f32.mrb[0].mxu0
  %v1904 = vpop.f32.mrb[0].mxu0
  %v1905 = vadd.f32 %v293, %v1904
  %v1906 = vpop.f32.mrb[0].mxu0
  %1907 = vmatprep.mubr.bf16.mxu0 0
  %1908 = vmatmul.mubr.bf16.gmra.mrb[0].mxu0 %v1153
  %v1909 = vpop.f32.mrb[0].mxu0
  %v1910 = vadd.f32 %v293, %v1909
  %v1911 = vpop.f32.mrb[0].mxu0
  %v1912 = vpop.f32.mrb[0].mxu0
  %v1913 = vadd.f32 %v293, %v1912
  %v1914 = vpop.f32.mrb[0].mxu0
  %1915 = vmatprep.mubr.bf16.mxu0 0
  %1916 = vmatmul.mubr.bf16.gmra.mrb[0].mxu0 %v1156
  %v1917 = vpop.f32.mrb[0].mxu0
  %v1918 = vadd.f32 %v293, %v1917
  %v1919 = vpop.f32.mrb[0].mxu0
  %v1920 = vpop.f32.mrb[0].mxu0
  %v1921 = vadd.f32 %v293, %v1920
  %v1922 = vpop.f32.mrb[0].mxu0
  %1923 = vmatprep.mubr.bf16.mxu0 0
  %1924 = vmatmul.mubr.bf16.gmra.mrb[0].mxu0 %v1159
  %v1925 = vpop.f32.mrb[0].mxu0
  %v1926 = vadd.f32 %v293, %v1925
  %v1927 = vpop.f32.mrb[0].mxu0
  %v1928 = vpop.f32.mrb[0].mxu0
  %v1929 = vadd.f32 %v293, %v1928
  %v1930 = vpop.f32.mrb[0].mxu0
  %1931 = vmatprep.mubr.bf16.mxu0 0
  %1932 = vmatmul.mubr.bf16.gmra.mrb[0].mxu0 %v1162
  %v1933 = vpop.f32.mrb[0].mxu0
  %v1934 = vadd.f32 %v293, %v1933
  %v1935 = vpop.f32.mrb[0].mxu0
  %v1936 = vpop.f32.mrb[0].mxu0
  %v1937 = vadd.f32 %v293, %v1936
  %v1938 = vpop.f32.mrb[0].mxu0
  %1939 = vmatprep.mubr.bf16.mxu0 0
  %1940 = vmatmul.mubr.bf16.gmra.mrb[0].mxu0 %v1165
  %v1941 = vpop.f32.mrb[0].mxu0
  %v1942 = vadd.f32 %v293, %v1941
  %v1943 = vpop.f32.mrb[0].mxu0
  %v1944 = vpop.f32.mrb[0].mxu0
  %v1945 = vadd.f32 %v293, %v1944
  %v1946 = vpop.f32.mrb[0].mxu0
  %1947 = vmatprep.mubr.bf16.mxu0 0
  %1948 = vmatmul.mubr.bf16.gmra.mrb[0].mxu0 %v1168
  %v1949 = vpop.f32.mrb[0].mxu0
  %v1950 = vadd.f32 %v293, %v1949
  %v1951 = vpop.f32.mrb[0].mxu0
  %v1952 = vpop.f32.mrb[0].mxu0
  %v1953 = vadd.f32 %v293, %v1952
  %v1954 = vpop.f32.mrb[0].mxu0
  %1955 = vmatprep.mubr.bf16.mxu0 0
  %1956 = vmatmul.mubr.bf16.gmra.mrb[0].mxu0 %v1171
  %v1957 = vpop.f32.mrb[0].mxu0
  %v1958 = vadd.f32 %v293, %v1957
  %v1959 = vpop.f32.mrb[0].mxu0
  %v1960 = vpop.f32.mrb[0].mxu0
  %v1961 = vadd.f32 %v293, %v1960
  %v1962 = vpop.f32.mrb[0].mxu0
  %1963 = vmatprep.mubr.bf16.mxu0 0
  %1964 = vmatmul.mubr.bf16.gmra.mrb[0].mxu0 %v1174
  %v1965 = vpop.f32.mrb[0].mxu0
  %v1966 = vadd.f32 %v293, %v1965
  %v1967 = vpop.f32.mrb[0].mxu0
  %v1968 = vpop.f32.mrb[0].mxu0
  %v1969 = vadd.f32 %v293, %v1968
  %v1970 = vpop.f32.mrb[0].mxu0
  %1971 = vmatprep.mubr.bf16.mxu0 0
  %1972 = vmatmul.mubr.bf16.gmra.mrb[0].mxu0 %v1177
  %v1973 = vpop.f32.mrb[0].mxu0
  %v1974 = vadd.f32 %v293, %v1973
  %v1975 = vpop.f32.mrb[0].mxu0
  %v1976 = vpop.f32.mrb[0].mxu0
  %v1977 = vadd.f32 %v293, %v1976
  %v1978 = vpop.f32.mrb[0].mxu0
  %1979 = vmatprep.mubr.bf16.mxu0 0
  %1980 = vmatmul.mubr.bf16.gmra.mrb[0].mxu0 %v1180
  %v1981 = vpop.f32.mrb[0].mxu0
  %v1982 = vadd.f32 %v293, %v1981
  %v1983 = vpop.f32.mrb[0].mxu0
  %v1984 = vpop.f32.mrb[0].mxu0
  %v1985 = vadd.f32 %v293, %v1984
  %v1986 = vpop.f32.mrb[0].mxu0
  %1987 = vmatprep.mubr.bf16.mxu0 0
  %1988 = vmatmul.mubr.bf16.gmra.mrb[0].mxu0 %v1183
  %v1989 = vpop.f32.mrb[0].mxu0
  %v1990 = vadd.f32 %v293, %v1989
  %v1991 = vpop.f32.mrb[0].mxu0
  %v1992 = vpop.f32.mrb[0].mxu0
  %v1993 = vadd.f32 %v293, %v1992
  %v1994 = vpop.f32.mrb[0].mxu0
  %1995 = vmatprep.mubr.bf16.mxu0 0
  %1996 = vmatmul.mubr.bf16.gmra.mrb[0].mxu0 %v1186
  %v1997 = vpop.f32.mrb[0].mxu0
  %v1998 = vadd.f32 %v293, %v1997
  %v1999 = vpop.f32.mrb[0].mxu0
  %v2000 = vpop.f32.mrb[0].mxu0
  %v2001 = vadd.f32 %v293, %v2000
  %v2002 = vpop.f32.mrb[0].mxu0
  %2003 = vmatprep.mubr.bf16.mxu0 0
  %2004 = vmatmul.mubr.bf16.gmra.mrb[0].mxu0 %v1189
  %v2005 = vpop.f32.mrb[0].mxu0
  %v2006 = vadd.f32 %v293, %v2005
  %v2007 = vpop.f32.mrb[0].mxu0
  %v2008 = vpop.f32.mrb[0].mxu0
  %v2009 = vadd.f32 %v293, %v2008
  %v2010 = vpop.f32.mrb[0].mxu0
  %2011 = vmatprep.mubr.bf16.mxu0 0
  %2012 = vmatmul.mubr.bf16.gmra.mrb[0].mxu0 %v1192
  %v2013 = vpop.f32.mrb[0].mxu0
  %v2014 = vadd.f32 %v293, %v2013
  %v2015 = vpop.f32.mrb[0].mxu0
  %v2016 = vpop.f32.mrb[0].mxu0
  %v2017 = vadd.f32 %v293, %v2016
  %v2018 = vpop.f32.mrb[0].mxu0
  %2019 = vmatprep.mubr.bf16.mxu0 0
  %2020 = vmatmul.mubr.bf16.gmra.mrb[0].mxu0 %v1195
  %v2021 = vpop.f32.mrb[0].mxu0
  %v2022 = vadd.f32 %v293, %v2021
  %v2023 = vpop.f32.mrb[0].mxu0
  %v2024 = vpop.f32.mrb[0].mxu0
  %v2025 = vadd.f32 %v293, %v2024
  %v2026 = vpop.f32.mrb[0].mxu0
  %2027 = vmatprep.mubr.bf16.mxu0 0
  %2028 = vmatmul.mubr.bf16.gmra.mrb[0].mxu0 %v1198
  %v2029 = vpop.f32.mrb[0].mxu0
  %v2030 = vadd.f32 %v293, %v2029
  %v2031 = vpop.f32.mrb[0].mxu0
  %v2032 = vpop.f32.mrb[0].mxu0
  %v2033 = vadd.f32 %v293, %v2032
  %v2034 = vpop.f32.mrb[0].mxu0
  %2035 = vmatprep.mubr.bf16.mxu0 0
  %2036 = vmatmul.mubr.bf16.gmra.mrb[0].mxu0 %v1201
  %v2037 = vpop.f32.mrb[0].mxu0
  %v2038 = vadd.f32 %v293, %v2037
  %v2039 = vpop.f32.mrb[0].mxu0
  %v2040 = vpop.f32.mrb[0].mxu0
  %v2041 = vadd.f32 %v293, %v2040
  %v2042 = vpop.f32.mrb[0].mxu0
  %2043 = vmatprep.mubr.bf16.mxu0 0
  %2044 = vmatmul.mubr.bf16.gmra.mrb[0].mxu0 %v1204
  %v2045 = vpop.f32.mrb[0].mxu0
  %v2046 = vadd.f32 %v293, %v2045
  %v2047 = vpop.f32.mrb[0].mxu0
  %v2048 = vpop.f32.mrb[0].mxu0
  %v2049 = vadd.f32 %v293, %v2048
  %v2050 = vpop.f32.mrb[0].mxu0
  %2051 = vmatprep.mubr.bf16.mxu0 0
  %2052 = vmatmul.mubr.bf16.gmra.mrb[0].mxu0 %v1207
  %v2053 = vpop.f32.mrb[0].mxu0
  %v2054 = vadd.f32 %v293, %v2053
  %v2055 = vpop.f32.mrb[0].mxu0
  %v2056 = vpop.f32.mrb[0].mxu0
  %v2057 = vadd.f32 %v293, %v2056
  %v2058 = vpop.f32.mrb[0].mxu0
  %2059 = vmatprep.mubr.bf16.mxu0 0
  %2060 = vmatmul.mubr.bf16.gmra.mrb[0].mxu0 %v1210
  %v2061 = vpop.f32.mrb[0].mxu0
  %v2062 = vadd.f32 %v293, %v2061
  %v2063 = vpop.f32.mrb[0].mxu0
  %v2064 = vpop.f32.mrb[0].mxu0
  %v2065 = vadd.f32 %v293, %v2064
  %v2066 = vpop.f32.mrb[0].mxu0
  %2067 = vmatprep.mubr.bf16.mxu0 0
  %2068 = vmatmul.mubr.bf16.gmra.mrb[0].mxu0 %v1213
  %v2069 = vpop.f32.mrb[0].mxu0
  %v2070 = vadd.f32 %v293, %v2069
  %v2071 = vpop.f32.mrb[0].mxu0
  %v2072 = vpop.f32.mrb[0].mxu0
  %v2073 = vadd.f32 %v293, %v2072
  %v2074 = vpop.f32.mrb[0].mxu0
  %2075 = vmatprep.mubr.bf16.mxu0 0
  %2076 = vmatmul.mubr.bf16.gmra.mrb[0].mxu0 %v1216
  %v2077 = vpop.f32.mrb[0].mxu0
  %v2078 = vadd.f32 %v293, %v2077
  %v2079 = vpop.f32.mrb[0].mxu0
  %v2080 = vpop.f32.mrb[0].mxu0
  %v2081 = vadd.f32 %v293, %v2080
  %v2082 = vpop.f32.mrb[0].mxu0
  %2083 = vmatprep.mubr.bf16.mxu0 0
  %2084 = vmatmul.mubr.bf16.gmra.mrb[0].mxu0 %v1219
  %v2085 = vpop.f32.mrb[0].mxu0
  %v2086 = vadd.f32 %v293, %v2085
  %v2087 = vpop.f32.mrb[0].mxu0
  %v2088 = vpop.f32.mrb[0].mxu0
  %v2089 = vadd.f32 %v293, %v2088
  %v2090 = vpop.f32.mrb[0].mxu0
  %2091 = vmatprep.mubr.bf16.mxu0 0
  %2092 = vmatmul.mubr.bf16.gmra.mrb[0].mxu0 %v1222
  %v2093 = vpop.f32.mrb[0].mxu0
  %v2094 = vadd.f32 %v293, %v2093
  %v2095 = vpop.f32.mrb[0].mxu0
  %v2096 = vpop.f32.mrb[0].mxu0
  %v2097 = vadd.f32 %v293, %v2096
  %v2098 = vpop.f32.mrb[0].mxu0
  %2099 = vmatprep.mubr.bf16.mxu0 0
  %2100 = vmatmul.mubr.bf16.gmra.mrb[0].mxu0 %v1225
  %v2101 = vpop.f32.mrb[0].mxu0
  %v2102 = vadd.f32 %v293, %v2101
  %v2103 = vpop.f32.mrb[0].mxu0
  %v2104 = vpop.f32.mrb[0].mxu0
  %v2105 = vadd.f32 %v293, %v2104
  %v2106 = vpop.f32.mrb[0].mxu0
  %2107 = vmatprep.mubr.bf16.mxu0 0
  %2108 = vmatmul.mubr.bf16.gmra.mrb[0].mxu0 %v1228
  %v2109 = vpop.f32.mrb[0].mxu0
  %v2110 = vadd.f32 %v293, %v2109
  %v2111 = vpop.f32.mrb[0].mxu0
  %v2112 = vpop.f32.mrb[0].mxu0
  %v2113 = vadd.f32 %v293, %v2112
  %v2114 = vpop.f32.mrb[0].mxu0
  %2115 = vmatprep.mubr.bf16.mxu0 0
  %2116 = vmatmul.mubr.bf16.gmra.mrb[0].mxu0 %v1231
  %v2117 = vpop.f32.mrb[0].mxu0
  %v2118 = vadd.f32 %v293, %v2117
  %v2119 = vpop.f32.mrb[0].mxu0
  %v2120 = vpop.f32.mrb[0].mxu0
  %v2121 = vadd.f32 %v293, %v2120
  %v2122 = vpop.f32.mrb[0].mxu0
  %2123 = vmatprep.mubr.bf16.mxu0 0
  %2124 = vmatmul.mubr.bf16.gmra.mrb[0].mxu0 %v1234
  %v2125 = vpop.f32.mrb[0].mxu0
  %v2126 = vadd.f32 %v293, %v2125
  %v2127 = vpop.f32.mrb[0].mxu0
  %v2128 = vpop.f32.mrb[0].mxu0
  %v2129 = vadd.f32 %v293, %v2128
  %v2130 = vpop.f32.mrb[0].mxu0
  %2131 = vmatprep.mubr.bf16.mxu0 0
  %2132 = vmatmul.mubr.bf16.gmra.mrb[0].mxu0 %v1237
  %v2133 = vpop.f32.mrb[0].mxu0
  %v2134 = vadd.f32 %v293, %v2133
  %v2135 = vpop.f32.mrb[0].mxu0
  %v2136 = vpop.f32.mrb[0].mxu0
  %v2137 = vadd.f32 %v293, %v2136
  %v2138 = vpop.f32.mrb[0].mxu0
  %2139 = vmatprep.mubr.bf16.mxu0 0
  %2140 = vmatmul.mubr.bf16.gmra.mrb[0].mxu0 %v1240
  %v2141 = vpop.f32.mrb[0].mxu0
  %v2142 = vadd.f32 %v293, %v2141
  %v2143 = vpop.f32.mrb[0].mxu0
  %v2144 = vpop.f32.mrb[0].mxu0
  %v2145 = vadd.f32 %v293, %v2144
  %v2146 = vpop.f32.mrb[0].mxu0
  %2147 = vmatprep.mubr.bf16.mxu0 0
  %2148 = vmatmul.mubr.bf16.gmra.mrb[0].mxu0 %v1243
  %v2149 = vpop.f32.mrb[0].mxu0
  %v2150 = vadd.f32 %v293, %v2149
  %v2151 = vpop.f32.mrb[0].mxu0
  %v2152 = vpop.f32.mrb[0].mxu0
  %v2153 = vadd.f32 %v293, %v2152
  %v2154 = vpop.f32.mrb[0].mxu0
  %2155 = vmatprep.mubr.bf16.mxu0 0
  %2156 = vmatmul.mubr.bf16.gmra.mrb[0].mxu0 %v1246
  %v2157 = vpop.f32.mrb[0].mxu0
  %v2158 = vadd.f32 %v293, %v2157
  %v2159 = vpop.f32.mrb[0].mxu0
  %v2160 = vpop.f32.mrb[0].mxu0
  %v2161 = vadd.f32 %v293, %v2160
  %v2162 = vpop.f32.mrb[0].mxu0
  %2163 = vmatprep.mubr.bf16.mxu0 0
  %2164 = vmatmul.mubr.bf16.gmra.mrb[0].mxu0 %v1249
  %v2165 = vpop.f32.mrb[0].mxu0
  %v2166 = vadd.f32 %v293, %v2165
  %v2167 = vpop.f32.mrb[0].mxu0
  %v2168 = vpop.f32.mrb[0].mxu0
  %v2169 = vadd.f32 %v293, %v2168
  %v2170 = vpop.f32.mrb[0].mxu0
  %2171 = vmatprep.mubr.bf16.mxu0 0
  %2172 = vmatmul.mubr.bf16.gmra.mrb[0].mxu0 %v1252
  %v2173 = vpop.f32.mrb[0].mxu0
  %v2174 = vadd.f32 %v293, %v2173
  %v2175 = vpop.f32.mrb[0].mxu0
  %v2176 = vpop.f32.mrb[0].mxu0
  %v2177 = vadd.f32 %v293, %v2176
  %v2178 = vpop.f32.mrb[0].mxu0
  %2179 = vmatprep.mubr.bf16.mxu0 0
  %2180 = vmatmul.mubr.bf16.gmra.mrb[0].mxu0 %v1255
  %v2181 = vpop.f32.mrb[0].mxu0
  %v2182 = vadd.f32 %v293, %v2181
  %v2183 = vpop.f32.mrb[0].mxu0
  %v2184 = vpop.f32.mrb[0].mxu0
  %v2185 = vadd.f32 %v293, %v2184
  %v2186 = vpop.f32.mrb[0].mxu0
  %2187 = vmatprep.mubr.bf16.mxu0 0
  %2188 = vmatmul.mubr.bf16.gmra.mrb[0].mxu0 %v1258
  %v2189 = vpop.f32.mrb[0].mxu0
  %v2190 = vadd.f32 %v293, %v2189
  %v2191 = vpop.f32.mrb[0].mxu0
  %v2192 = vpop.f32.mrb[0].mxu0
  %v2193 = vadd.f32 %v293, %v2192
  %v2194 = vpop.f32.mrb[0].mxu0
  %2195 = vmatprep.mubr.bf16.mxu0 0
  %2196 = vmatmul.mubr.bf16.gmra.mrb[0].mxu0 %v1261
  %v2197 = vpop.f32.mrb[0].mxu0
  %v2198 = vadd.f32 %v293, %v2197
  %v2199 = vpop.f32.mrb[0].mxu0
  %v2200 = vpop.f32.mrb[0].mxu0
  %v2201 = vadd.f32 %v293, %v2200
  %v2202 = vpop.f32.mrb[0].mxu0
  %2203 = vmatprep.mubr.bf16.mxu0 0
  %2204 = vmatmul.mubr.bf16.gmra.mrb[0].mxu0 %v1264
  %v2205 = vpop.f32.mrb[0].mxu0
  %v2206 = vadd.f32 %v293, %v2205
  %v2207 = vpop.f32.mrb[0].mxu0
  %v2208 = vpop.f32.mrb[0].mxu0
  %v2209 = vadd.f32 %v293, %v2208
  %v2210 = vpop.f32.mrb[0].mxu0
  %2211 = vmatprep.mubr.bf16.mxu0 0
  %2212 = vmatmul.mubr.bf16.gmra.mrb[0].mxu0 %v1267
  %v2213 = vpop.f32.mrb[0].mxu0
  %v2214 = vadd.f32 %v293, %v2213
  %v2215 = vpop.f32.mrb[0].mxu0
  %v2216 = vpop.f32.mrb[0].mxu0
  %v2217 = vadd.f32 %v293, %v2216
  %v2218 = vpop.f32.mrb[0].mxu0
  %2219 = vmatprep.mubr.bf16.mxu0 0
  %2220 = vmatmul.mubr.bf16.gmra.mrb[0].mxu0 %v1270
  %v2221 = vpop.f32.mrb[0].mxu0
  %v2222 = vadd.f32 %v293, %v2221
  %v2223 = vpop.f32.mrb[0].mxu0
  %v2224 = vpop.f32.mrb[0].mxu0
  %v2225 = vadd.f32 %v293, %v2224
  %v2226 = vpop.f32.mrb[0].mxu0
  %2227 = vmatprep.mubr.bf16.mxu0 0
  %2228 = vmatmul.mubr.bf16.gmra.mrb[0].mxu0 %v1273
  %v2229 = vpop.f32.mrb[0].mxu0
  %v2230 = vadd.f32 %v293, %v2229
  %v2231 = vpop.f32.mrb[0].mxu0
  %v2232 = vpop.f32.mrb[0].mxu0
  %v2233 = vadd.f32 %v293, %v2232
  %v2234 = vpop.f32.mrb[0].mxu0
  %2235 = vmatprep.mubr.bf16.mxu0 0
  %2236 = vmatmul.mubr.bf16.gmra.mrb[0].mxu0 %v1276
  %v2237 = vpop.f32.mrb[0].mxu0
  %v2238 = vadd.f32 %v293, %v2237
  %v2239 = vpop.f32.mrb[0].mxu0
  %v2240 = vpop.f32.mrb[0].mxu0
  %v2241 = vadd.f32 %v293, %v2240
  %v2242 = vpop.f32.mrb[0].mxu0
  %2243 = vmatprep.mubr.bf16.mxu0 0
  %2244 = vmatmul.mubr.bf16.gmra.mrb[0].mxu0 %v1279
  %v2245 = vpop.f32.mrb[0].mxu0
  %v2246 = vadd.f32 %v293, %v2245
  %v2247 = vpop.f32.mrb[0].mxu0
  %v2248 = vpop.f32.mrb[0].mxu0
  %v2249 = vadd.f32 %v293, %v2248
  %v2250 = vpop.f32.mrb[0].mxu0
  %2251 = vmatprep.mubr.bf16.mxu0 0
  %2252 = vmatmul.mubr.bf16.gmra.mrb[0].mxu0 %v1282
  %v2253 = vpop.f32.mrb[0].mxu0
  %v2254 = vadd.f32 %v293, %v2253
  %v2255 = vpop.f32.mrb[0].mxu0
  %v2256 = vpop.f32.mrb[0].mxu0
  %v2257 = vadd.f32 %v293, %v2256
  %v2258 = vpop.f32.mrb[0].mxu0
  %2259 = vmatprep.mubr.bf16.mxu0 0
  %2260 = vmatmul.mubr.bf16.gmra.mrb[0].mxu0 %v1285
  %v2261 = vpop.f32.mrb[0].mxu0
  %v2262 = vadd.f32 %v293, %v2261
  %v2263 = vpop.f32.mrb[0].mxu0
  %v2264 = vpop.f32.mrb[0].mxu0
  %v2265 = vadd.f32 %v293, %v2264
  %v2266 = vpop.f32.mrb[0].mxu0
  %2267 = vmatprep.mubr.bf16.mxu0 0
  %2268 = vmatmul.mubr.bf16.gmra.mrb[0].mxu0 %v1288
  %v2269 = vpop.f32.mrb[0].mxu0
  %v2270 = vadd.f32 %v293, %v2269
  %v2271 = vpop.f32.mrb[0].mxu0
  %v2272 = vpop.f32.mrb[0].mxu0
  %v2273 = vadd.f32 %v293, %v2272
  %v2274 = vpop.f32.mrb[0].mxu0
  %2275 = vmatprep.mubr.bf16.mxu0 0
  %2276 = vmatmul.mubr.bf16.gmra.mrb[0].mxu0 %v1291
  %v2277 = vpop.f32.mrb[0].mxu0
  %v2278 = vadd.f32 %v293, %v2277
  %v2279 = vpop.f32.mrb[0].mxu0
  %v2280 = vpop.f32.mrb[0].mxu0
  %v2281 = vadd.f32 %v293, %v2280
  %v2282 = vpop.f32.mrb[0].mxu0
  %2283 = vmatprep.mubr.bf16.mxu0 0
  %2284 = vmatmul.mubr.bf16.gmra.mrb[0].mxu0 %v1294
  %v2285 = vpop.f32.mrb[0].mxu0
  %v2286 = vadd.f32 %v293, %v2285
  %v2287 = vpop.f32.mrb[0].mxu0
  %v2288 = vpop.f32.mrb[0].mxu0
  %v2289 = vadd.f32 %v293, %v2288
  %v2290 = vpop.f32.mrb[0].mxu0
  %2291 = vmatprep.mubr.bf16.mxu0 0
  %2292 = vmatmul.mubr.bf16.gmra.mrb[0].mxu0 %v1297
  %v2293 = vpop.f32.mrb[0].mxu0
  %v2294 = vadd.f32 %v293, %v2293
  %v2295 = vpop.f32.mrb[0].mxu0
  %v2296 = vpop.f32.mrb[0].mxu0
  %v2297 = vadd.f32 %v293, %v2296
  %v2298 = vpop.f32.mrb[0].mxu0
  %2299 = vmatprep.mubr.bf16.mxu0 0
  %2300 = vmatmul.mubr.bf16.gmra.mrb[0].mxu0 %v1300
  %v2301 = vpop.f32.mrb[0].mxu0
  %v2302 = vadd.f32 %v293, %v2301
  %v2303 = vpop.f32.mrb[0].mxu0
  %v2304 = vpop.f32.mrb[0].mxu0
  %v2305 = vadd.f32 %v293, %v2304
  %v2306 = vpop.f32.mrb[0].mxu0
  %2307 = vmatprep.mubr.bf16.mxu0 0
  %2308 = vmatmul.mubr.bf16.gmra.mrb[0].mxu0 %v1303
  %v2309 = vpop.f32.mrb[0].mxu0
  %v2310 = vadd.f32 %v293, %v2309
  %v2311 = vpop.f32.mrb[0].mxu0
  %v2312 = vpop.f32.mrb[0].mxu0
  %v2313 = vadd.f32 %v293, %v2312
  %v2314 = vpop.f32.mrb[0].mxu0
  %2315 = vmatprep.mubr.bf16.mxu0 0
  %2316 = vmatmul.mubr.bf16.gmra.mrb[0].mxu0 %v1306
  %v2317 = vpop.f32.mrb[0].mxu0
  %v2318 = vadd.f32 %v293, %v2317
  %v2319 = vpop.f32.mrb[0].mxu0
  %v2320 = vpop.f32.mrb[0].mxu0
  %v2321 = vadd.f32 %v293, %v2320
  %v2322 = vpop.f32.mrb[0].mxu0
  %2323 = vmatprep.mubr.bf16.mxu0 0
  %2324 = vmatmul.mubr.bf16.gmra.mrb[0].mxu0 %v1309
  %v2325 = vpop.f32.mrb[0].mxu0
  %v2326 = vadd.f32 %v293, %v2325
  %v2327 = vpop.f32.mrb[0].mxu0
  %v2328 = vpop.f32.mrb[0].mxu0
  %v2329 = vadd.f32 %v293, %v2328
  %v2330 = vpop.f32.mrb[0].mxu0
  %2331 = vmatprep.mubr.bf16.mxu0 0
  %2332 = vmatmul.mubr.bf16.gmra.mrb[0].mxu0 %v1312
  %v2333 = vpop.f32.mrb[0].mxu0
  %v2334 = vadd.f32 %v293, %v2333
  %v2335 = vpop.f32.mrb[0].mxu0
  %v2336 = vpop.f32.mrb[0].mxu0
  %v2337 = vadd.f32 %v293, %v2336
  %v2338 = vpop.f32.mrb[0].mxu0
  %2339 = vmatprep.mubr.bf16.mxu0 0
  %2340 = vmatmul.mubr.bf16.gmra.mrb[0].mxu0 %v1315
  %v2341 = vpop.f32.mrb[0].mxu0
  %v2342 = vadd.f32 %v293, %v2341
  %v2343 = vpop.f32.mrb[0].mxu0
  %v2344 = vpop.f32.mrb[0].mxu0
  %v2345 = vadd.f32 %v293, %v2344
  %v2346 = vpop.f32.mrb[0].mxu0
  %2347 = vmatprep.mubr.bf16.mxu0 0
  %2348 = vmatmul.mubr.bf16.gmra.mrb[0].mxu0 %v1318
  %v2349 = vpop.f32.mrb[0].mxu0
  %v2350 = vadd.f32 %v293, %v2349
  %v2351 = vpop.f32.mrb[0].mxu0
  %v2352 = vpop.f32.mrb[0].mxu0
  %v2353 = vadd.f32 %v293, %v2352
  %v2354 = vpop.f32.mrb[0].mxu0
  %2355 = vmatprep.mubr.bf16.mxu0 0
  %2356 = vmatmul.mubr.bf16.gmra.mrb[0].mxu0 %v1321
  %v2357 = vpop.f32.mrb[0].mxu0
  %v2358 = vadd.f32 %v293, %v2357
  %v2359 = vpop.f32.mrb[0].mxu0
  %v2360 = vpop.f32.mrb[0].mxu0
  %v2361 = vadd.f32 %v293, %v2360
  %v2362 = vpop.f32.mrb[0].mxu0
  %2363 = vmatprep.mubr.bf16.mxu0 0
  %2364 = vmatmul.mubr.bf16.gmra.mrb[0].mxu0 %v1324
  %v2365 = vpop.f32.mrb[0].mxu0
  %v2366 = vadd.f32 %v293, %v2365
  %v2367 = vpop.f32.mrb[0].mxu0
  %v2368 = vpop.f32.mrb[0].mxu0
  %v2369 = vadd.f32 %v293, %v2368
  %v2370 = vpop.f32.mrb[0].mxu0
  %2371 = vmatprep.mubr.bf16.mxu0 0
  %2372 = vmatmul.mubr.bf16.gmra.mrb[0].mxu0 %v1327
  %v2373 = vpop.f32.mrb[0].mxu0
  %v2374 = vadd.f32 %v293, %v2373
  %v2375 = vpop.f32.mrb[0].mxu0
  %v2376 = vpop.f32.mrb[0].mxu0
  %v2377 = vadd.f32 %v293, %v2376
  %v2378 = vpop.f32.mrb[0].mxu0
  %2379 = vmatprep.mubr.bf16.mxu0 0
  %2380 = vmatmul.mubr.bf16.gmra.mrb[0].mxu0 %v1330
  %v2381 = vpop.f32.mrb[0].mxu0
  %v2382 = vadd.f32 %v293, %v2381
  %v2383 = vpop.f32.mrb[0].mxu0
  %v2384 = vpop.f32.mrb[0].mxu0
  %v2385 = vadd.f32 %v293, %v2384
  %v2386 = vpop.f32.mrb[0].mxu0
  %2387 = vmatprep.mubr.bf16.mxu0 0
  %2388 = vmatmul.mubr.bf16.gmra.mrb[0].mxu0 %v1333
  %v2389 = vpop.f32.mrb[0].mxu0
  %v2390 = vadd.f32 %v293, %v2389
  %v2391 = vpop.f32.mrb[0].mxu0
  %v2392 = vpop.f32.mrb[0].mxu0
  %v2393 = vadd.f32 %v293, %v2392
  %v2394 = vpop.f32.mrb[0].mxu0
  %2395 = vdwg.mxu0
  %v2396 = vmax.f32 %v1374, 0.0
  %v2397 = vmax.f32 %v1377, 0.0
  %v2398 = vmax.f32 %v1382, 0.0
  %v2399 = vmax.f32 %v1385, 0.0
  %v2400 = vmax.f32 %v1390, 0.0
  %v2401 = vmax.f32 %v1393, 0.0
  %v2402 = vmax.f32 %v1398, 0.0
  %v2403 = vmax.f32 %v1401, 0.0
  %v2404 = vmax.f32 %v1406, 0.0
  %v2405 = vmax.f32 %v1409, 0.0
  %v2406 = vmax.f32 %v1414, 0.0
  %v2407 = vmax.f32 %v1417, 0.0
  %v2408 = vmax.f32 %v1422, 0.0
  %v2409 = vmax.f32 %v1425, 0.0
  %v2410 = vmax.f32 %v1430, 0.0
  %v2411 = vmax.f32 %v1433, 0.0
  %v2412 = vmax.f32 %v1438, 0.0
  %v2413 = vmax.f32 %v1441, 0.0
  %v2414 = vmax.f32 %v1446, 0.0
  %v2415 = vmax.f32 %v1449, 0.0
  %v2416 = vmax.f32 %v1454, 0.0
  %v2417 = vmax.f32 %v1457, 0.0
  %v2418 = vmax.f32 %v1462, 0.0
  %v2419 = vmax.f32 %v1465, 0.0
  %v2420 = vmax.f32 %v1470, 0.0
  %v2421 = vmax.f32 %v1473, 0.0
  %v2422 = vmax.f32 %v1478, 0.0
  %v2423 = vmax.f32 %v1481, 0.0
  %v2424 = vmax.f32 %v1486, 0.0
  %v2425 = vmax.f32 %v1489, 0.0
  %v2426 = vmax.f32 %v1494, 0.0
  %v2427 = vmax.f32 %v1497, 0.0
  %v2428 = vmax.f32 %v1502, 0.0
  %v2429 = vmax.f32 %v1505, 0.0
  %v2430 = vmax.f32 %v1510, 0.0
  %v2431 = vmax.f32 %v1513, 0.0
  %v2432 = vmax.f32 %v1518, 0.0
  %v2433 = vmax.f32 %v1521, 0.0
  %v2434 = vmax.f32 %v1526, 0.0
  %v2435 = vmax.f32 %v1529, 0.0
  %v2436 = vmax.f32 %v1534, 0.0
  %v2437 = vmax.f32 %v1537, 0.0
  %v2438 = vmax.f32 %v1542, 0.0
  %v2439 = vmax.f32 %v1545, 0.0
  %v2440 = vmax.f32 %v1550, 0.0
  %v2441 = vmax.f32 %v1553, 0.0
  %v2442 = vmax.f32 %v1558, 0.0
  %v2443 = vmax.f32 %v1561, 0.0
  %v2444 = vmax.f32 %v1566, 0.0
  %v2445 = vmax.f32 %v1569, 0.0
  %v2446 = vmax.f32 %v1574, 0.0
  %v2447 = vmax.f32 %v1577, 0.0
  %v2448 = vmax.f32 %v1582, 0.0
  %v2449 = vmax.f32 %v1585, 0.0
  %v2450 = vmax.f32 %v1590, 0.0
  %v2451 = vmax.f32 %v1593, 0.0
  %v2452 = vmax.f32 %v1598, 0.0
  %v2453 = vmax.f32 %v1601, 0.0
  %v2454 = vmax.f32 %v1606, 0.0
  %v2455 = vmax.f32 %v1609, 0.0
  %v2456 = vmax.f32 %v1614, 0.0
  %v2457 = vmax.f32 %v1617, 0.0
  %v2458 = vmax.f32 %v1622, 0.0
  %v2459 = vmax.f32 %v1625, 0.0
  %v2460 = vmax.f32 %v1630, 0.0
  %v2461 = vmax.f32 %v1633, 0.0
  %v2462 = vmax.f32 %v1638, 0.0
  %v2463 = vmax.f32 %v1641, 0.0
  %v2464 = vmax.f32 %v1646, 0.0
  %v2465 = vmax.f32 %v1649, 0.0
  %v2466 = vmax.f32 %v1654, 0.0
  %v2467 = vmax.f32 %v1657, 0.0
  %v2468 = vmax.f32 %v1662, 0.0
  %v2469 = vmax.f32 %v1665, 0.0
  %v2470 = vmax.f32 %v1670, 0.0
  %v2471 = vmax.f32 %v1673, 0.0
  %v2472 = vmax.f32 %v1678, 0.0
  %v2473 = vmax.f32 %v1681, 0.0
  %v2474 = vmax.f32 %v1686, 0.0
  %v2475 = vmax.f32 %v1689, 0.0
  %v2476 = vmax.f32 %v1694, 0.0
  %v2477 = vmax.f32 %v1697, 0.0
  %v2478 = vmax.f32 %v1702, 0.0
  %v2479 = vmax.f32 %v1705, 0.0
  %v2480 = vmax.f32 %v1710, 0.0
  %v2481 = vmax.f32 %v1713, 0.0
  %v2482 = vmax.f32 %v1718, 0.0
  %v2483 = vmax.f32 %v1721, 0.0
  %v2484 = vmax.f32 %v1726, 0.0
  %v2485 = vmax.f32 %v1729, 0.0
  %v2486 = vmax.f32 %v1734, 0.0
  %v2487 = vmax.f32 %v1737, 0.0
  %v2488 = vmax.f32 %v1742, 0.0
  %v2489 = vmax.f32 %v1745, 0.0
  %v2490 = vmax.f32 %v1750, 0.0
  %v2491 = vmax.f32 %v1753, 0.0
  %v2492 = vmax.f32 %v1758, 0.0
  %v2493 = vmax.f32 %v1761, 0.0
  %v2494 = vmax.f32 %v1766, 0.0
  %v2495 = vmax.f32 %v1769, 0.0
  %v2496 = vmax.f32 %v1774, 0.0
  %v2497 = vmax.f32 %v1777, 0.0
  %v2498 = vmax.f32 %v1782, 0.0
  %v2499 = vmax.f32 %v1785, 0.0
  %v2500 = vmax.f32 %v1790, 0.0
  %v2501 = vmax.f32 %v1793, 0.0
  %v2502 = vmax.f32 %v1798, 0.0
  %v2503 = vmax.f32 %v1801, 0.0
  %v2504 = vmax.f32 %v1806, 0.0
  %v2505 = vmax.f32 %v1809, 0.0
  %v2506 = vmax.f32 %v1814, 0.0
  %v2507 = vmax.f32 %v1817, 0.0
  %v2508 = vmax.f32 %v1822, 0.0
  %v2509 = vmax.f32 %v1825, 0.0
  %v2510 = vmax.f32 %v1830, 0.0
  %v2511 = vmax.f32 %v1833, 0.0
  %v2512 = vmax.f32 %v1838, 0.0
  %v2513 = vmax.f32 %v1841, 0.0
  %v2514 = vmax.f32 %v1846, 0.0
  %v2515 = vmax.f32 %v1849, 0.0
  %v2516 = vmax.f32 %v1854, 0.0
  %v2517 = vmax.f32 %v1857, 0.0
  %v2518 = vmax.f32 %v1862, 0.0
  %v2519 = vmax.f32 %v1865, 0.0
  %v2520 = vmax.f32 %v1870, 0.0
  %v2521 = vmax.f32 %v1873, 0.0
  %v2522 = vmax.f32 %v1878, 0.0
  %v2523 = vmax.f32 %v1881, 0.0
  %v2524 = vmax.f32 %v1886, 0.0
  %v2525 = vmax.f32 %v1889, 0.0
  %v2526 = vmax.f32 %v1894, 0.0
  %v2527 = vmax.f32 %v1897, 0.0
  %v2528 = vmax.f32 %v1902, 0.0
  %v2529 = vmax.f32 %v1905, 0.0
  %v2530 = vmax.f32 %v1910, 0.0
  %v2531 = vmax.f32 %v1913, 0.0
  %v2532 = vmax.f32 %v1918, 0.0
  %v2533 = vmax.f32 %v1921, 0.0
  %v2534 = vmax.f32 %v1926, 0.0
  %v2535 = vmax.f32 %v1929, 0.0
  %v2536 = vmax.f32 %v1934, 0.0
  %v2537 = vmax.f32 %v1937, 0.0
  %v2538 = vmax.f32 %v1942, 0.0
  %v2539 = vmax.f32 %v1945, 0.0
  %v2540 = vmax.f32 %v1950, 0.0
  %v2541 = vmax.f32 %v1953, 0.0
  %v2542 = vmax.f32 %v1958, 0.0
  %v2543 = vmax.f32 %v1961, 0.0
  %v2544 = vmax.f32 %v1966, 0.0
  %v2545 = vmax.f32 %v1969, 0.0
  %v2546 = vmax.f32 %v1974, 0.0
  %v2547 = vmax.f32 %v1977, 0.0
  %v2548 = vmax.f32 %v1982, 0.0
  %v2549 = vmax.f32 %v1985, 0.0
  %v2550 = vmax.f32 %v1990, 0.0
  %v2551 = vmax.f32 %v1993, 0.0
  %v2552 = vmax.f32 %v1998, 0.0
  %v2553 = vmax.f32 %v2001, 0.0
  %v2554 = vmax.f32 %v2006, 0.0
  %v2555 = vmax.f32 %v2009, 0.0
  %v2556 = vmax.f32 %v2014, 0.0
  %v2557 = vmax.f32 %v2017, 0.0
  %v2558 = vmax.f32 %v2022, 0.0
  %v2559 = vmax.f32 %v2025, 0.0
  %v2560 = vmax.f32 %v2030, 0.0
  %v2561 = vmax.f32 %v2033, 0.0
  %v2562 = vmax.f32 %v2038, 0.0
  %v2563 = vmax.f32 %v2041, 0.0
  %v2564 = vmax.f32 %v2046, 0.0
  %v2565 = vmax.f32 %v2049, 0.0
  %v2566 = vmax.f32 %v2054, 0.0
  %v2567 = vmax.f32 %v2057, 0.0
  %v2568 = vmax.f32 %v2062, 0.0
  %v2569 = vmax.f32 %v2065, 0.0
  %v2570 = vmax.f32 %v2070, 0.0
  %v2571 = vmax.f32 %v2073, 0.0
  %v2572 = vmax.f32 %v2078, 0.0
  %v2573 = vmax.f32 %v2081, 0.0
  %v2574 = vmax.f32 %v2086, 0.0
  %v2575 = vmax.f32 %v2089, 0.0
  %v2576 = vmax.f32 %v2094, 0.0
  %v2577 = vmax.f32 %v2097, 0.0
  %v2578 = vmax.f32 %v2102, 0.0
  %v2579 = vmax.f32 %v2105, 0.0
  %v2580 = vmax.f32 %v2110, 0.0
  %v2581 = vmax.f32 %v2113, 0.0
  %v2582 = vmax.f32 %v2118, 0.0
  %v2583 = vmax.f32 %v2121, 0.0
  %v2584 = vmax.f32 %v2126, 0.0
  %v2585 = vmax.f32 %v2129, 0.0
  %v2586 = vmax.f32 %v2134, 0.0
  %v2587 = vmax.f32 %v2137, 0.0
  %v2588 = vmax.f32 %v2142, 0.0
  %v2589 = vmax.f32 %v2145, 0.0
  %v2590 = vmax.f32 %v2150, 0.0
  %v2591 = vmax.f32 %v2153, 0.0
  %v2592 = vmax.f32 %v2158, 0.0
  %v2593 = vmax.f32 %v2161, 0.0
  %v2594 = vmax.f32 %v2166, 0.0
  %v2595 = vmax.f32 %v2169, 0.0
  %v2596 = vmax.f32 %v2174, 0.0
  %v2597 = vmax.f32 %v2177, 0.0
  %v2598 = vmax.f32 %v2182, 0.0
  %v2599 = vmax.f32 %v2185, 0.0
  %v2600 = vmax.f32 %v2190, 0.0
  %v2601 = vmax.f32 %v2193, 0.0
  %v2602 = vmax.f32 %v2198, 0.0
  %v2603 = vmax.f32 %v2201, 0.0
  %v2604 = vmax.f32 %v2206, 0.0
  %v2605 = vmax.f32 %v2209, 0.0
  %v2606 = vmax.f32 %v2214, 0.0
  %v2607 = vmax.f32 %v2217, 0.0
  %v2608 = vmax.f32 %v2222, 0.0
  %v2609 = vmax.f32 %v2225, 0.0
  %v2610 = vmax.f32 %v2230, 0.0
  %v2611 = vmax.f32 %v2233, 0.0
  %v2612 = vmax.f32 %v2238, 0.0
  %v2613 = vmax.f32 %v2241, 0.0
  %v2614 = vmax.f32 %v2246, 0.0
  %v2615 = vmax.f32 %v2249, 0.0
  %v2616 = vmax.f32 %v2254, 0.0
  %v2617 = vmax.f32 %v2257, 0.0
  %v2618 = vmax.f32 %v2262, 0.0
  %v2619 = vmax.f32 %v2265, 0.0
  %v2620 = vmax.f32 %v2270, 0.0
  %v2621 = vmax.f32 %v2273, 0.0
  %v2622 = vmax.f32 %v2278, 0.0
  %v2623 = vmax.f32 %v2281, 0.0
  %v2624 = vmax.f32 %v2286, 0.0
  %v2625 = vmax.f32 %v2289, 0.0
  %v2626 = vmax.f32 %v2294, 0.0
  %v2627 = vmax.f32 %v2297, 0.0
  %v2628 = vmax.f32 %v2302, 0.0
  %v2629 = vmax.f32 %v2305, 0.0
  %v2630 = vmax.f32 %v2310, 0.0
  %v2631 = vmax.f32 %v2313, 0.0
  %v2632 = vmax.f32 %v2318, 0.0
  %v2633 = vmax.f32 %v2321, 0.0
  %v2634 = vmax.f32 %v2326, 0.0
  %v2635 = vmax.f32 %v2329, 0.0
  %v2636 = vmax.f32 %v2334, 0.0
  %v2637 = vmax.f32 %v2337, 0.0
  %v2638 = vmax.f32 %v2342, 0.0
  %v2639 = vmax.f32 %v2345, 0.0
  %v2640 = vmax.f32 %v2350, 0.0
  %v2641 = vmax.f32 %v2353, 0.0
  %v2642 = vmax.f32 %v2358, 0.0
  %v2643 = vmax.f32 %v2361, 0.0
  %v2644 = vmax.f32 %v2366, 0.0
  %v2645 = vmax.f32 %v2369, 0.0
  %v2646 = vmax.f32 %v2374, 0.0
  %v2647 = vmax.f32 %v2377, 0.0
  %v2648 = vmax.f32 %v2382, 0.0
  %v2649 = vmax.f32 %v2385, 0.0
  %v2650 = vmax.f32 %v2390, 0.0
  %v2651 = vmax.f32 %v2393, 0.0
  %vm2652 = vcmask 130048
  %v2653 = vsel %vm2652, %v2396, 0.0
  %v2654 = vsel %vm2652, %v2397, 0.0
  %v2655 = vadd.f32 %v2653, %v2654
  %v2656 = vsel %vm2652, %v2398, 0.0
  %v2657 = vadd.f32 %v2655, %v2656
  %v2658 = vsel %vm2652, %v2399, 0.0
  %v2659 = vadd.f32 %v2657, %v2658
  %v2660 = vsel %vm2652, %v2400, 0.0
  %v2661 = vadd.f32 %v2659, %v2660
  %v2662 = vsel %vm2652, %v2401, 0.0
  %v2663 = vadd.f32 %v2661, %v2662
  %v2664 = vsel %vm2652, %v2402, 0.0
  %v2665 = vadd.f32 %v2663, %v2664
  %v2666 = vsel %vm2652, %v2403, 0.0
  %v2667 = vadd.f32 %v2665, %v2666
  %v2668 = vsel %vm2652, %v2404, 0.0
  %v2669 = vadd.f32 %v2667, %v2668
  %v2670 = vsel %vm2652, %v2405, 0.0
  %v2671 = vadd.f32 %v2669, %v2670
  %v2672 = vsel %vm2652, %v2406, 0.0
  %v2673 = vadd.f32 %v2671, %v2672
  %v2674 = vsel %vm2652, %v2407, 0.0
  %v2675 = vadd.f32 %v2673, %v2674
  %v2676 = vsel %vm2652, %v2408, 0.0
  %v2677 = vadd.f32 %v2675, %v2676
  %v2678 = vsel %vm2652, %v2409, 0.0
  %v2679 = vadd.f32 %v2677, %v2678
  %v2680 = vsel %vm2652, %v2410, 0.0
  %v2681 = vadd.f32 %v2679, %v2680
  %v2682 = vsel %vm2652, %v2411, 0.0
  %v2683 = vadd.f32 %v2681, %v2682
  %v2684 = vsel %vm2652, %v2412, 0.0
  %v2685 = vadd.f32 %v2683, %v2684
  %v2686 = vsel %vm2652, %v2413, 0.0
  %v2687 = vadd.f32 %v2685, %v2686
  %v2688 = vsel %vm2652, %v2414, 0.0
  %v2689 = vadd.f32 %v2687, %v2688
  %v2690 = vsel %vm2652, %v2415, 0.0
  %v2691 = vadd.f32 %v2689, %v2690
  %v2692 = vsel %vm2652, %v2416, 0.0
  %v2693 = vadd.f32 %v2691, %v2692
  %v2694 = vsel %vm2652, %v2417, 0.0
  %v2695 = vadd.f32 %v2693, %v2694
  %v2696 = vsel %vm2652, %v2418, 0.0
  %v2697 = vadd.f32 %v2695, %v2696
  %v2698 = vsel %vm2652, %v2419, 0.0
  %v2699 = vadd.f32 %v2697, %v2698
  %v2700 = vsel %vm2652, %v2420, 0.0
  %v2701 = vadd.f32 %v2699, %v2700
  %v2702 = vsel %vm2652, %v2421, 0.0
  %v2703 = vadd.f32 %v2701, %v2702
  %v2704 = vsel %vm2652, %v2422, 0.0
  %v2705 = vadd.f32 %v2703, %v2704
  %v2706 = vsel %vm2652, %v2423, 0.0
  %v2707 = vadd.f32 %v2705, %v2706
  %v2708 = vsel %vm2652, %v2424, 0.0
  %v2709 = vadd.f32 %v2707, %v2708
  %v2710 = vsel %vm2652, %v2425, 0.0
  %v2711 = vadd.f32 %v2709, %v2710
  %v2712 = vsel %vm2652, %v2426, 0.0
  %v2713 = vadd.f32 %v2711, %v2712
  %v2714 = vsel %vm2652, %v2427, 0.0
  %v2715 = vadd.f32 %v2713, %v2714
  %v2716 = vrot.slane %v2715, 4
  %v2717 = vadd.f32 %v2715, %v2716
  %v2718 = vrot.slane %v2717, 2
  %v2719 = vadd.f32 %v2717, %v2718
  %v2720 = vrot.slane %v2719, 1
  %v2721 = vadd.f32 %v2719, %v2720
  %v2722 = vsel %vm2652, %v2428, 0.0
  %v2723 = vsel %vm2652, %v2429, 0.0
  %v2724 = vadd.f32 %v2722, %v2723
  %v2725 = vsel %vm2652, %v2430, 0.0
  %v2726 = vadd.f32 %v2724, %v2725
  %v2727 = vsel %vm2652, %v2431, 0.0
  %v2728 = vadd.f32 %v2726, %v2727
  %v2729 = vsel %vm2652, %v2432, 0.0
  %v2730 = vadd.f32 %v2728, %v2729
  %v2731 = vsel %vm2652, %v2433, 0.0
  %v2732 = vadd.f32 %v2730, %v2731
  %v2733 = vsel %vm2652, %v2434, 0.0
  %v2734 = vadd.f32 %v2732, %v2733
  %v2735 = vsel %vm2652, %v2435, 0.0
  %v2736 = vadd.f32 %v2734, %v2735
  %v2737 = vsel %vm2652, %v2436, 0.0
  %v2738 = vadd.f32 %v2736, %v2737
  %v2739 = vsel %vm2652, %v2437, 0.0
  %v2740 = vadd.f32 %v2738, %v2739
  %v2741 = vsel %vm2652, %v2438, 0.0
  %v2742 = vadd.f32 %v2740, %v2741
  %v2743 = vsel %vm2652, %v2439, 0.0
  %v2744 = vadd.f32 %v2742, %v2743
  %v2745 = vsel %vm2652, %v2440, 0.0
  %v2746 = vadd.f32 %v2744, %v2745
  %v2747 = vsel %vm2652, %v2441, 0.0
  %v2748 = vadd.f32 %v2746, %v2747
  %v2749 = vsel %vm2652, %v2442, 0.0
  %v2750 = vadd.f32 %v2748, %v2749
  %v2751 = vsel %vm2652, %v2443, 0.0
  %v2752 = vadd.f32 %v2750, %v2751
  %v2753 = vsel %vm2652, %v2444, 0.0
  %v2754 = vadd.f32 %v2752, %v2753
  %v2755 = vsel %vm2652, %v2445, 0.0
  %v2756 = vadd.f32 %v2754, %v2755
  %v2757 = vsel %vm2652, %v2446, 0.0
  %v2758 = vadd.f32 %v2756, %v2757
  %v2759 = vsel %vm2652, %v2447, 0.0
  %v2760 = vadd.f32 %v2758, %v2759
  %v2761 = vsel %vm2652, %v2448, 0.0
  %v2762 = vadd.f32 %v2760, %v2761
  %v2763 = vsel %vm2652, %v2449, 0.0
  %v2764 = vadd.f32 %v2762, %v2763
  %v2765 = vsel %vm2652, %v2450, 0.0
  %v2766 = vadd.f32 %v2764, %v2765
  %v2767 = vsel %vm2652, %v2451, 0.0
  %v2768 = vadd.f32 %v2766, %v2767
  %v2769 = vsel %vm2652, %v2452, 0.0
  %v2770 = vadd.f32 %v2768, %v2769
  %v2771 = vsel %vm2652, %v2453, 0.0
  %v2772 = vadd.f32 %v2770, %v2771
  %v2773 = vsel %vm2652, %v2454, 0.0
  %v2774 = vadd.f32 %v2772, %v2773
  %v2775 = vsel %vm2652, %v2455, 0.0
  %v2776 = vadd.f32 %v2774, %v2775
  %v2777 = vsel %vm2652, %v2456, 0.0
  %v2778 = vadd.f32 %v2776, %v2777
  %v2779 = vsel %vm2652, %v2457, 0.0
  %v2780 = vadd.f32 %v2778, %v2779
  %v2781 = vsel %vm2652, %v2458, 0.0
  %v2782 = vadd.f32 %v2780, %v2781
  %v2783 = vsel %vm2652, %v2459, 0.0
  %v2784 = vadd.f32 %v2782, %v2783
  %v2785 = vrot.slane %v2784, 4
  %v2786 = vadd.f32 %v2784, %v2785
  %v2787 = vrot.slane %v2786, 2
  %v2788 = vadd.f32 %v2786, %v2787
  %v2789 = vrot.slane %v2788, 1
  %v2790 = vadd.f32 %v2788, %v2789
  %v2791 = vsel %vm2652, %v2460, 0.0
  %v2792 = vsel %vm2652, %v2461, 0.0
  %v2793 = vadd.f32 %v2791, %v2792
  %v2794 = vsel %vm2652, %v2462, 0.0
  %v2795 = vadd.f32 %v2793, %v2794
  %v2796 = vsel %vm2652, %v2463, 0.0
  %v2797 = vadd.f32 %v2795, %v2796
  %v2798 = vsel %vm2652, %v2464, 0.0
  %v2799 = vadd.f32 %v2797, %v2798
  %v2800 = vsel %vm2652, %v2465, 0.0
  %v2801 = vadd.f32 %v2799, %v2800
  %v2802 = vsel %vm2652, %v2466, 0.0
  %v2803 = vadd.f32 %v2801, %v2802
  %v2804 = vsel %vm2652, %v2467, 0.0
  %v2805 = vadd.f32 %v2803, %v2804
  %v2806 = vsel %vm2652, %v2468, 0.0
  %v2807 = vadd.f32 %v2805, %v2806
  %v2808 = vsel %vm2652, %v2469, 0.0
  %v2809 = vadd.f32 %v2807, %v2808
  %v2810 = vsel %vm2652, %v2470, 0.0
  %v2811 = vadd.f32 %v2809, %v2810
  %v2812 = vsel %vm2652, %v2471, 0.0
  %v2813 = vadd.f32 %v2811, %v2812
  %v2814 = vsel %vm2652, %v2472, 0.0
  %v2815 = vadd.f32 %v2813, %v2814
  %v2816 = vsel %vm2652, %v2473, 0.0
  %v2817 = vadd.f32 %v2815, %v2816
  %v2818 = vsel %vm2652, %v2474, 0.0
  %v2819 = vadd.f32 %v2817, %v2818
  %v2820 = vsel %vm2652, %v2475, 0.0
  %v2821 = vadd.f32 %v2819, %v2820
  %v2822 = vsel %vm2652, %v2476, 0.0
  %v2823 = vadd.f32 %v2821, %v2822
  %v2824 = vsel %vm2652, %v2477, 0.0
  %v2825 = vadd.f32 %v2823, %v2824
  %v2826 = vsel %vm2652, %v2478, 0.0
  %v2827 = vadd.f32 %v2825, %v2826
  %v2828 = vsel %vm2652, %v2479, 0.0
  %v2829 = vadd.f32 %v2827, %v2828
  %v2830 = vsel %vm2652, %v2480, 0.0
  %v2831 = vadd.f32 %v2829, %v2830
  %v2832 = vsel %vm2652, %v2481, 0.0
  %v2833 = vadd.f32 %v2831, %v2832
  %v2834 = vsel %vm2652, %v2482, 0.0
  %v2835 = vadd.f32 %v2833, %v2834
  %v2836 = vsel %vm2652, %v2483, 0.0
  %v2837 = vadd.f32 %v2835, %v2836
  %v2838 = vsel %vm2652, %v2484, 0.0
  %v2839 = vadd.f32 %v2837, %v2838
  %v2840 = vsel %vm2652, %v2485, 0.0
  %v2841 = vadd.f32 %v2839, %v2840
  %v2842 = vsel %vm2652, %v2486, 0.0
  %v2843 = vadd.f32 %v2841, %v2842
  %v2844 = vsel %vm2652, %v2487, 0.0
  %v2845 = vadd.f32 %v2843, %v2844
  %v2846 = vsel %vm2652, %v2488, 0.0
  %v2847 = vadd.f32 %v2845, %v2846
  %v2848 = vsel %vm2652, %v2489, 0.0
  %v2849 = vadd.f32 %v2847, %v2848
  %v2850 = vsel %vm2652, %v2490, 0.0
  %v2851 = vadd.f32 %v2849, %v2850
  %v2852 = vsel %vm2652, %v2491, 0.0
  %v2853 = vadd.f32 %v2851, %v2852
  %v2854 = vrot.slane %v2853, 4
  %v2855 = vadd.f32 %v2853, %v2854
  %v2856 = vrot.slane %v2855, 2
  %v2857 = vadd.f32 %v2855, %v2856
  %v2858 = vrot.slane %v2857, 1
  %v2859 = vadd.f32 %v2857, %v2858
  %v2860 = vsel %vm2652, %v2492, 0.0
  %v2861 = vsel %vm2652, %v2493, 0.0
  %v2862 = vadd.f32 %v2860, %v2861
  %v2863 = vsel %vm2652, %v2494, 0.0
  %v2864 = vadd.f32 %v2862, %v2863
  %v2865 = vsel %vm2652, %v2495, 0.0
  %v2866 = vadd.f32 %v2864, %v2865
  %v2867 = vsel %vm2652, %v2496, 0.0
  %v2868 = vadd.f32 %v2866, %v2867
  %v2869 = vsel %vm2652, %v2497, 0.0
  %v2870 = vadd.f32 %v2868, %v2869
  %v2871 = vsel %vm2652, %v2498, 0.0
  %v2872 = vadd.f32 %v2870, %v2871
  %v2873 = vsel %vm2652, %v2499, 0.0
  %v2874 = vadd.f32 %v2872, %v2873
  %v2875 = vsel %vm2652, %v2500, 0.0
  %v2876 = vadd.f32 %v2874, %v2875
  %v2877 = vsel %vm2652, %v2501, 0.0
  %v2878 = vadd.f32 %v2876, %v2877
  %v2879 = vsel %vm2652, %v2502, 0.0
  %v2880 = vadd.f32 %v2878, %v2879
  %v2881 = vsel %vm2652, %v2503, 0.0
  %v2882 = vadd.f32 %v2880, %v2881
  %v2883 = vsel %vm2652, %v2504, 0.0
  %v2884 = vadd.f32 %v2882, %v2883
  %v2885 = vsel %vm2652, %v2505, 0.0
  %v2886 = vadd.f32 %v2884, %v2885
  %v2887 = vsel %vm2652, %v2506, 0.0
  %v2888 = vadd.f32 %v2886, %v2887
  %v2889 = vsel %vm2652, %v2507, 0.0
  %v2890 = vadd.f32 %v2888, %v2889
  %v2891 = vsel %vm2652, %v2508, 0.0
  %v2892 = vadd.f32 %v2890, %v2891
  %v2893 = vsel %vm2652, %v2509, 0.0
  %v2894 = vadd.f32 %v2892, %v2893
  %v2895 = vsel %vm2652, %v2510, 0.0
  %v2896 = vadd.f32 %v2894, %v2895
  %v2897 = vsel %vm2652, %v2511, 0.0
  %v2898 = vadd.f32 %v2896, %v2897
  %v2899 = vsel %vm2652, %v2512, 0.0
  %v2900 = vadd.f32 %v2898, %v2899
  %v2901 = vsel %vm2652, %v2513, 0.0
  %v2902 = vadd.f32 %v2900, %v2901
  %v2903 = vsel %vm2652, %v2514, 0.0
  %v2904 = vadd.f32 %v2902, %v2903
  %v2905 = vsel %vm2652, %v2515, 0.0
  %v2906 = vadd.f32 %v2904, %v2905
  %v2907 = vsel %vm2652, %v2516, 0.0
  %v2908 = vadd.f32 %v2906, %v2907
  %v2909 = vsel %vm2652, %v2517, 0.0
  %v2910 = vadd.f32 %v2908, %v2909
  %v2911 = vsel %vm2652, %v2518, 0.0
  %v2912 = vadd.f32 %v2910, %v2911
  %v2913 = vsel %vm2652, %v2519, 0.0
  %v2914 = vadd.f32 %v2912, %v2913
  %v2915 = vsel %vm2652, %v2520, 0.0
  %v2916 = vadd.f32 %v2914, %v2915
  %v2917 = vsel %vm2652, %v2521, 0.0
  %v2918 = vadd.f32 %v2916, %v2917
  %v2919 = vsel %vm2652, %v2522, 0.0
  %v2920 = vadd.f32 %v2918, %v2919
  %v2921 = vsel %vm2652, %v2523, 0.0
  %v2922 = vadd.f32 %v2920, %v2921
  %v2923 = vrot.slane %v2922, 4
  %v2924 = vadd.f32 %v2922, %v2923
  %v2925 = vrot.slane %v2924, 2
  %v2926 = vadd.f32 %v2924, %v2925
  %v2927 = vrot.slane %v2926, 1
  %v2928 = vadd.f32 %v2926, %v2927
  %v2929 = vsel %vm2652, %v2524, 0.0
  %v2930 = vsel %vm2652, %v2525, 0.0
  %v2931 = vadd.f32 %v2929, %v2930
  %v2932 = vsel %vm2652, %v2526, 0.0
  %v2933 = vadd.f32 %v2931, %v2932
  %v2934 = vsel %vm2652, %v2527, 0.0
  %v2935 = vadd.f32 %v2933, %v2934
  %v2936 = vsel %vm2652, %v2528, 0.0
  %v2937 = vadd.f32 %v2935, %v2936
  %v2938 = vsel %vm2652, %v2529, 0.0
  %v2939 = vadd.f32 %v2937, %v2938
  %v2940 = vsel %vm2652, %v2530, 0.0
  %v2941 = vadd.f32 %v2939, %v2940
  %v2942 = vsel %vm2652, %v2531, 0.0
  %v2943 = vadd.f32 %v2941, %v2942
  %v2944 = vsel %vm2652, %v2532, 0.0
  %v2945 = vadd.f32 %v2943, %v2944
  %v2946 = vsel %vm2652, %v2533, 0.0
  %v2947 = vadd.f32 %v2945, %v2946
  %v2948 = vsel %vm2652, %v2534, 0.0
  %v2949 = vadd.f32 %v2947, %v2948
  %v2950 = vsel %vm2652, %v2535, 0.0
  %v2951 = vadd.f32 %v2949, %v2950
  %v2952 = vsel %vm2652, %v2536, 0.0
  %v2953 = vadd.f32 %v2951, %v2952
  %v2954 = vsel %vm2652, %v2537, 0.0
  %v2955 = vadd.f32 %v2953, %v2954
  %v2956 = vsel %vm2652, %v2538, 0.0
  %v2957 = vadd.f32 %v2955, %v2956
  %v2958 = vsel %vm2652, %v2539, 0.0
  %v2959 = vadd.f32 %v2957, %v2958
  %v2960 = vsel %vm2652, %v2540, 0.0
  %v2961 = vadd.f32 %v2959, %v2960
  %v2962 = vsel %vm2652, %v2541, 0.0
  %v2963 = vadd.f32 %v2961, %v2962
  %v2964 = vsel %vm2652, %v2542, 0.0
  %v2965 = vadd.f32 %v2963, %v2964
  %v2966 = vsel %vm2652, %v2543, 0.0
  %v2967 = vadd.f32 %v2965, %v2966
  %v2968 = vsel %vm2652, %v2544, 0.0
  %v2969 = vadd.f32 %v2967, %v2968
  %v2970 = vsel %vm2652, %v2545, 0.0
  %v2971 = vadd.f32 %v2969, %v2970
  %v2972 = vsel %vm2652, %v2546, 0.0
  %v2973 = vadd.f32 %v2971, %v2972
  %v2974 = vsel %vm2652, %v2547, 0.0
  %v2975 = vadd.f32 %v2973, %v2974
  %v2976 = vsel %vm2652, %v2548, 0.0
  %v2977 = vadd.f32 %v2975, %v2976
  %v2978 = vsel %vm2652, %v2549, 0.0
  %v2979 = vadd.f32 %v2977, %v2978
  %v2980 = vsel %vm2652, %v2550, 0.0
  %v2981 = vadd.f32 %v2979, %v2980
  %v2982 = vsel %vm2652, %v2551, 0.0
  %v2983 = vadd.f32 %v2981, %v2982
  %v2984 = vsel %vm2652, %v2552, 0.0
  %v2985 = vadd.f32 %v2983, %v2984
  %v2986 = vsel %vm2652, %v2553, 0.0
  %v2987 = vadd.f32 %v2985, %v2986
  %v2988 = vsel %vm2652, %v2554, 0.0
  %v2989 = vadd.f32 %v2987, %v2988
  %v2990 = vsel %vm2652, %v2555, 0.0
  %v2991 = vadd.f32 %v2989, %v2990
  %v2992 = vrot.slane %v2991, 4
  %v2993 = vadd.f32 %v2991, %v2992
  %v2994 = vrot.slane %v2993, 2
  %v2995 = vadd.f32 %v2993, %v2994
  %v2996 = vrot.slane %v2995, 1
  %v2997 = vadd.f32 %v2995, %v2996
  %v2998 = vsel %vm2652, %v2556, 0.0
  %v2999 = vsel %vm2652, %v2557, 0.0
  %v3000 = vadd.f32 %v2998, %v2999
  %v3001 = vsel %vm2652, %v2558, 0.0
  %v3002 = vadd.f32 %v3000, %v3001
  %v3003 = vsel %vm2652, %v2559, 0.0
  %v3004 = vadd.f32 %v3002, %v3003
  %v3005 = vsel %vm2652, %v2560, 0.0
  %v3006 = vadd.f32 %v3004, %v3005
  %v3007 = vsel %vm2652, %v2561, 0.0
  %v3008 = vadd.f32 %v3006, %v3007
  %v3009 = vsel %vm2652, %v2562, 0.0
  %v3010 = vadd.f32 %v3008, %v3009
  %v3011 = vsel %vm2652, %v2563, 0.0
  %v3012 = vadd.f32 %v3010, %v3011
  %v3013 = vsel %vm2652, %v2564, 0.0
  %v3014 = vadd.f32 %v3012, %v3013
  %v3015 = vsel %vm2652, %v2565, 0.0
  %v3016 = vadd.f32 %v3014, %v3015
  %v3017 = vsel %vm2652, %v2566, 0.0
  %v3018 = vadd.f32 %v3016, %v3017
  %v3019 = vsel %vm2652, %v2567, 0.0
  %v3020 = vadd.f32 %v3018, %v3019
  %v3021 = vsel %vm2652, %v2568, 0.0
  %v3022 = vadd.f32 %v3020, %v3021
  %v3023 = vsel %vm2652, %v2569, 0.0
  %v3024 = vadd.f32 %v3022, %v3023
  %v3025 = vsel %vm2652, %v2570, 0.0
  %v3026 = vadd.f32 %v3024, %v3025
  %v3027 = vsel %vm2652, %v2571, 0.0
  %v3028 = vadd.f32 %v3026, %v3027
  %v3029 = vsel %vm2652, %v2572, 0.0
  %v3030 = vadd.f32 %v3028, %v3029
  %v3031 = vsel %vm2652, %v2573, 0.0
  %v3032 = vadd.f32 %v3030, %v3031
  %v3033 = vsel %vm2652, %v2574, 0.0
  %v3034 = vadd.f32 %v3032, %v3033
  %v3035 = vsel %vm2652, %v2575, 0.0
  %v3036 = vadd.f32 %v3034, %v3035
  %v3037 = vsel %vm2652, %v2576, 0.0
  %v3038 = vadd.f32 %v3036, %v3037
  %v3039 = vsel %vm2652, %v2577, 0.0
  %v3040 = vadd.f32 %v3038, %v3039
  %v3041 = vsel %vm2652, %v2578, 0.0
  %v3042 = vadd.f32 %v3040, %v3041
  %v3043 = vsel %vm2652, %v2579, 0.0
  %v3044 = vadd.f32 %v3042, %v3043
  %v3045 = vsel %vm2652, %v2580, 0.0
  %v3046 = vadd.f32 %v3044, %v3045
  %v3047 = vsel %vm2652, %v2581, 0.0
  %v3048 = vadd.f32 %v3046, %v3047
  %v3049 = vsel %vm2652, %v2582, 0.0
  %v3050 = vadd.f32 %v3048, %v3049
  %v3051 = vsel %vm2652, %v2583, 0.0
  %v3052 = vadd.f32 %v3050, %v3051
  %v3053 = vsel %vm2652, %v2584, 0.0
  %v3054 = vadd.f32 %v3052, %v3053
  %v3055 = vsel %vm2652, %v2585, 0.0
  %v3056 = vadd.f32 %v3054, %v3055
  %v3057 = vsel %vm2652, %v2586, 0.0
  %v3058 = vadd.f32 %v3056, %v3057
  %v3059 = vsel %vm2652, %v2587, 0.0
  %v3060 = vadd.f32 %v3058, %v3059
  %v3061 = vrot.slane %v3060, 4
  %v3062 = vadd.f32 %v3060, %v3061
  %v3063 = vrot.slane %v3062, 2
  %v3064 = vadd.f32 %v3062, %v3063
  %v3065 = vrot.slane %v3064, 1
  %v3066 = vadd.f32 %v3064, %v3065
  %v3067 = vsel %vm2652, %v2588, 0.0
  %v3068 = vsel %vm2652, %v2589, 0.0
  %v3069 = vadd.f32 %v3067, %v3068
  %v3070 = vsel %vm2652, %v2590, 0.0
  %v3071 = vadd.f32 %v3069, %v3070
  %v3072 = vsel %vm2652, %v2591, 0.0
  %v3073 = vadd.f32 %v3071, %v3072
  %v3074 = vsel %vm2652, %v2592, 0.0
  %v3075 = vadd.f32 %v3073, %v3074
  %v3076 = vsel %vm2652, %v2593, 0.0
  %v3077 = vadd.f32 %v3075, %v3076
  %v3078 = vsel %vm2652, %v2594, 0.0
  %v3079 = vadd.f32 %v3077, %v3078
  %v3080 = vsel %vm2652, %v2595, 0.0
  %v3081 = vadd.f32 %v3079, %v3080
  %v3082 = vsel %vm2652, %v2596, 0.0
  %v3083 = vadd.f32 %v3081, %v3082
  %v3084 = vsel %vm2652, %v2597, 0.0
  %v3085 = vadd.f32 %v3083, %v3084
  %v3086 = vsel %vm2652, %v2598, 0.0
  %v3087 = vadd.f32 %v3085, %v3086
  %v3088 = vsel %vm2652, %v2599, 0.0
  %v3089 = vadd.f32 %v3087, %v3088
  %v3090 = vsel %vm2652, %v2600, 0.0
  %v3091 = vadd.f32 %v3089, %v3090
  %v3092 = vsel %vm2652, %v2601, 0.0
  %v3093 = vadd.f32 %v3091, %v3092
  %v3094 = vsel %vm2652, %v2602, 0.0
  %v3095 = vadd.f32 %v3093, %v3094
  %v3096 = vsel %vm2652, %v2603, 0.0
  %v3097 = vadd.f32 %v3095, %v3096
  %v3098 = vsel %vm2652, %v2604, 0.0
  %v3099 = vadd.f32 %v3097, %v3098
  %v3100 = vsel %vm2652, %v2605, 0.0
  %v3101 = vadd.f32 %v3099, %v3100
  %v3102 = vsel %vm2652, %v2606, 0.0
  %v3103 = vadd.f32 %v3101, %v3102
  %v3104 = vsel %vm2652, %v2607, 0.0
  %v3105 = vadd.f32 %v3103, %v3104
  %v3106 = vsel %vm2652, %v2608, 0.0
  %v3107 = vadd.f32 %v3105, %v3106
  %v3108 = vsel %vm2652, %v2609, 0.0
  %v3109 = vadd.f32 %v3107, %v3108
  %v3110 = vsel %vm2652, %v2610, 0.0
  %v3111 = vadd.f32 %v3109, %v3110
  %v3112 = vsel %vm2652, %v2611, 0.0
  %v3113 = vadd.f32 %v3111, %v3112
  %v3114 = vsel %vm2652, %v2612, 0.0
  %v3115 = vadd.f32 %v3113, %v3114
  %v3116 = vsel %vm2652, %v2613, 0.0
  %v3117 = vadd.f32 %v3115, %v3116
  %v3118 = vsel %vm2652, %v2614, 0.0
  %v3119 = vadd.f32 %v3117, %v3118
  %v3120 = vsel %vm2652, %v2615, 0.0
  %v3121 = vadd.f32 %v3119, %v3120
  %v3122 = vsel %vm2652, %v2616, 0.0
  %v3123 = vadd.f32 %v3121, %v3122
  %v3124 = vsel %vm2652, %v2617, 0.0
  %v3125 = vadd.f32 %v3123, %v3124
  %v3126 = vsel %vm2652, %v2618, 0.0
  %v3127 = vadd.f32 %v3125, %v3126
  %v3128 = vsel %vm2652, %v2619, 0.0
  %v3129 = vadd.f32 %v3127, %v3128
  %v3130 = vrot.slane %v3129, 4
  %v3131 = vadd.f32 %v3129, %v3130
  %v3132 = vrot.slane %v3131, 2
  %v3133 = vadd.f32 %v3131, %v3132
  %v3134 = vrot.slane %v3133, 1
  %v3135 = vadd.f32 %v3133, %v3134
  %v3136 = vsel %vm2652, %v2620, 0.0
  %v3137 = vsel %vm2652, %v2621, 0.0
  %v3138 = vadd.f32 %v3136, %v3137
  %v3139 = vsel %vm2652, %v2622, 0.0
  %v3140 = vadd.f32 %v3138, %v3139
  %v3141 = vsel %vm2652, %v2623, 0.0
  %v3142 = vadd.f32 %v3140, %v3141
  %v3143 = vsel %vm2652, %v2624, 0.0
  %v3144 = vadd.f32 %v3142, %v3143
  %v3145 = vsel %vm2652, %v2625, 0.0
  %v3146 = vadd.f32 %v3144, %v3145
  %v3147 = vsel %vm2652, %v2626, 0.0
  %v3148 = vadd.f32 %v3146, %v3147
  %v3149 = vsel %vm2652, %v2627, 0.0
  %v3150 = vadd.f32 %v3148, %v3149
  %v3151 = vsel %vm2652, %v2628, 0.0
  %v3152 = vadd.f32 %v3150, %v3151
  %v3153 = vsel %vm2652, %v2629, 0.0
  %v3154 = vadd.f32 %v3152, %v3153
  %v3155 = vsel %vm2652, %v2630, 0.0
  %v3156 = vadd.f32 %v3154, %v3155
  %v3157 = vsel %vm2652, %v2631, 0.0
  %v3158 = vadd.f32 %v3156, %v3157
  %v3159 = vsel %vm2652, %v2632, 0.0
  %v3160 = vadd.f32 %v3158, %v3159
  %v3161 = vsel %vm2652, %v2633, 0.0
  %v3162 = vadd.f32 %v3160, %v3161
  %v3163 = vsel %vm2652, %v2634, 0.0
  %v3164 = vadd.f32 %v3162, %v3163
  %v3165 = vsel %vm2652, %v2635, 0.0
  %v3166 = vadd.f32 %v3164, %v3165
  %v3167 = vsel %vm2652, %v2636, 0.0
  %v3168 = vadd.f32 %v3166, %v3167
  %v3169 = vsel %vm2652, %v2637, 0.0
  %v3170 = vadd.f32 %v3168, %v3169
  %v3171 = vsel %vm2652, %v2638, 0.0
  %v3172 = vadd.f32 %v3170, %v3171
  %v3173 = vsel %vm2652, %v2639, 0.0
  %v3174 = vadd.f32 %v3172, %v3173
  %v3175 = vsel %vm2652, %v2640, 0.0
  %v3176 = vadd.f32 %v3174, %v3175
  %v3177 = vsel %vm2652, %v2641, 0.0
  %v3178 = vadd.f32 %v3176, %v3177
  %v3179 = vsel %vm2652, %v2642, 0.0
  %v3180 = vadd.f32 %v3178, %v3179
  %v3181 = vsel %vm2652, %v2643, 0.0
  %v3182 = vadd.f32 %v3180, %v3181
  %v3183 = vsel %vm2652, %v2644, 0.0
  %v3184 = vadd.f32 %v3182, %v3183
  %v3185 = vsel %vm2652, %v2645, 0.0
  %v3186 = vadd.f32 %v3184, %v3185
  %v3187 = vsel %vm2652, %v2646, 0.0
  %v3188 = vadd.f32 %v3186, %v3187
  %v3189 = vsel %vm2652, %v2647, 0.0
  %v3190 = vadd.f32 %v3188, %v3189
  %v3191 = vsel %vm2652, %v2648, 0.0
  %v3192 = vadd.f32 %v3190, %v3191
  %v3193 = vsel %vm2652, %v2649, 0.0
  %v3194 = vadd.f32 %v3192, %v3193
  %v3195 = vsel %vm2652, %v2650, 0.0
  %v3196 = vadd.f32 %v3194, %v3195
  %v3197 = vsel %vm2652, %v2651, 0.0
  %v3198 = vadd.f32 %v3196, %v3197
  %v3199 = vrot.slane %v3198, 4
  %v3200 = vadd.f32 %v3198, %v3199
  %v3201 = vrot.slane %v3200, 2
  %v3202 = vadd.f32 %v3200, %v3201
  %v3203 = vrot.slane %v3202, 1
  %v3204 = vadd.f32 %v3202, %v3203
  %v3205 = vmul.f32 %v2721, 0.00390625
  %v3206 = vmul.f32 %v2790, 0.00390625
  %v3207 = vmul.f32 %v2859, 0.00390625
  %v3208 = vmul.f32 %v2928, 0.00390625
  %v3209 = vmul.f32 %v2997, 0.00390625
  %v3210 = vmul.f32 %v3066, 0.00390625
  %v3211 = vmul.f32 %v3135, 0.00390625
  %v3212 = vmul.f32 %v3204, 0.00390625
  %v3213 = vld [vmem:[%s3] sm:$0xff]
  %v3214 = vld [vmem:[%s3 + $0x8] sm:$0xff]
  %v3215 = vld [vmem:[%s4] sm:$0x1]
  %v3217 = vlaneseq
  %v3218 = vshrl.u32 %v3217, 7
  %v3219 = vsub.s32 0, %v3218
  %v3220 = vrot.slane %v3215, %v3219
  %vm3230 = vcmask 1041409
  %v3231 = vsel %vm3230, %v3206, %v3205
  %vm3232 = vcmask 1042434
  %v3233 = vsel %vm3232, %v3207, %v3231
  %vm3234 = vcmask 1043459
  %v3235 = vsel %vm3234, %v3208, %v3233
  %vm3236 = vcmask 1044484
  %v3237 = vsel %vm3236, %v3209, %v3235
  %vm3238 = vcmask 1045509
  %v3239 = vsel %vm3238, %v3210, %v3237
  %vm3240 = vcmask 1046534
  %v3241 = vsel %vm3240, %v3211, %v3239
  %vm3242 = vcmask 1047559
  %v3243 = vsel %vm3242, %v3212, %v3241
  %v3244 = vsel %vm2652, %v3243, 0
  %3246 = vmatprep.subr.mxu0 0.0
  %3247 = vmatpush1.msra.mxu0 %v3213
  %3248 = vmatprep.subr.mxu0 0.0
  %3249 = vmatpush1.msra.mxu0 %v3214
  %3250 = vmatprep.subr.mxu0 0.0
  %3251 = vmatpush1.msra.mxu0 0.0
  %3252 = vmatprep.subr.mxu0 0.0
  %3253 = vmatpush1.msra.mxu0 0.0
  %3254 = vmatprep.subr.mxu0 0.0
  %3255 = vmatpush1.msra.mxu0 0.0
  %3256 = vmatprep.subr.mxu0 0.0
  %3257 = vmatpush1.msra.mxu0 0.0
  %3258 = vmatprep.subr.mxu0 0.0
  %3259 = vmatpush1.msra.mxu0 0.0
  %3260 = vmatprep.subr.mxu0 0.0
  %3261 = vmatpush1.msra.mxu0 0.0
  %3262 = vmatprep.subr.mxu0 0.0
  %3263 = vmatpush1.msra.mxu0 0.0
  %3264 = vmatprep.subr.mxu0 0.0
  %3265 = vmatpush1.msra.mxu0 0.0
  %3266 = vmatprep.subr.mxu0 0.0
  %3267 = vmatpush1.msra.mxu0 0.0
  %3268 = vmatprep.subr.mxu0 0.0
  %3269 = vmatpush1.msra.mxu0 0.0
  %3270 = vmatprep.subr.mxu0 0.0
  %3271 = vmatpush1.msra.mxu0 0.0
  %3272 = vmatprep.subr.mxu0 0.0
  %3273 = vmatpush1.msra.mxu0 0.0
  %3274 = vmatprep.subr.mxu0 0.0
  %3275 = vmatpush1.msra.mxu0 0.0
  %3276 = vmatprep.subr.mxu0 0.0
  %3277 = vmatpush1.msra.mxu0 0.0
  %3278 = vmatprep.subr.mxu0 0.0
  %3279 = vmatpush1.msra.mxu0 0.0
  %3280 = vmatprep.subr.mxu0 0.0
  %3281 = vmatpush1.msra.mxu0 0.0
  %3282 = vmatprep.subr.mxu0 0.0
  %3283 = vmatpush1.msra.mxu0 0.0
  %3284 = vmatprep.subr.mxu0 0.0
  %3285 = vmatpush1.msra.mxu0 0.0
  %3286 = vmatprep.subr.mxu0 0.0
  %3287 = vmatpush1.msra.mxu0 0.0
  %3288 = vmatprep.subr.mxu0 0.0
  %3289 = vmatpush1.msra.mxu0 0.0
  %3290 = vmatprep.subr.mxu0 0.0
  %3291 = vmatpush1.msra.mxu0 0.0
  %3292 = vmatprep.subr.mxu0 0.0
  %3293 = vmatpush1.msra.mxu0 0.0
  %3294 = vmatprep.subr.mxu0 0.0
  %3295 = vmatpush1.msra.mxu0 0.0
  %3296 = vmatprep.subr.mxu0 0.0
  %3297 = vmatpush1.msra.mxu0 0.0
  %3298 = vmatprep.subr.mxu0 0.0
  %3299 = vmatpush1.msra.mxu0 0.0
  %3300 = vmatprep.subr.mxu0 0.0
  %3301 = vmatpush1.msra.mxu0 0.0
  %3302 = vmatprep.subr.mxu0 0.0
  %3303 = vmatpush1.msra.mxu0 0.0
  %3304 = vmatprep.subr.mxu0 0.0
  %3305 = vmatpush1.msra.mxu0 0.0
  %3306 = vmatprep.subr.mxu0 0.0
  %3307 = vmatpush1.msra.mxu0 0.0
  %3308 = vmatprep.subr.mxu0 0.0
  %3309 = vmatpush1.msra.mxu0 0.0
  %3310 = vmatprep.mubr.f32.mxu0 0.0
  %3311 = vmatmul.mubr.f32.gmra.mrb[0].mxu0 %v3244
  %v3312 = vpop.f32.mrb[0].mxu0
  %v3313 = vadd.f32 %v3220, %v3312
  %v3314 = vpop.f32.mrb[0].mxu0
  %3315 = vdwg.mxu0
  %v3316 = vmax.f32 %v3313, 0.0
  %v3317 = vld [vmem:[%s5] sm:$0xff]
  %v3318 = vld [vmem:[%s5 + $0x8] sm:$0xff]
  %v3319 = vld [vmem:[%s5 + $0x10] sm:$0xff]
  %v3320 = vld [vmem:[%s5 + $0x18] sm:$0xff]
  %v3321 = vld [vmem:[%s5 + $0x20] sm:$0xff]
  %v3322 = vld [vmem:[%s5 + $0x28] sm:$0xff]
  %v3323 = vld [vmem:[%s5 + $0x30] sm:$0xff]
  %v3324 = vld [vmem:[%s5 + $0x38] sm:$0xff]
  %v3325 = vld [vmem:[%s6] sm:$0x1]
  %v3327 = vlaneseq
  %v3328 = vshrl.u32 %v3327, 7
  %v3329 = vsub.s32 0, %v3328
  %v3330 = vrot.slane %v3325, %v3329
  %vm3332 = vcmask 523264
  %v3334 = vsel %vm3332, %v3316, 0
  %3336 = vmatprep.subr.mxu0 0.0
  %3337 = vmatpush1.msra.mxu0 %v3317
  %3338 = vmatprep.subr.mxu0 0.0
  %3339 = vmatpush1.msra.mxu0 %v3318
  %3340 = vmatprep.subr.mxu0 0.0
  %3341 = vmatpush1.msra.mxu0 %v3319
  %3342 = vmatprep.subr.mxu0 0.0
  %3343 = vmatpush1.msra.mxu0 %v3320
  %3344 = vmatprep.subr.mxu0 0.0
  %3345 = vmatpush1.msra.mxu0 %v3321
  %3346 = vmatprep.subr.mxu0 0.0
  %3347 = vmatpush1.msra.mxu0 %v3322
  %3348 = vmatprep.subr.mxu0 0.0
  %3349 = vmatpush1.msra.mxu0 %v3323
  %3350 = vmatprep.subr.mxu0 0.0
  %3351 = vmatpush1.msra.mxu0 %v3324
  %3352 = vmatprep.subr.mxu0 0.0
  %3353 = vmatpush1.msra.mxu0 0.0
  %3354 = vmatprep.subr.mxu0 0.0
  %3355 = vmatpush1.msra.mxu0 0.0
  %3356 = vmatprep.subr.mxu0 0.0
  %3357 = vmatpush1.msra.mxu0 0.0
  %3358 = vmatprep.subr.mxu0 0.0
  %3359 = vmatpush1.msra.mxu0 0.0
  %3360 = vmatprep.subr.mxu0 0.0
  %3361 = vmatpush1.msra.mxu0 0.0
  %3362 = vmatprep.subr.mxu0 0.0
  %3363 = vmatpush1.msra.mxu0 0.0
  %3364 = vmatprep.subr.mxu0 0.0
  %3365 = vmatpush1.msra.mxu0 0.0
  %3366 = vmatprep.subr.mxu0 0.0
  %3367 = vmatpush1.msra.mxu0 0.0
  %3368 = vmatprep.subr.mxu0 0.0
  %3369 = vmatpush1.msra.mxu0 0.0
  %3370 = vmatprep.subr.mxu0 0.0
  %3371 = vmatpush1.msra.mxu0 0.0
  %3372 = vmatprep.subr.mxu0 0.0
  %3373 = vmatpush1.msra.mxu0 0.0
  %3374 = vmatprep.subr.mxu0 0.0
  %3375 = vmatpush1.msra.mxu0 0.0
  %3376 = vmatprep.subr.mxu0 0.0
  %3377 = vmatpush1.msra.mxu0 0.0
  %3378 = vmatprep.subr.mxu0 0.0
  %3379 = vmatpush1.msra.mxu0 0.0
  %3380 = vmatprep.subr.mxu0 0.0
  %3381 = vmatpush1.msra.mxu0 0.0
  %3382 = vmatprep.subr.mxu0 0.0
  %3383 = vmatpush1.msra.mxu0 0.0
  %3384 = vmatprep.subr.mxu0 0.0
  %3385 = vmatpush1.msra.mxu0 0.0
  %3386 = vmatprep.subr.mxu0 0.0
  %3387 = vmatpush1.msra.mxu0 0.0
  %3388 = vmatprep.subr.mxu0 0.0
  %3389 = vmatpush1.msra.mxu0 0.0
  %3390 = vmatprep.subr.mxu0 0.0
  %3391 = vmatpush1.msra.mxu0 0.0
  %3392 = vmatprep.subr.mxu0 0.0
  %3393 = vmatpush1.msra.mxu0 0.0
  %3394 = vmatprep.subr.mxu0 0.0
  %3395 = vmatpush1.msra.mxu0 0.0
  %3396 = vmatprep.subr.mxu0 0.0
  %3397 = vmatpush1.msra.mxu0 0.0
  %3398 = vmatprep.subr.mxu0 0.0
  %3399 = vmatpush1.msra.mxu0 0.0
  %3400 = vmatprep.mubr.f32.mxu0 0.0
  %3401 = vmatmul.mubr.f32.gmra.mrb[0].mxu0 %v3334
  %v3402 = vpop.f32.mrb[0].mxu0
  %v3403 = vadd.f32 %v3330, %v3402
  %v3404 = vpop.f32.mrb[0].mxu0
  %3405 = vdwg.mxu0
  %3406 = vmax.xlane.f32.xlu0 %v3403
  %v3407 = vpop.xlane.xlu0 %3406
  %v3408 = vsub.f32 %v3403, %v3407
  %v3409 = vmul.f32 %v3408, 1.442695
  %v3410 = vpow.pop %v3409
  %3411 = vadd.xlane.f32.xlu0 %v3410
  %v3412 = vpop.xlane.xlu0 %3411
  %v3413 = vrcp.pop %v3412
  %v3414 = vmul.f32 %v3410, %v3413
  %3415 = vst [vmem:[%s7] sm:$0xff] %v3414
  // Predicated region
  $region30: #{ensemble_forward.1} parent=0 // pred_check
    _
  $region31: #{ensemble_forward.1} parent=0 // pred_check_branch
    %3417 = sbr.rel (0) target = $region33
  $region32: #{ensemble_forward.1} parent=0 // pred_region
    _
  $region33: #{ensemble_forward.1} parent=0 // pred_fallthru
    _
  // Predicated region
  $region34: #{ensemble_forward.1} parent=0 // pred_check
    _
  $region35: #{ensemble_forward.1} parent=0 // pred_check_branch
    %3419 = sbr.rel (0) target = $region37
  $region36: #{ensemble_forward.1} parent=0 // pred_region
    _
  $region37: #{ensemble_forward.1} parent=0 // pred_fallthru
    _

</llo_original>
